<compile_context>
chip_gen: v6e
topology: v6e:2x2x1
jax: 0.10.0
libtpu: 0.0.40
codegen_flags: <defaults>
</compile_context>

<pallas_src>
import jax
import jax.numpy as jnp
from jax.experimental import pallas as pl
from jax.experimental.pallas import tpu as pltpu

HIDDEN = 16
NUM_LSTM = 3


def classifier_kernel(x_ref, h0_ref, c0_ref,
                      w_ih0_ref, w_hh0_ref, b0_ref,
                      w_ih_r_ref, w_hh_r_ref, b_r_ref,
                      fc_w_ref, fc_b_ref,
                      out_ref):
    # x_ref:   (T, B, D) time-major input
    # h0/c0:   (L, B, H)
    # w_ih0:   (D, 4H)   w_hh0: (H, 4H)   b0: (1, 4H)        (g-gate columns pre-scaled x2)
    # w_ih_r:  (L-1, H, 4H)  w_hh_r: (L-1, H, 4H)  b_r: (L-1, 1, 4H)
    # fc_w:    (1, H)    fc_b: (1, 1)
    # out_ref: (B, T)
    T, B, D = x_ref.shape
    H = HIDDEN
    inv_dm1 = 1.0 / float(D - 1)            # unbiased std (torch default); requires D >= 2

    def project(rows, w_ih, b):
        # rows: (T*B, in_dim).  One MXU matmul for all T timesteps, bias fused.
        pre_all = jnp.dot(rows, w_ih, preferred_element_type=jnp.float32) + b
        return [pre_all[t * B:(t + 1) * B, :] for t in range(T)]   # static sublane slices

    def run_layer(pre, w_hh, h, c):
        # Serial chain per step: one (B,H)x(H,4H) matmul + one wide sigmoid + pointwise.
        hs = []
        for t in range(T):                  # T static -> fully unrolled
            gates = pre[t] + jnp.dot(h, w_hh, preferred_element_type=jnp.float32)
            s = jax.nn.sigmoid(gates)       # single full-width (4H) EUP call
            i = s[:, 0:H]
            f = s[:, H:2 * H]
            g = 2.0 * s[:, 2 * H:3 * H] - 1.0   # tanh(x) = 2*sigmoid(2x) - 1 (exact)
            o = s[:, 3 * H:4 * H]
            c = f * c + i * g
            h = o * jnp.tanh(c)
            hs.append(h)
        return hs

    # ---- layer 0: normalization + input projection batched over all T (off the serial chain)
    rows = jnp.concatenate([x_ref[t] for t in range(T)], axis=0)    # (T*B, D)
    mean = jnp.mean(rows, axis=-1, keepdims=True)
    xm = rows - mean
    std = jnp.sqrt(jnp.sum(xm * xm, axis=-1, keepdims=True) * inv_dm1)
    x_n = xm / (std + 1e-9)
    pre = project(x_n, w_ih0_ref[...], b0_ref[...])
    hs = run_layer(pre, w_hh0_ref[...], h0_ref[0], c0_ref[0])

    # ---- layers 1..L-1: previous layer's full sequence is known -> one bulk projection each
    for l in range(1, NUM_LSTM):
        rows = jnp.concatenate(hs, axis=0)                          # (T*B, H)
        pre = project(rows, w_ih_r_ref[l - 1], b_r_ref[l - 1])
        hs = run_layer(pre, w_hh_r_ref[l - 1], h0_ref[l], c0_ref[l])

    # ---- Linear(16, 1) + sigmoid, assembled batch-first as a single (B, T) store ----
    fc_w = fc_w_ref[...]                    # (1, H)
    fc_b = fc_b_ref[...]                    # (1, 1)
    cols = [jnp.sum(hs[t] * fc_w, axis=-1, keepdims=True) + fc_b for t in range(T)]
    out_ref[...] = jax.nn.sigmoid(jnp.concatenate(cols, axis=1))    # one EUP call, (B, T)


def classifier_forward(x, kp):
    """x: (B, T, D) float32 (batch_first, as in the PyTorch module). Returns (B, T)."""
    B, T, D = x.shape
    # Single input-side transpose so the kernel indexes only the leading (time) axis;
    # the output is produced batch-first directly (no output-side transpose).
    x_tm = jnp.transpose(x, (1, 0, 2))
    args = (x_tm, kp["h0"], kp["c0"],
            kp["w_ih0"], kp["w_hh0"], kp["b0"],
            kp["w_ih_r"], kp["w_hh_r"], kp["b_r"],
            kp["fc_w"], kp["fc_b"])
    vmem = pl.BlockSpec(memory_space=pltpu.MemorySpace.VMEM)
    return pl.pallas_call(
        classifier_kernel,
        out_shape=jax.ShapeDtypeStruct((B, T), jnp.float32),
        in_specs=[vmem] * len(args),
        out_specs=vmem,
    )(*args)


def init_raw_params(key, num_inp, batch):
    """Torch-layout synthetic parameters (nn.LSTM / nn.Linear shapes), deterministic."""
    H, L = HIDDEN, NUM_LSTM
    bound = H ** -0.5

    def uni(k, shape):
        return jax.random.uniform(k, shape, jnp.float32, -bound, bound)

    keys = jax.random.split(key, 4 * L + 4)
    it = iter(keys)
    w_ih, w_hh, b_ih, b_hh = [], [], [], []
    for l in range(L):
        in_dim = num_inp if l == 0 else H
        w_ih.append(uni(next(it), (4 * H, in_dim)))
        w_hh.append(uni(next(it), (4 * H, H)))
        b_ih.append(uni(next(it), (4 * H,)))
        b_hh.append(uni(next(it), (4 * H,)))
    fc_w = uni(next(it), (1, H))
    fc_b = uni(next(it), (1,))
    # TODO(synk): torch re-samples h0/c0 ~ N(0, 0.01^2) on every forward; fixed here for determinism.
    h0 = 0.01 * jax.random.normal(next(it), (L, batch, H), jnp.float32)
    c0 = 0.01 * jax.random.normal(next(it), (L, batch, H), jnp.float32)
    return dict(w_ih=w_ih, w_hh=w_hh, b_ih=b_ih, b_hh=b_hh,
                fc_w=fc_w, fc_b=fc_b, h0=h0, c0=c0)


def pack_params(raw):
    """Kernel layout: transposed weights, fused bias, g-gate block pre-scaled by 2
    (so the kernel evaluates all gates with one full-width sigmoid; tanh(x)=2*sigmoid(2x)-1)."""
    H, L = HIDDEN, NUM_LSTM
    gate_scale = jnp.concatenate([jnp.ones((2 * H,), jnp.float32),
                                  2.0 * jnp.ones((H,), jnp.float32),
                                  jnp.ones((H,), jnp.float32)])

    def pack_layer(l):
        w_ih = raw["w_ih"][l].T * gate_scale[None, :]                     # (in, 4H)
        w_hh = raw["w_hh"][l].T * gate_scale[None, :]                     # (H, 4H)
        b = ((raw["b_ih"][l] + raw["b_hh"][l]) * gate_scale)[None, :]     # (1, 4H)
        return w_ih, w_hh, b

    w_ih0, w_hh0, b0 = pack_layer(0)
    rest = [pack_layer(l) for l in range(1, L)]
    return dict(w_ih0=w_ih0, w_hh0=w_hh0, b0=b0,
                w_ih_r=jnp.stack([r[0] for r in rest]),
                w_hh_r=jnp.stack([r[1] for r in rest]),
                b_r=jnp.stack([r[2] for r in rest]),
                fc_w=raw["fc_w"], fc_b=raw["fc_b"].reshape(1, 1),
                h0=raw["h0"], c0=raw["c0"])


def reference_forward(x, raw):
    """Pure-JAX reference matching the PyTorch forward (with the fixed h0/c0 from `raw`)."""
    B, T, D = x.shape
    H, L = HIDDEN, NUM_LSTM
    mean = jnp.mean(x, axis=-1, keepdims=True)
    xm = x - mean
    std = jnp.sqrt(jnp.sum(xm * xm, axis=-1, keepdims=True) / (D - 1))
    seq = xm / (std + 1e-9)
    for l in range(L):
        w_ih, w_hh = raw["w_ih"][l], raw["w_hh"][l]
        b = raw["b_ih"][l] + raw["b_hh"][l]
        h, c = raw["h0"][l], raw["c0"][l]
        hs = []
        for t in range(T):
            g = seq[:, t, :] @ w_ih.T + h @ w_hh.T + b
            i = jax.nn.sigmoid(g[:, 0:H])
            f = jax.nn.sigmoid(g[:, H:2 * H])
            gg = jnp.tanh(g[:, 2 * H:3 * H])
            o = jax.nn.sigmoid(g[:, 3 * H:4 * H])
            c = f * c + i * gg
            h = o * jnp.tanh(c)
            hs.append(h)
        seq = jnp.stack(hs, axis=1)
    logits = seq @ raw["fc_w"].T + raw["fc_b"]
    return jax.nn.sigmoid(logits)[..., 0]


if __name__ == "__main__":
    B, T, D = 2, 8, 16                      # batch, seq, num_inp
    key = jax.random.PRNGKey(0)
    kx, kp = jax.random.split(key)
    x = jax.random.normal(kx, (B, T, D), dtype=jnp.float32)
    raw = init_raw_params(kp, D, batch=B)
    kparams = pack_params(raw)

    out = jax.block_until_ready(classifier_forward(x, kparams))
    ref = jax.block_until_ready(reference_forward(x, raw))

    assert out.shape == (B, T), out.shape
    assert bool(jnp.all(jnp.isfinite(out)))
    assert bool(jnp.all((out >= 0) & (out <= 1)))
    assert bool(jnp.allclose(out, ref, atol=2e-3, rtol=0)), \
        float(jnp.max(jnp.abs(out - ref)))
    print("KERNEL_OK")
</pallas_src>

<mosaic_0001>
module attributes {stable_mosaic.version = 11 : i64} {
  func.func @classifier_kernel(%arg0: memref<8x2x16xf32, #tpu.memory_space<vmem>>, %arg1: memref<3x2x16xf32, #tpu.memory_space<vmem>>, %arg2: memref<3x2x16xf32, #tpu.memory_space<vmem>>, %arg3: memref<16x64xf32, #tpu.memory_space<vmem>>, %arg4: memref<16x64xf32, #tpu.memory_space<vmem>>, %arg5: memref<1x64xf32, #tpu.memory_space<vmem>>, %arg6: memref<2x16x64xf32, #tpu.memory_space<vmem>>, %arg7: memref<2x16x64xf32, #tpu.memory_space<vmem>>, %arg8: memref<2x1x64xf32, #tpu.memory_space<vmem>>, %arg9: memref<1x16xf32, #tpu.memory_space<vmem>>, %arg10: memref<1x1xf32, #tpu.memory_space<vmem>>, %arg11: memref<2x8xf32, #tpu.memory_space<vmem>>) attributes {dimension_semantics = [], scalar_prefetch = 0 : i64, scratch_operands = 0 : i64, tpu.core_type = #tpu.core_type<tc>} {
    %c0 = arith.constant 0 : index
    %c0_0 = arith.constant 0 : index
    %c0_1 = arith.constant 0 : index
    %0 = vector.load %arg0[%c0, %c0_0, %c0_1] : memref<8x2x16xf32, #tpu.memory_space<vmem>>, vector<1x2x16xf32>
    %1 = vector.shape_cast %0 : vector<1x2x16xf32> to vector<2x16xf32>
    %c1 = arith.constant 1 : index
    %c0_2 = arith.constant 0 : index
    %c0_3 = arith.constant 0 : index
    %2 = vector.load %arg0[%c1, %c0_2, %c0_3] : memref<8x2x16xf32, #tpu.memory_space<vmem>>, vector<1x2x16xf32>
    %3 = vector.shape_cast %2 : vector<1x2x16xf32> to vector<2x16xf32>
    %c2 = arith.constant 2 : index
    %c0_4 = arith.constant 0 : index
    %c0_5 = arith.constant 0 : index
    %4 = vector.load %arg0[%c2, %c0_4, %c0_5] : memref<8x2x16xf32, #tpu.memory_space<vmem>>, vector<1x2x16xf32>
    %5 = vector.shape_cast %4 : vector<1x2x16xf32> to vector<2x16xf32>
    %c3 = arith.constant 3 : index
    %c0_6 = arith.constant 0 : index
    %c0_7 = arith.constant 0 : index
    %6 = vector.load %arg0[%c3, %c0_6, %c0_7] : memref<8x2x16xf32, #tpu.memory_space<vmem>>, vector<1x2x16xf32>
    %7 = vector.shape_cast %6 : vector<1x2x16xf32> to vector<2x16xf32>
    %c4 = arith.constant 4 : index
    %c0_8 = arith.constant 0 : index
    %c0_9 = arith.constant 0 : index
    %8 = vector.load %arg0[%c4, %c0_8, %c0_9] : memref<8x2x16xf32, #tpu.memory_space<vmem>>, vector<1x2x16xf32>
    %9 = vector.shape_cast %8 : vector<1x2x16xf32> to vector<2x16xf32>
    %c5 = arith.constant 5 : index
    %c0_10 = arith.constant 0 : index
    %c0_11 = arith.constant 0 : index
    %10 = vector.load %arg0[%c5, %c0_10, %c0_11] : memref<8x2x16xf32, #tpu.memory_space<vmem>>, vector<1x2x16xf32>
    %11 = vector.shape_cast %10 : vector<1x2x16xf32> to vector<2x16xf32>
    %c6 = arith.constant 6 : index
    %c0_12 = arith.constant 0 : index
    %c0_13 = arith.constant 0 : index
    %12 = vector.load %arg0[%c6, %c0_12, %c0_13] : memref<8x2x16xf32, #tpu.memory_space<vmem>>, vector<1x2x16xf32>
    %13 = vector.shape_cast %12 : vector<1x2x16xf32> to vector<2x16xf32>
    %c7 = arith.constant 7 : index
    %c0_14 = arith.constant 0 : index
    %c0_15 = arith.constant 0 : index
    %14 = vector.load %arg0[%c7, %c0_14, %c0_15] : memref<8x2x16xf32, #tpu.memory_space<vmem>>, vector<1x2x16xf32>
    %15 = vector.shape_cast %14 : vector<1x2x16xf32> to vector<2x16xf32>
    %16 = tpu.concatenate %1, %3, %5, %7, %9, %11, %13, %15 in 0 : vector<2x16xf32>, vector<2x16xf32>, vector<2x16xf32>, vector<2x16xf32>, vector<2x16xf32>, vector<2x16xf32>, vector<2x16xf32>, vector<2x16xf32> -> vector<16x16xf32>
    %cst = arith.constant dense<0.000000e+00> : vector<16xf32>
    %17 = vector.multi_reduction <add>, %16, %cst [1] : vector<16x16xf32> to vector<16xf32>
    %18 = vector.shape_cast %17 : vector<16xf32> to vector<16x1xf32>
    %cst_16 = arith.constant 1.600000e+01 : f32
    %19 = vector.broadcast %cst_16 : f32 to vector<16x1xf32>
    %20 = arith.divf %18, %19 : vector<16x1xf32>
    %21 = vector.broadcast %20 : vector<16x1xf32> to vector<16x16xf32>
    %22 = arith.subf %16, %21 : vector<16x16xf32>
    %23 = arith.mulf %22, %22 : vector<16x16xf32>
    %cst_17 = arith.constant dense<0.000000e+00> : vector<16xf32>
    %24 = vector.multi_reduction <add>, %23, %cst_17 [1] : vector<16x16xf32> to vector<16xf32>
    %25 = vector.shape_cast %24 : vector<16xf32> to vector<16x1xf32>
    %cst_18 = arith.constant 0.0666666701 : f32
    %26 = vector.broadcast %cst_18 : f32 to vector<16x1xf32>
    %27 = arith.mulf %25, %26 : vector<16x1xf32>
    %28 = math.sqrt %27 : vector<16x1xf32>
    %cst_19 = arith.constant 9.99999971E-10 : f32
    %29 = vector.broadcast %cst_19 : f32 to vector<16x1xf32>
    %30 = arith.addf %28, %29 : vector<16x1xf32>
    %31 = vector.broadcast %30 : vector<16x1xf32> to vector<16x16xf32>
    %32 = arith.divf %22, %31 : vector<16x16xf32>
    %c0_20 = arith.constant 0 : index
    %c0_21 = arith.constant 0 : index
    %33 = vector.load %arg3[%c0_20, %c0_21] : memref<16x64xf32, #tpu.memory_space<vmem>>, vector<16x64xf32>
    %c0_22 = arith.constant 0 : index
    %c0_23 = arith.constant 0 : index
    %34 = vector.load %arg5[%c0_22, %c0_23] : memref<1x64xf32, #tpu.memory_space<vmem>>, vector<1x64xf32>
    %cst_24 = arith.constant dense<0.000000e+00> : vector<16x64xf32>
    %35 = tpu.matmul %32, %33, %cst_24 {dimension_numbers = #tpu.dot_dimension_numbers<[1], [0], [0], [1], [0, 0, 1, 1], [], []>} : vector<16x16xf32>, vector<16x64xf32>, vector<16x64xf32> -> vector<16x64xf32>
    %36 = vector.broadcast %34 : vector<1x64xf32> to vector<16x64xf32>
    %37 = arith.addf %35, %36 : vector<16x64xf32>
    %38 = vector.extract_strided_slice %37 {offsets = [0, 0], sizes = [2, 64], strides = [1, 1]} : vector<16x64xf32> to vector<2x64xf32>
    %39 = vector.extract_strided_slice %37 {offsets = [2, 0], sizes = [2, 64], strides = [1, 1]} : vector<16x64xf32> to vector<2x64xf32>
    %40 = vector.extract_strided_slice %37 {offsets = [4, 0], sizes = [2, 64], strides = [1, 1]} : vector<16x64xf32> to vector<2x64xf32>
    %41 = vector.extract_strided_slice %37 {offsets = [6, 0], sizes = [2, 64], strides = [1, 1]} : vector<16x64xf32> to vector<2x64xf32>
    %42 = vector.extract_strided_slice %37 {offsets = [8, 0], sizes = [2, 64], strides = [1, 1]} : vector<16x64xf32> to vector<2x64xf32>
    %43 = vector.extract_strided_slice %37 {offsets = [10, 0], sizes = [2, 64], strides = [1, 1]} : vector<16x64xf32> to vector<2x64xf32>
    %44 = vector.extract_strided_slice %37 {offsets = [12, 0], sizes = [2, 64], strides = [1, 1]} : vector<16x64xf32> to vector<2x64xf32>
    %45 = vector.extract_strided_slice %37 {offsets = [14, 0], sizes = [2, 64], strides = [1, 1]} : vector<16x64xf32> to vector<2x64xf32>
    %c0_25 = arith.constant 0 : index
    %c0_26 = arith.constant 0 : index
    %46 = vector.load %arg4[%c0_25, %c0_26] : memref<16x64xf32, #tpu.memory_space<vmem>>, vector<16x64xf32>
    %c0_27 = arith.constant 0 : index
    %c0_28 = arith.constant 0 : index
    %c0_29 = arith.constant 0 : index
    %47 = vector.load %arg1[%c0_27, %c0_28, %c0_29] : memref<3x2x16xf32, #tpu.memory_space<vmem>>, vector<1x2x16xf32>
    %48 = vector.shape_cast %47 : vector<1x2x16xf32> to vector<2x16xf32>
    %c0_30 = arith.constant 0 : index
    %c0_31 = arith.constant 0 : index
    %c0_32 = arith.constant 0 : index
    %49 = vector.load %arg2[%c0_30, %c0_31, %c0_32] : memref<3x2x16xf32, #tpu.memory_space<vmem>>, vector<1x2x16xf32>
    %50 = vector.shape_cast %49 : vector<1x2x16xf32> to vector<2x16xf32>
    %cst_33 = arith.constant dense<0.000000e+00> : vector<2x64xf32>
    %51 = tpu.matmul %48, %46, %cst_33 {dimension_numbers = #tpu.dot_dimension_numbers<[1], [0], [0], [1], [0, 0, 1, 1], [], []>} : vector<2x16xf32>, vector<16x64xf32>, vector<2x64xf32> -> vector<2x64xf32>
    %52 = arith.addf %38, %51 : vector<2x64xf32>
    %53 = arith.negf %52 : vector<2x64xf32>
    %54 = math.exp %53 : vector<2x64xf32>
    %cst_34 = arith.constant 1.000000e+00 : f32
    %55 = vector.broadcast %cst_34 : f32 to vector<2x64xf32>
    %56 = arith.addf %55, %54 : vector<2x64xf32>
    %57 = arith.divf %55, %56 : vector<2x64xf32>
    %58 = vector.extract_strided_slice %57 {offsets = [0, 0], sizes = [2, 16], strides = [1, 1]} : vector<2x64xf32> to vector<2x16xf32>
    %59 = vector.extract_strided_slice %57 {offsets = [0, 16], sizes = [2, 16], strides = [1, 1]} : vector<2x64xf32> to vector<2x16xf32>
    %60 = vector.extract_strided_slice %57 {offsets = [0, 32], sizes = [2, 16], strides = [1, 1]} : vector<2x64xf32> to vector<2x16xf32>
    %cst_35 = arith.constant 2.000000e+00 : f32
    %61 = vector.broadcast %cst_35 : f32 to vector<2x16xf32>
    %62 = arith.mulf %61, %60 : vector<2x16xf32>
    %cst_36 = arith.constant 1.000000e+00 : f32
    %63 = vector.broadcast %cst_36 : f32 to vector<2x16xf32>
    %64 = arith.subf %62, %63 : vector<2x16xf32>
    %65 = vector.extract_strided_slice %57 {offsets = [0, 48], sizes = [2, 16], strides = [1, 1]} : vector<2x64xf32> to vector<2x16xf32>
    %66 = arith.mulf %59, %50 : vector<2x16xf32>
    %67 = arith.mulf %58, %64 : vector<2x16xf32>
    %68 = arith.addf %66, %67 : vector<2x16xf32>
    %69 = math.tanh %68 : vector<2x16xf32>
    %70 = arith.mulf %65, %69 : vector<2x16xf32>
    %cst_37 = arith.constant dense<0.000000e+00> : vector<2x64xf32>
    %71 = tpu.matmul %70, %46, %cst_37 {dimension_numbers = #tpu.dot_dimension_numbers<[1], [0], [0], [1], [0, 0, 1, 1], [], []>} : vector<2x16xf32>, vector<16x64xf32>, vector<2x64xf32> -> vector<2x64xf32>
    %72 = arith.addf %39, %71 : vector<2x64xf32>
    %73 = arith.negf %72 : vector<2x64xf32>
    %74 = math.exp %73 : vector<2x64xf32>
    %cst_38 = arith.constant 1.000000e+00 : f32
    %75 = vector.broadcast %cst_38 : f32 to vector<2x64xf32>
    %76 = arith.addf %75, %74 : vector<2x64xf32>
    %77 = arith.divf %75, %76 : vector<2x64xf32>
    %78 = vector.extract_strided_slice %77 {offsets = [0, 0], sizes = [2, 16], strides = [1, 1]} : vector<2x64xf32> to vector<2x16xf32>
    %79 = vector.extract_strided_slice %77 {offsets = [0, 16], sizes = [2, 16], strides = [1, 1]} : vector<2x64xf32> to vector<2x16xf32>
    %80 = vector.extract_strided_slice %77 {offsets = [0, 32], sizes = [2, 16], strides = [1, 1]} : vector<2x64xf32> to vector<2x16xf32>
    %cst_39 = arith.constant 2.000000e+00 : f32
    %81 = vector.broadcast %cst_39 : f32 to vector<2x16xf32>
    %82 = arith.mulf %81, %80 : vector<2x16xf32>
    %cst_40 = arith.constant 1.000000e+00 : f32
    %83 = vector.broadcast %cst_40 : f32 to vector<2x16xf32>
    %84 = arith.subf %82, %83 : vector<2x16xf32>
    %85 = vector.extract_strided_slice %77 {offsets = [0, 48], sizes = [2, 16], strides = [1, 1]} : vector<2x64xf32> to vector<2x16xf32>
    %86 = arith.mulf %79, %68 : vector<2x16xf32>
    %87 = arith.mulf %78, %84 : vector<2x16xf32>
    %88 = arith.addf %86, %87 : vector<2x16xf32>
    %89 = math.tanh %88 : vector<2x16xf32>
    %90 = arith.mulf %85, %89 : vector<2x16xf32>
    %cst_41 = arith.constant dense<0.000000e+00> : vector<2x64xf32>
    %91 = tpu.matmul %90, %46, %cst_41 {dimension_numbers = #tpu.dot_dimension_numbers<[1], [0], [0], [1], [0, 0, 1, 1], [], []>} : vector<2x16xf32>, vector<16x64xf32>, vector<2x64xf32> -> vector<2x64xf32>
    %92 = arith.addf %40, %91 : vector<2x64xf32>
    %93 = arith.negf %92 : vector<2x64xf32>
    %94 = math.exp %93 : vector<2x64xf32>
    %cst_42 = arith.constant 1.000000e+00 : f32
    %95 = vector.broadcast %cst_42 : f32 to vector<2x64xf32>
    %96 = arith.addf %95, %94 : vector<2x64xf32>
    %97 = arith.divf %95, %96 : vector<2x64xf32>
    %98 = vector.extract_strided_slice %97 {offsets = [0, 0], sizes = [2, 16], strides = [1, 1]} : vector<2x64xf32> to vector<2x16xf32>
    %99 = vector.extract_strided_slice %97 {offsets = [0, 16], sizes = [2, 16], strides = [1, 1]} : vector<2x64xf32> to vector<2x16xf32>
    %100 = vector.extract_strided_slice %97 {offsets = [0, 32], sizes = [2, 16], strides = [1, 1]} : vector<2x64xf32> to vector<2x16xf32>
    %cst_43 = arith.constant 2.000000e+00 : f32
    %101 = vector.broadcast %cst_43 : f32 to vector<2x16xf32>
    %102 = arith.mulf %101, %100 : vector<2x16xf32>
    %cst_44 = arith.constant 1.000000e+00 : f32
    %103 = vector.broadcast %cst_44 : f32 to vector<2x16xf32>
    %104 = arith.subf %102, %103 : vector<2x16xf32>
    %105 = vector.extract_strided_slice %97 {offsets = [0, 48], sizes = [2, 16], strides = [1, 1]} : vector<2x64xf32> to vector<2x16xf32>
    %106 = arith.mulf %99, %88 : vector<2x16xf32>
    %107 = arith.mulf %98, %104 : vector<2x16xf32>
    %108 = arith.addf %106, %107 : vector<2x16xf32>
    %109 = math.tanh %108 : vector<2x16xf32>
    %110 = arith.mulf %105, %109 : vector<2x16xf32>
    %cst_45 = arith.constant dense<0.000000e+00> : vector<2x64xf32>
    %111 = tpu.matmul %110, %46, %cst_45 {dimension_numbers = #tpu.dot_dimension_numbers<[1], [0], [0], [1], [0, 0, 1, 1], [], []>} : vector<2x16xf32>, vector<16x64xf32>, vector<2x64xf32> -> vector<2x64xf32>
    %112 = arith.addf %41, %111 : vector<2x64xf32>
    %113 = arith.negf %112 : vector<2x64xf32>
    %114 = math.exp %113 : vector<2x64xf32>
    %cst_46 = arith.constant 1.000000e+00 : f32
    %115 = vector.broadcast %cst_46 : f32 to vector<2x64xf32>
    %116 = arith.addf %115, %114 : vector<2x64xf32>
    %117 = arith.divf %115, %116 : vector<2x64xf32>
    %118 = vector.extract_strided_slice %117 {offsets = [0, 0], sizes = [2, 16], strides = [1, 1]} : vector<2x64xf32> to vector<2x16xf32>
    %119 = vector.extract_strided_slice %117 {offsets = [0, 16], sizes = [2, 16], strides = [1, 1]} : vector<2x64xf32> to vector<2x16xf32>
    %120 = vector.extract_strided_slice %117 {offsets = [0, 32], sizes = [2, 16], strides = [1, 1]} : vector<2x64xf32> to vector<2x16xf32>
    %cst_47 = arith.constant 2.000000e+00 : f32
    %121 = vector.broadcast %cst_47 : f32 to vector<2x16xf32>
    %122 = arith.mulf %121, %120 : vector<2x16xf32>
    %cst_48 = arith.constant 1.000000e+00 : f32
    %123 = vector.broadcast %cst_48 : f32 to vector<2x16xf32>
    %124 = arith.subf %122, %123 : vector<2x16xf32>
    %125 = vector.extract_strided_slice %117 {offsets = [0, 48], sizes = [2, 16], strides = [1, 1]} : vector<2x64xf32> to vector<2x16xf32>
    %126 = arith.mulf %119, %108 : vector<2x16xf32>
    %127 = arith.mulf %118, %124 : vector<2x16xf32>
    %128 = arith.addf %126, %127 : vector<2x16xf32>
    %129 = math.tanh %128 : vector<2x16xf32>
    %130 = arith.mulf %125, %129 : vector<2x16xf32>
    %cst_49 = arith.constant dense<0.000000e+00> : vector<2x64xf32>
    %131 = tpu.matmul %130, %46, %cst_49 {dimension_numbers = #tpu.dot_dimension_numbers<[1], [0], [0], [1], [0, 0, 1, 1], [], []>} : vector<2x16xf32>, vector<16x64xf32>, vector<2x64xf32> -> vector<2x64xf32>
    %132 = arith.addf %42, %131 : vector<2x64xf32>
    %133 = arith.negf %132 : vector<2x64xf32>
    %134 = math.exp %133 : vector<2x64xf32>
    %cst_50 = arith.constant 1.000000e+00 : f32
    %135 = vector.broadcast %cst_50 : f32 to vector<2x64xf32>
    %136 = arith.addf %135, %134 : vector<2x64xf32>
    %137 = arith.divf %135, %136 : vector<2x64xf32>
    %138 = vector.extract_strided_slice %137 {offsets = [0, 0], sizes = [2, 16], strides = [1, 1]} : vector<2x64xf32> to vector<2x16xf32>
    %139 = vector.extract_strided_slice %137 {offsets = [0, 16], sizes = [2, 16], strides = [1, 1]} : vector<2x64xf32> to vector<2x16xf32>
    %140 = vector.extract_strided_slice %137 {offsets = [0, 32], sizes = [2, 16], strides = [1, 1]} : vector<2x64xf32> to vector<2x16xf32>
    %cst_51 = arith.constant 2.000000e+00 : f32
    %141 = vector.broadcast %cst_51 : f32 to vector<2x16xf32>
    %142 = arith.mulf %141, %140 : vector<2x16xf32>
    %cst_52 = arith.constant 1.000000e+00 : f32
    %143 = vector.broadcast %cst_52 : f32 to vector<2x16xf32>
    %144 = arith.subf %142, %143 : vector<2x16xf32>
    %145 = vector.extract_strided_slice %137 {offsets = [0, 48], sizes = [2, 16], strides = [1, 1]} : vector<2x64xf32> to vector<2x16xf32>
    %146 = arith.mulf %139, %128 : vector<2x16xf32>
    %147 = arith.mulf %138, %144 : vector<2x16xf32>
    %148 = arith.addf %146, %147 : vector<2x16xf32>
    %149 = math.tanh %148 : vector<2x16xf32>
    %150 = arith.mulf %145, %149 : vector<2x16xf32>
    %cst_53 = arith.constant dense<0.000000e+00> : vector<2x64xf32>
    %151 = tpu.matmul %150, %46, %cst_53 {dimension_numbers = #tpu.dot_dimension_numbers<[1], [0], [0], [1], [0, 0, 1, 1], [], []>} : vector<2x16xf32>, vector<16x64xf32>, vector<2x64xf32> -> vector<2x64xf32>
    %152 = arith.addf %43, %151 : vector<2x64xf32>
    %153 = arith.negf %152 : vector<2x64xf32>
    %154 = math.exp %153 : vector<2x64xf32>
    %cst_54 = arith.constant 1.000000e+00 : f32
    %155 = vector.broadcast %cst_54 : f32 to vector<2x64xf32>
    %156 = arith.addf %155, %154 : vector<2x64xf32>
    %157 = arith.divf %155, %156 : vector<2x64xf32>
    %158 = vector.extract_strided_slice %157 {offsets = [0, 0], sizes = [2, 16], strides = [1, 1]} : vector<2x64xf32> to vector<2x16xf32>
    %159 = vector.extract_strided_slice %157 {offsets = [0, 16], sizes = [2, 16], strides = [1, 1]} : vector<2x64xf32> to vector<2x16xf32>
    %160 = vector.extract_strided_slice %157 {offsets = [0, 32], sizes = [2, 16], strides = [1, 1]} : vector<2x64xf32> to vector<2x16xf32>
    %cst_55 = arith.constant 2.000000e+00 : f32
    %161 = vector.broadcast %cst_55 : f32 to vector<2x16xf32>
    %162 = arith.mulf %161, %160 : vector<2x16xf32>
    %cst_56 = arith.constant 1.000000e+00 : f32
    %163 = vector.broadcast %cst_56 : f32 to vector<2x16xf32>
    %164 = arith.subf %162, %163 : vector<2x16xf32>
    %165 = vector.extract_strided_slice %157 {offsets = [0, 48], sizes = [2, 16], strides = [1, 1]} : vector<2x64xf32> to vector<2x16xf32>
    %166 = arith.mulf %159, %148 : vector<2x16xf32>
    %167 = arith.mulf %158, %164 : vector<2x16xf32>
    %168 = arith.addf %166, %167 : vector<2x16xf32>
    %169 = math.tanh %168 : vector<2x16xf32>
    %170 = arith.mulf %165, %169 : vector<2x16xf32>
    %cst_57 = arith.constant dense<0.000000e+00> : vector<2x64xf32>
    %171 = tpu.matmul %170, %46, %cst_57 {dimension_numbers = #tpu.dot_dimension_numbers<[1], [0], [0], [1], [0, 0, 1, 1], [], []>} : vector<2x16xf32>, vector<16x64xf32>, vector<2x64xf32> -> vector<2x64xf32>
    %172 = arith.addf %44, %171 : vector<2x64xf32>
    %173 = arith.negf %172 : vector<2x64xf32>
    %174 = math.exp %173 : vector<2x64xf32>
    %cst_58 = arith.constant 1.000000e+00 : f32
    %175 = vector.broadcast %cst_58 : f32 to vector<2x64xf32>
    %176 = arith.addf %175, %174 : vector<2x64xf32>
    %177 = arith.divf %175, %176 : vector<2x64xf32>
    %178 = vector.extract_strided_slice %177 {offsets = [0, 0], sizes = [2, 16], strides = [1, 1]} : vector<2x64xf32> to vector<2x16xf32>
    %179 = vector.extract_strided_slice %177 {offsets = [0, 16], sizes = [2, 16], strides = [1, 1]} : vector<2x64xf32> to vector<2x16xf32>
    %180 = vector.extract_strided_slice %177 {offsets = [0, 32], sizes = [2, 16], strides = [1, 1]} : vector<2x64xf32> to vector<2x16xf32>
    %cst_59 = arith.constant 2.000000e+00 : f32
    %181 = vector.broadcast %cst_59 : f32 to vector<2x16xf32>
    %182 = arith.mulf %181, %180 : vector<2x16xf32>
    %cst_60 = arith.constant 1.000000e+00 : f32
    %183 = vector.broadcast %cst_60 : f32 to vector<2x16xf32>
    %184 = arith.subf %182, %183 : vector<2x16xf32>
    %185 = vector.extract_strided_slice %177 {offsets = [0, 48], sizes = [2, 16], strides = [1, 1]} : vector<2x64xf32> to vector<2x16xf32>
    %186 = arith.mulf %179, %168 : vector<2x16xf32>
    %187 = arith.mulf %178, %184 : vector<2x16xf32>
    %188 = arith.addf %186, %187 : vector<2x16xf32>
    %189 = math.tanh %188 : vector<2x16xf32>
    %190 = arith.mulf %185, %189 : vector<2x16xf32>
    %cst_61 = arith.constant dense<0.000000e+00> : vector<2x64xf32>
    %191 = tpu.matmul %190, %46, %cst_61 {dimension_numbers = #tpu.dot_dimension_numbers<[1], [0], [0], [1], [0, 0, 1, 1], [], []>} : vector<2x16xf32>, vector<16x64xf32>, vector<2x64xf32> -> vector<2x64xf32>
    %192 = arith.addf %45, %191 : vector<2x64xf32>
    %193 = arith.negf %192 : vector<2x64xf32>
    %194 = math.exp %193 : vector<2x64xf32>
    %cst_62 = arith.constant 1.000000e+00 : f32
    %195 = vector.broadcast %cst_62 : f32 to vector<2x64xf32>
    %196 = arith.addf %195, %194 : vector<2x64xf32>
    %197 = arith.divf %195, %196 : vector<2x64xf32>
    %198 = vector.extract_strided_slice %197 {offsets = [0, 0], sizes = [2, 16], strides = [1, 1]} : vector<2x64xf32> to vector<2x16xf32>
    %199 = vector.extract_strided_slice %197 {offsets = [0, 16], sizes = [2, 16], strides = [1, 1]} : vector<2x64xf32> to vector<2x16xf32>
    %200 = vector.extract_strided_slice %197 {offsets = [0, 32], sizes = [2, 16], strides = [1, 1]} : vector<2x64xf32> to vector<2x16xf32>
    %cst_63 = arith.constant 2.000000e+00 : f32
    %201 = vector.broadcast %cst_63 : f32 to vector<2x16xf32>
    %202 = arith.mulf %201, %200 : vector<2x16xf32>
    %cst_64 = arith.constant 1.000000e+00 : f32
    %203 = vector.broadcast %cst_64 : f32 to vector<2x16xf32>
    %204 = arith.subf %202, %203 : vector<2x16xf32>
    %205 = vector.extract_strided_slice %197 {offsets = [0, 48], sizes = [2, 16], strides = [1, 1]} : vector<2x64xf32> to vector<2x16xf32>
    %206 = arith.mulf %199, %188 : vector<2x16xf32>
    %207 = arith.mulf %198, %204 : vector<2x16xf32>
    %208 = arith.addf %206, %207 : vector<2x16xf32>
    %209 = math.tanh %208 : vector<2x16xf32>
    %210 = arith.mulf %205, %209 : vector<2x16xf32>
    %211 = tpu.concatenate %70, %90, %110, %130, %150, %170, %190, %210 in 0 : vector<2x16xf32>, vector<2x16xf32>, vector<2x16xf32>, vector<2x16xf32>, vector<2x16xf32>, vector<2x16xf32>, vector<2x16xf32>, vector<2x16xf32> -> vector<16x16xf32>
    %c0_65 = arith.constant 0 : index
    %c0_66 = arith.constant 0 : index
    %c0_67 = arith.constant 0 : index
    %212 = vector.load %arg6[%c0_65, %c0_66, %c0_67] : memref<2x16x64xf32, #tpu.memory_space<vmem>>, vector<1x16x64xf32>
    %213 = vector.shape_cast %212 : vector<1x16x64xf32> to vector<16x64xf32>
    %c0_68 = arith.constant 0 : index
    %c0_69 = arith.constant 0 : index
    %c0_70 = arith.constant 0 : index
    %214 = vector.load %arg8[%c0_68, %c0_69, %c0_70] : memref<2x1x64xf32, #tpu.memory_space<vmem>>, vector<1x1x64xf32>
    %215 = vector.shape_cast %214 : vector<1x1x64xf32> to vector<1x64xf32>
    %cst_71 = arith.constant dense<0.000000e+00> : vector<16x64xf32>
    %216 = tpu.matmul %211, %213, %cst_71 {dimension_numbers = #tpu.dot_dimension_numbers<[1], [0], [0], [1], [0, 0, 1, 1], [], []>} : vector<16x16xf32>, vector<16x64xf32>, vector<16x64xf32> -> vector<16x64xf32>
    %217 = vector.broadcast %215 : vector<1x64xf32> to vector<16x64xf32>
    %218 = arith.addf %216, %217 : vector<16x64xf32>
    %219 = vector.extract_strided_slice %218 {offsets = [0, 0], sizes = [2, 64], strides = [1, 1]} : vector<16x64xf32> to vector<2x64xf32>
    %220 = vector.extract_strided_slice %218 {offsets = [2, 0], sizes = [2, 64], strides = [1, 1]} : vector<16x64xf32> to vector<2x64xf32>
    %221 = vector.extract_strided_slice %218 {offsets = [4, 0], sizes = [2, 64], strides = [1, 1]} : vector<16x64xf32> to vector<2x64xf32>
    %222 = vector.extract_strided_slice %218 {offsets = [6, 0], sizes = [2, 64], strides = [1, 1]} : vector<16x64xf32> to vector<2x64xf32>
    %223 = vector.extract_strided_slice %218 {offsets = [8, 0], sizes = [2, 64], strides = [1, 1]} : vector<16x64xf32> to vector<2x64xf32>
    %224 = vector.extract_strided_slice %218 {offsets = [10, 0], sizes = [2, 64], strides = [1, 1]} : vector<16x64xf32> to vector<2x64xf32>
    %225 = vector.extract_strided_slice %218 {offsets = [12, 0], sizes = [2, 64], strides = [1, 1]} : vector<16x64xf32> to vector<2x64xf32>
    %226 = vector.extract_strided_slice %218 {offsets = [14, 0], sizes = [2, 64], strides = [1, 1]} : vector<16x64xf32> to vector<2x64xf32>
    %c0_72 = arith.constant 0 : index
    %c0_73 = arith.constant 0 : index
    %c0_74 = arith.constant 0 : index
    %227 = vector.load %arg7[%c0_72, %c0_73, %c0_74] : memref<2x16x64xf32, #tpu.memory_space<vmem>>, vector<1x16x64xf32>
    %228 = vector.shape_cast %227 : vector<1x16x64xf32> to vector<16x64xf32>
    %c1_75 = arith.constant 1 : index
    %c0_76 = arith.constant 0 : index
    %c0_77 = arith.constant 0 : index
    %229 = vector.load %arg1[%c1_75, %c0_76, %c0_77] : memref<3x2x16xf32, #tpu.memory_space<vmem>>, vector<1x2x16xf32>
    %230 = vector.shape_cast %229 : vector<1x2x16xf32> to vector<2x16xf32>
    %c1_78 = arith.constant 1 : index
    %c0_79 = arith.constant 0 : index
    %c0_80 = arith.constant 0 : index
    %231 = vector.load %arg2[%c1_78, %c0_79, %c0_80] : memref<3x2x16xf32, #tpu.memory_space<vmem>>, vector<1x2x16xf32>
    %232 = vector.shape_cast %231 : vector<1x2x16xf32> to vector<2x16xf32>
    %cst_81 = arith.constant dense<0.000000e+00> : vector<2x64xf32>
    %233 = tpu.matmul %230, %228, %cst_81 {dimension_numbers = #tpu.dot_dimension_numbers<[1], [0], [0], [1], [0, 0, 1, 1], [], []>} : vector<2x16xf32>, vector<16x64xf32>, vector<2x64xf32> -> vector<2x64xf32>
    %234 = arith.addf %219, %233 : vector<2x64xf32>
    %235 = arith.negf %234 : vector<2x64xf32>
    %236 = math.exp %235 : vector<2x64xf32>
    %cst_82 = arith.constant 1.000000e+00 : f32
    %237 = vector.broadcast %cst_82 : f32 to vector<2x64xf32>
    %238 = arith.addf %237, %236 : vector<2x64xf32>
    %239 = arith.divf %237, %238 : vector<2x64xf32>
    %240 = vector.extract_strided_slice %239 {offsets = [0, 0], sizes = [2, 16], strides = [1, 1]} : vector<2x64xf32> to vector<2x16xf32>
    %241 = vector.extract_strided_slice %239 {offsets = [0, 16], sizes = [2, 16], strides = [1, 1]} : vector<2x64xf32> to vector<2x16xf32>
    %242 = vector.extract_strided_slice %239 {offsets = [0, 32], sizes = [2, 16], strides = [1, 1]} : vector<2x64xf32> to vector<2x16xf32>
    %cst_83 = arith.constant 2.000000e+00 : f32
    %243 = vector.broadcast %cst_83 : f32 to vector<2x16xf32>
    %244 = arith.mulf %243, %242 : vector<2x16xf32>
    %cst_84 = arith.constant 1.000000e+00 : f32
    %245 = vector.broadcast %cst_84 : f32 to vector<2x16xf32>
    %246 = arith.subf %244, %245 : vector<2x16xf32>
    %247 = vector.extract_strided_slice %239 {offsets = [0, 48], sizes = [2, 16], strides = [1, 1]} : vector<2x64xf32> to vector<2x16xf32>
    %248 = arith.mulf %241, %232 : vector<2x16xf32>
    %249 = arith.mulf %240, %246 : vector<2x16xf32>
    %250 = arith.addf %248, %249 : vector<2x16xf32>
    %251 = math.tanh %250 : vector<2x16xf32>
    %252 = arith.mulf %247, %251 : vector<2x16xf32>
    %cst_85 = arith.constant dense<0.000000e+00> : vector<2x64xf32>
    %253 = tpu.matmul %252, %228, %cst_85 {dimension_numbers = #tpu.dot_dimension_numbers<[1], [0], [0], [1], [0, 0, 1, 1], [], []>} : vector<2x16xf32>, vector<16x64xf32>, vector<2x64xf32> -> vector<2x64xf32>
    %254 = arith.addf %220, %253 : vector<2x64xf32>
    %255 = arith.negf %254 : vector<2x64xf32>
    %256 = math.exp %255 : vector<2x64xf32>
    %cst_86 = arith.constant 1.000000e+00 : f32
    %257 = vector.broadcast %cst_86 : f32 to vector<2x64xf32>
    %258 = arith.addf %257, %256 : vector<2x64xf32>
    %259 = arith.divf %257, %258 : vector<2x64xf32>
    %260 = vector.extract_strided_slice %259 {offsets = [0, 0], sizes = [2, 16], strides = [1, 1]} : vector<2x64xf32> to vector<2x16xf32>
    %261 = vector.extract_strided_slice %259 {offsets = [0, 16], sizes = [2, 16], strides = [1, 1]} : vector<2x64xf32> to vector<2x16xf32>
    %262 = vector.extract_strided_slice %259 {offsets = [0, 32], sizes = [2, 16], strides = [1, 1]} : vector<2x64xf32> to vector<2x16xf32>
    %cst_87 = arith.constant 2.000000e+00 : f32
    %263 = vector.broadcast %cst_87 : f32 to vector<2x16xf32>
    %264 = arith.mulf %263, %262 : vector<2x16xf32>
    %cst_88 = arith.constant 1.000000e+00 : f32
    %265 = vector.broadcast %cst_88 : f32 to vector<2x16xf32>
    %266 = arith.subf %264, %265 : vector<2x16xf32>
    %267 = vector.extract_strided_slice %259 {offsets = [0, 48], sizes = [2, 16], strides = [1, 1]} : vector<2x64xf32> to vector<2x16xf32>
    %268 = arith.mulf %261, %250 : vector<2x16xf32>
    %269 = arith.mulf %260, %266 : vector<2x16xf32>
    %270 = arith.addf %268, %269 : vector<2x16xf32>
    %271 = math.tanh %270 : vector<2x16xf32>
    %272 = arith.mulf %267, %271 : vector<2x16xf32>
    %cst_89 = arith.constant dense<0.000000e+00> : vector<2x64xf32>
    %273 = tpu.matmul %272, %228, %cst_89 {dimension_numbers = #tpu.dot_dimension_numbers<[1], [0], [0], [1], [0, 0, 1, 1], [], []>} : vector<2x16xf32>, vector<16x64xf32>, vector<2x64xf32> -> vector<2x64xf32>
    %274 = arith.addf %221, %273 : vector<2x64xf32>
    %275 = arith.negf %274 : vector<2x64xf32>
    %276 = math.exp %275 : vector<2x64xf32>
    %cst_90 = arith.constant 1.000000e+00 : f32
    %277 = vector.broadcast %cst_90 : f32 to vector<2x64xf32>
    %278 = arith.addf %277, %276 : vector<2x64xf32>
    %279 = arith.divf %277, %278 : vector<2x64xf32>
    %280 = vector.extract_strided_slice %279 {offsets = [0, 0], sizes = [2, 16], strides = [1, 1]} : vector<2x64xf32> to vector<2x16xf32>
    %281 = vector.extract_strided_slice %279 {offsets = [0, 16], sizes = [2, 16], strides = [1, 1]} : vector<2x64xf32> to vector<2x16xf32>
    %282 = vector.extract_strided_slice %279 {offsets = [0, 32], sizes = [2, 16], strides = [1, 1]} : vector<2x64xf32> to vector<2x16xf32>
    %cst_91 = arith.constant 2.000000e+00 : f32
    %283 = vector.broadcast %cst_91 : f32 to vector<2x16xf32>
    %284 = arith.mulf %283, %282 : vector<2x16xf32>
    %cst_92 = arith.constant 1.000000e+00 : f32
    %285 = vector.broadcast %cst_92 : f32 to vector<2x16xf32>
    %286 = arith.subf %284, %285 : vector<2x16xf32>
    %287 = vector.extract_strided_slice %279 {offsets = [0, 48], sizes = [2, 16], strides = [1, 1]} : vector<2x64xf32> to vector<2x16xf32>
    %288 = arith.mulf %281, %270 : vector<2x16xf32>
    %289 = arith.mulf %280, %286 : vector<2x16xf32>
    %290 = arith.addf %288, %289 : vector<2x16xf32>
    %291 = math.tanh %290 : vector<2x16xf32>
    %292 = arith.mulf %287, %291 : vector<2x16xf32>
    %cst_93 = arith.constant dense<0.000000e+00> : vector<2x64xf32>
    %293 = tpu.matmul %292, %228, %cst_93 {dimension_numbers = #tpu.dot_dimension_numbers<[1], [0], [0], [1], [0, 0, 1, 1], [], []>} : vector<2x16xf32>, vector<16x64xf32>, vector<2x64xf32> -> vector<2x64xf32>
    %294 = arith.addf %222, %293 : vector<2x64xf32>
    %295 = arith.negf %294 : vector<2x64xf32>
    %296 = math.exp %295 : vector<2x64xf32>
    %cst_94 = arith.constant 1.000000e+00 : f32
    %297 = vector.broadcast %cst_94 : f32 to vector<2x64xf32>
    %298 = arith.addf %297, %296 : vector<2x64xf32>
    %299 = arith.divf %297, %298 : vector<2x64xf32>
    %300 = vector.extract_strided_slice %299 {offsets = [0, 0], sizes = [2, 16], strides = [1, 1]} : vector<2x64xf32> to vector<2x16xf32>
    %301 = vector.extract_strided_slice %299 {offsets = [0, 16], sizes = [2, 16], strides = [1, 1]} : vector<2x64xf32> to vector<2x16xf32>
    %302 = vector.extract_strided_slice %299 {offsets = [0, 32], sizes = [2, 16], strides = [1, 1]} : vector<2x64xf32> to vector<2x16xf32>
    %cst_95 = arith.constant 2.000000e+00 : f32
    %303 = vector.broadcast %cst_95 : f32 to vector<2x16xf32>
    %304 = arith.mulf %303, %302 : vector<2x16xf32>
    %cst_96 = arith.constant 1.000000e+00 : f32
    %305 = vector.broadcast %cst_96 : f32 to vector<2x16xf32>
    %306 = arith.subf %304, %305 : vector<2x16xf32>
    %307 = vector.extract_strided_slice %299 {offsets = [0, 48], sizes = [2, 16], strides = [1, 1]} : vector<2x64xf32> to vector<2x16xf32>
    %308 = arith.mulf %301, %290 : vector<2x16xf32>
    %309 = arith.mulf %300, %306 : vector<2x16xf32>
    %310 = arith.addf %308, %309 : vector<2x16xf32>
    %311 = math.tanh %310 : vector<2x16xf32>
    %312 = arith.mulf %307, %311 : vector<2x16xf32>
    %cst_97 = arith.constant dense<0.000000e+00> : vector<2x64xf32>
    %313 = tpu.matmul %312, %228, %cst_97 {dimension_numbers = #tpu.dot_dimension_numbers<[1], [0], [0], [1], [0, 0, 1, 1], [], []>} : vector<2x16xf32>, vector<16x64xf32>, vector<2x64xf32> -> vector<2x64xf32>
    %314 = arith.addf %223, %313 : vector<2x64xf32>
    %315 = arith.negf %314 : vector<2x64xf32>
    %316 = math.exp %315 : vector<2x64xf32>
    %cst_98 = arith.constant 1.000000e+00 : f32
    %317 = vector.broadcast %cst_98 : f32 to vector<2x64xf32>
    %318 = arith.addf %317, %316 : vector<2x64xf32>
    %319 = arith.divf %317, %318 : vector<2x64xf32>
    %320 = vector.extract_strided_slice %319 {offsets = [0, 0], sizes = [2, 16], strides = [1, 1]} : vector<2x64xf32> to vector<2x16xf32>
    %321 = vector.extract_strided_slice %319 {offsets = [0, 16], sizes = [2, 16], strides = [1, 1]} : vector<2x64xf32> to vector<2x16xf32>
    %322 = vector.extract_strided_slice %319 {offsets = [0, 32], sizes = [2, 16], strides = [1, 1]} : vector<2x64xf32> to vector<2x16xf32>
    %cst_99 = arith.constant 2.000000e+00 : f32
    %323 = vector.broadcast %cst_99 : f32 to vector<2x16xf32>
    %324 = arith.mulf %323, %322 : vector<2x16xf32>
    %cst_100 = arith.constant 1.000000e+00 : f32
    %325 = vector.broadcast %cst_100 : f32 to vector<2x16xf32>
    %326 = arith.subf %324, %325 : vector<2x16xf32>
    %327 = vector.extract_strided_slice %319 {offsets = [0, 48], sizes = [2, 16], strides = [1, 1]} : vector<2x64xf32> to vector<2x16xf32>
    %328 = arith.mulf %321, %310 : vector<2x16xf32>
    %329 = arith.mulf %320, %326 : vector<2x16xf32>
    %330 = arith.addf %328, %329 : vector<2x16xf32>
    %331 = math.tanh %330 : vector<2x16xf32>
    %332 = arith.mulf %327, %331 : vector<2x16xf32>
    %cst_101 = arith.constant dense<0.000000e+00> : vector<2x64xf32>
    %333 = tpu.matmul %332, %228, %cst_101 {dimension_numbers = #tpu.dot_dimension_numbers<[1], [0], [0], [1], [0, 0, 1, 1], [], []>} : vector<2x16xf32>, vector<16x64xf32>, vector<2x64xf32> -> vector<2x64xf32>
    %334 = arith.addf %224, %333 : vector<2x64xf32>
    %335 = arith.negf %334 : vector<2x64xf32>
    %336 = math.exp %335 : vector<2x64xf32>
    %cst_102 = arith.constant 1.000000e+00 : f32
    %337 = vector.broadcast %cst_102 : f32 to vector<2x64xf32>
    %338 = arith.addf %337, %336 : vector<2x64xf32>
    %339 = arith.divf %337, %338 : vector<2x64xf32>
    %340 = vector.extract_strided_slice %339 {offsets = [0, 0], sizes = [2, 16], strides = [1, 1]} : vector<2x64xf32> to vector<2x16xf32>
    %341 = vector.extract_strided_slice %339 {offsets = [0, 16], sizes = [2, 16], strides = [1, 1]} : vector<2x64xf32> to vector<2x16xf32>
    %342 = vector.extract_strided_slice %339 {offsets = [0, 32], sizes = [2, 16], strides = [1, 1]} : vector<2x64xf32> to vector<2x16xf32>
    %cst_103 = arith.constant 2.000000e+00 : f32
    %343 = vector.broadcast %cst_103 : f32 to vector<2x16xf32>
    %344 = arith.mulf %343, %342 : vector<2x16xf32>
    %cst_104 = arith.constant 1.000000e+00 : f32
    %345 = vector.broadcast %cst_104 : f32 to vector<2x16xf32>
    %346 = arith.subf %344, %345 : vector<2x16xf32>
    %347 = vector.extract_strided_slice %339 {offsets = [0, 48], sizes = [2, 16], strides = [1, 1]} : vector<2x64xf32> to vector<2x16xf32>
    %348 = arith.mulf %341, %330 : vector<2x16xf32>
    %349 = arith.mulf %340, %346 : vector<2x16xf32>
    %350 = arith.addf %348, %349 : vector<2x16xf32>
    %351 = math.tanh %350 : vector<2x16xf32>
    %352 = arith.mulf %347, %351 : vector<2x16xf32>
    %cst_105 = arith.constant dense<0.000000e+00> : vector<2x64xf32>
    %353 = tpu.matmul %352, %228, %cst_105 {dimension_numbers = #tpu.dot_dimension_numbers<[1], [0], [0], [1], [0, 0, 1, 1], [], []>} : vector<2x16xf32>, vector<16x64xf32>, vector<2x64xf32> -> vector<2x64xf32>
    %354 = arith.addf %225, %353 : vector<2x64xf32>
    %355 = arith.negf %354 : vector<2x64xf32>
    %356 = math.exp %355 : vector<2x64xf32>
    %cst_106 = arith.constant 1.000000e+00 : f32
    %357 = vector.broadcast %cst_106 : f32 to vector<2x64xf32>
    %358 = arith.addf %357, %356 : vector<2x64xf32>
    %359 = arith.divf %357, %358 : vector<2x64xf32>
    %360 = vector.extract_strided_slice %359 {offsets = [0, 0], sizes = [2, 16], strides = [1, 1]} : vector<2x64xf32> to vector<2x16xf32>
    %361 = vector.extract_strided_slice %359 {offsets = [0, 16], sizes = [2, 16], strides = [1, 1]} : vector<2x64xf32> to vector<2x16xf32>
    %362 = vector.extract_strided_slice %359 {offsets = [0, 32], sizes = [2, 16], strides = [1, 1]} : vector<2x64xf32> to vector<2x16xf32>
    %cst_107 = arith.constant 2.000000e+00 : f32
    %363 = vector.broadcast %cst_107 : f32 to vector<2x16xf32>
    %364 = arith.mulf %363, %362 : vector<2x16xf32>
    %cst_108 = arith.constant 1.000000e+00 : f32
    %365 = vector.broadcast %cst_108 : f32 to vector<2x16xf32>
    %366 = arith.subf %364, %365 : vector<2x16xf32>
    %367 = vector.extract_strided_slice %359 {offsets = [0, 48], sizes = [2, 16], strides = [1, 1]} : vector<2x64xf32> to vector<2x16xf32>
    %368 = arith.mulf %361, %350 : vector<2x16xf32>
    %369 = arith.mulf %360, %366 : vector<2x16xf32>
    %370 = arith.addf %368, %369 : vector<2x16xf32>
    %371 = math.tanh %370 : vector<2x16xf32>
    %372 = arith.mulf %367, %371 : vector<2x16xf32>
    %cst_109 = arith.constant dense<0.000000e+00> : vector<2x64xf32>
    %373 = tpu.matmul %372, %228, %cst_109 {dimension_numbers = #tpu.dot_dimension_numbers<[1], [0], [0], [1], [0, 0, 1, 1], [], []>} : vector<2x16xf32>, vector<16x64xf32>, vector<2x64xf32> -> vector<2x64xf32>
    %374 = arith.addf %226, %373 : vector<2x64xf32>
    %375 = arith.negf %374 : vector<2x64xf32>
    %376 = math.exp %375 : vector<2x64xf32>
    %cst_110 = arith.constant 1.000000e+00 : f32
    %377 = vector.broadcast %cst_110 : f32 to vector<2x64xf32>
    %378 = arith.addf %377, %376 : vector<2x64xf32>
    %379 = arith.divf %377, %378 : vector<2x64xf32>
    %380 = vector.extract_strided_slice %379 {offsets = [0, 0], sizes = [2, 16], strides = [1, 1]} : vector<2x64xf32> to vector<2x16xf32>
    %381 = vector.extract_strided_slice %379 {offsets = [0, 16], sizes = [2, 16], strides = [1, 1]} : vector<2x64xf32> to vector<2x16xf32>
    %382 = vector.extract_strided_slice %379 {offsets = [0, 32], sizes = [2, 16], strides = [1, 1]} : vector<2x64xf32> to vector<2x16xf32>
    %cst_111 = arith.constant 2.000000e+00 : f32
    %383 = vector.broadcast %cst_111 : f32 to vector<2x16xf32>
    %384 = arith.mulf %383, %382 : vector<2x16xf32>
    %cst_112 = arith.constant 1.000000e+00 : f32
    %385 = vector.broadcast %cst_112 : f32 to vector<2x16xf32>
    %386 = arith.subf %384, %385 : vector<2x16xf32>
    %387 = vector.extract_strided_slice %379 {offsets = [0, 48], sizes = [2, 16], strides = [1, 1]} : vector<2x64xf32> to vector<2x16xf32>
    %388 = arith.mulf %381, %370 : vector<2x16xf32>
    %389 = arith.mulf %380, %386 : vector<2x16xf32>
    %390 = arith.addf %388, %389 : vector<2x16xf32>
    %391 = math.tanh %390 : vector<2x16xf32>
    %392 = arith.mulf %387, %391 : vector<2x16xf32>
    %393 = tpu.concatenate %252, %272, %292, %312, %332, %352, %372, %392 in 0 : vector<2x16xf32>, vector<2x16xf32>, vector<2x16xf32>, vector<2x16xf32>, vector<2x16xf32>, vector<2x16xf32>, vector<2x16xf32>, vector<2x16xf32> -> vector<16x16xf32>
    %c1_113 = arith.constant 1 : index
    %c0_114 = arith.constant 0 : index
    %c0_115 = arith.constant 0 : index
    %394 = vector.load %arg6[%c1_113, %c0_114, %c0_115] : memref<2x16x64xf32, #tpu.memory_space<vmem>>, vector<1x16x64xf32>
    %395 = vector.shape_cast %394 : vector<1x16x64xf32> to vector<16x64xf32>
    %c1_116 = arith.constant 1 : index
    %c0_117 = arith.constant 0 : index
    %c0_118 = arith.constant 0 : index
    %396 = vector.load %arg8[%c1_116, %c0_117, %c0_118] : memref<2x1x64xf32, #tpu.memory_space<vmem>>, vector<1x1x64xf32>
    %397 = vector.shape_cast %396 : vector<1x1x64xf32> to vector<1x64xf32>
    %cst_119 = arith.constant dense<0.000000e+00> : vector<16x64xf32>
    %398 = tpu.matmul %393, %395, %cst_119 {dimension_numbers = #tpu.dot_dimension_numbers<[1], [0], [0], [1], [0, 0, 1, 1], [], []>} : vector<16x16xf32>, vector<16x64xf32>, vector<16x64xf32> -> vector<16x64xf32>
    %399 = vector.broadcast %397 : vector<1x64xf32> to vector<16x64xf32>
    %400 = arith.addf %398, %399 : vector<16x64xf32>
    %401 = vector.extract_strided_slice %400 {offsets = [0, 0], sizes = [2, 64], strides = [1, 1]} : vector<16x64xf32> to vector<2x64xf32>
    %402 = vector.extract_strided_slice %400 {offsets = [2, 0], sizes = [2, 64], strides = [1, 1]} : vector<16x64xf32> to vector<2x64xf32>
    %403 = vector.extract_strided_slice %400 {offsets = [4, 0], sizes = [2, 64], strides = [1, 1]} : vector<16x64xf32> to vector<2x64xf32>
    %404 = vector.extract_strided_slice %400 {offsets = [6, 0], sizes = [2, 64], strides = [1, 1]} : vector<16x64xf32> to vector<2x64xf32>
    %405 = vector.extract_strided_slice %400 {offsets = [8, 0], sizes = [2, 64], strides = [1, 1]} : vector<16x64xf32> to vector<2x64xf32>
    %406 = vector.extract_strided_slice %400 {offsets = [10, 0], sizes = [2, 64], strides = [1, 1]} : vector<16x64xf32> to vector<2x64xf32>
    %407 = vector.extract_strided_slice %400 {offsets = [12, 0], sizes = [2, 64], strides = [1, 1]} : vector<16x64xf32> to vector<2x64xf32>
    %408 = vector.extract_strided_slice %400 {offsets = [14, 0], sizes = [2, 64], strides = [1, 1]} : vector<16x64xf32> to vector<2x64xf32>
    %c1_120 = arith.constant 1 : index
    %c0_121 = arith.constant 0 : index
    %c0_122 = arith.constant 0 : index
    %409 = vector.load %arg7[%c1_120, %c0_121, %c0_122] : memref<2x16x64xf32, #tpu.memory_space<vmem>>, vector<1x16x64xf32>
    %410 = vector.shape_cast %409 : vector<1x16x64xf32> to vector<16x64xf32>
    %c2_123 = arith.constant 2 : index
    %c0_124 = arith.constant 0 : index
    %c0_125 = arith.constant 0 : index
    %411 = vector.load %arg1[%c2_123, %c0_124, %c0_125] : memref<3x2x16xf32, #tpu.memory_space<vmem>>, vector<1x2x16xf32>
    %412 = vector.shape_cast %411 : vector<1x2x16xf32> to vector<2x16xf32>
    %c2_126 = arith.constant 2 : index
    %c0_127 = arith.constant 0 : index
    %c0_128 = arith.constant 0 : index
    %413 = vector.load %arg2[%c2_126, %c0_127, %c0_128] : memref<3x2x16xf32, #tpu.memory_space<vmem>>, vector<1x2x16xf32>
    %414 = vector.shape_cast %413 : vector<1x2x16xf32> to vector<2x16xf32>
    %cst_129 = arith.constant dense<0.000000e+00> : vector<2x64xf32>
    %415 = tpu.matmul %412, %410, %cst_129 {dimension_numbers = #tpu.dot_dimension_numbers<[1], [0], [0], [1], [0, 0, 1, 1], [], []>} : vector<2x16xf32>, vector<16x64xf32>, vector<2x64xf32> -> vector<2x64xf32>
    %416 = arith.addf %401, %415 : vector<2x64xf32>
    %417 = arith.negf %416 : vector<2x64xf32>
    %418 = math.exp %417 : vector<2x64xf32>
    %cst_130 = arith.constant 1.000000e+00 : f32
    %419 = vector.broadcast %cst_130 : f32 to vector<2x64xf32>
    %420 = arith.addf %419, %418 : vector<2x64xf32>
    %421 = arith.divf %419, %420 : vector<2x64xf32>
    %422 = vector.extract_strided_slice %421 {offsets = [0, 0], sizes = [2, 16], strides = [1, 1]} : vector<2x64xf32> to vector<2x16xf32>
    %423 = vector.extract_strided_slice %421 {offsets = [0, 16], sizes = [2, 16], strides = [1, 1]} : vector<2x64xf32> to vector<2x16xf32>
    %424 = vector.extract_strided_slice %421 {offsets = [0, 32], sizes = [2, 16], strides = [1, 1]} : vector<2x64xf32> to vector<2x16xf32>
    %cst_131 = arith.constant 2.000000e+00 : f32
    %425 = vector.broadcast %cst_131 : f32 to vector<2x16xf32>
    %426 = arith.mulf %425, %424 : vector<2x16xf32>
    %cst_132 = arith.constant 1.000000e+00 : f32
    %427 = vector.broadcast %cst_132 : f32 to vector<2x16xf32>
    %428 = arith.subf %426, %427 : vector<2x16xf32>
    %429 = vector.extract_strided_slice %421 {offsets = [0, 48], sizes = [2, 16], strides = [1, 1]} : vector<2x64xf32> to vector<2x16xf32>
    %430 = arith.mulf %423, %414 : vector<2x16xf32>
    %431 = arith.mulf %422, %428 : vector<2x16xf32>
    %432 = arith.addf %430, %431 : vector<2x16xf32>
    %433 = math.tanh %432 : vector<2x16xf32>
    %434 = arith.mulf %429, %433 : vector<2x16xf32>
    %cst_133 = arith.constant dense<0.000000e+00> : vector<2x64xf32>
    %435 = tpu.matmul %434, %410, %cst_133 {dimension_numbers = #tpu.dot_dimension_numbers<[1], [0], [0], [1], [0, 0, 1, 1], [], []>} : vector<2x16xf32>, vector<16x64xf32>, vector<2x64xf32> -> vector<2x64xf32>
    %436 = arith.addf %402, %435 : vector<2x64xf32>
    %437 = arith.negf %436 : vector<2x64xf32>
    %438 = math.exp %437 : vector<2x64xf32>
    %cst_134 = arith.constant 1.000000e+00 : f32
    %439 = vector.broadcast %cst_134 : f32 to vector<2x64xf32>
    %440 = arith.addf %439, %438 : vector<2x64xf32>
    %441 = arith.divf %439, %440 : vector<2x64xf32>
    %442 = vector.extract_strided_slice %441 {offsets = [0, 0], sizes = [2, 16], strides = [1, 1]} : vector<2x64xf32> to vector<2x16xf32>
    %443 = vector.extract_strided_slice %441 {offsets = [0, 16], sizes = [2, 16], strides = [1, 1]} : vector<2x64xf32> to vector<2x16xf32>
    %444 = vector.extract_strided_slice %441 {offsets = [0, 32], sizes = [2, 16], strides = [1, 1]} : vector<2x64xf32> to vector<2x16xf32>
    %cst_135 = arith.constant 2.000000e+00 : f32
    %445 = vector.broadcast %cst_135 : f32 to vector<2x16xf32>
    %446 = arith.mulf %445, %444 : vector<2x16xf32>
    %cst_136 = arith.constant 1.000000e+00 : f32
    %447 = vector.broadcast %cst_136 : f32 to vector<2x16xf32>
    %448 = arith.subf %446, %447 : vector<2x16xf32>
    %449 = vector.extract_strided_slice %441 {offsets = [0, 48], sizes = [2, 16], strides = [1, 1]} : vector<2x64xf32> to vector<2x16xf32>
    %450 = arith.mulf %443, %432 : vector<2x16xf32>
    %451 = arith.mulf %442, %448 : vector<2x16xf32>
    %452 = arith.addf %450, %451 : vector<2x16xf32>
    %453 = math.tanh %452 : vector<2x16xf32>
    %454 = arith.mulf %449, %453 : vector<2x16xf32>
    %cst_137 = arith.constant dense<0.000000e+00> : vector<2x64xf32>
    %455 = tpu.matmul %454, %410, %cst_137 {dimension_numbers = #tpu.dot_dimension_numbers<[1], [0], [0], [1], [0, 0, 1, 1], [], []>} : vector<2x16xf32>, vector<16x64xf32>, vector<2x64xf32> -> vector<2x64xf32>
    %456 = arith.addf %403, %455 : vector<2x64xf32>
    %457 = arith.negf %456 : vector<2x64xf32>
    %458 = math.exp %457 : vector<2x64xf32>
    %cst_138 = arith.constant 1.000000e+00 : f32
    %459 = vector.broadcast %cst_138 : f32 to vector<2x64xf32>
    %460 = arith.addf %459, %458 : vector<2x64xf32>
    %461 = arith.divf %459, %460 : vector<2x64xf32>
    %462 = vector.extract_strided_slice %461 {offsets = [0, 0], sizes = [2, 16], strides = [1, 1]} : vector<2x64xf32> to vector<2x16xf32>
    %463 = vector.extract_strided_slice %461 {offsets = [0, 16], sizes = [2, 16], strides = [1, 1]} : vector<2x64xf32> to vector<2x16xf32>
    %464 = vector.extract_strided_slice %461 {offsets = [0, 32], sizes = [2, 16], strides = [1, 1]} : vector<2x64xf32> to vector<2x16xf32>
    %cst_139 = arith.constant 2.000000e+00 : f32
    %465 = vector.broadcast %cst_139 : f32 to vector<2x16xf32>
    %466 = arith.mulf %465, %464 : vector<2x16xf32>
    %cst_140 = arith.constant 1.000000e+00 : f32
    %467 = vector.broadcast %cst_140 : f32 to vector<2x16xf32>
    %468 = arith.subf %466, %467 : vector<2x16xf32>
    %469 = vector.extract_strided_slice %461 {offsets = [0, 48], sizes = [2, 16], strides = [1, 1]} : vector<2x64xf32> to vector<2x16xf32>
    %470 = arith.mulf %463, %452 : vector<2x16xf32>
    %471 = arith.mulf %462, %468 : vector<2x16xf32>
    %472 = arith.addf %470, %471 : vector<2x16xf32>
    %473 = math.tanh %472 : vector<2x16xf32>
    %474 = arith.mulf %469, %473 : vector<2x16xf32>
    %cst_141 = arith.constant dense<0.000000e+00> : vector<2x64xf32>
    %475 = tpu.matmul %474, %410, %cst_141 {dimension_numbers = #tpu.dot_dimension_numbers<[1], [0], [0], [1], [0, 0, 1, 1], [], []>} : vector<2x16xf32>, vector<16x64xf32>, vector<2x64xf32> -> vector<2x64xf32>
    %476 = arith.addf %404, %475 : vector<2x64xf32>
    %477 = arith.negf %476 : vector<2x64xf32>
    %478 = math.exp %477 : vector<2x64xf32>
    %cst_142 = arith.constant 1.000000e+00 : f32
    %479 = vector.broadcast %cst_142 : f32 to vector<2x64xf32>
    %480 = arith.addf %479, %478 : vector<2x64xf32>
    %481 = arith.divf %479, %480 : vector<2x64xf32>
    %482 = vector.extract_strided_slice %481 {offsets = [0, 0], sizes = [2, 16], strides = [1, 1]} : vector<2x64xf32> to vector<2x16xf32>
    %483 = vector.extract_strided_slice %481 {offsets = [0, 16], sizes = [2, 16], strides = [1, 1]} : vector<2x64xf32> to vector<2x16xf32>
    %484 = vector.extract_strided_slice %481 {offsets = [0, 32], sizes = [2, 16], strides = [1, 1]} : vector<2x64xf32> to vector<2x16xf32>
    %cst_143 = arith.constant 2.000000e+00 : f32
    %485 = vector.broadcast %cst_143 : f32 to vector<2x16xf32>
    %486 = arith.mulf %485, %484 : vector<2x16xf32>
    %cst_144 = arith.constant 1.000000e+00 : f32
    %487 = vector.broadcast %cst_144 : f32 to vector<2x16xf32>
    %488 = arith.subf %486, %487 : vector<2x16xf32>
    %489 = vector.extract_strided_slice %481 {offsets = [0, 48], sizes = [2, 16], strides = [1, 1]} : vector<2x64xf32> to vector<2x16xf32>
    %490 = arith.mulf %483, %472 : vector<2x16xf32>
    %491 = arith.mulf %482, %488 : vector<2x16xf32>
    %492 = arith.addf %490, %491 : vector<2x16xf32>
    %493 = math.tanh %492 : vector<2x16xf32>
    %494 = arith.mulf %489, %493 : vector<2x16xf32>
    %cst_145 = arith.constant dense<0.000000e+00> : vector<2x64xf32>
    %495 = tpu.matmul %494, %410, %cst_145 {dimension_numbers = #tpu.dot_dimension_numbers<[1], [0], [0], [1], [0, 0, 1, 1], [], []>} : vector<2x16xf32>, vector<16x64xf32>, vector<2x64xf32> -> vector<2x64xf32>
    %496 = arith.addf %405, %495 : vector<2x64xf32>
    %497 = arith.negf %496 : vector<2x64xf32>
    %498 = math.exp %497 : vector<2x64xf32>
    %cst_146 = arith.constant 1.000000e+00 : f32
    %499 = vector.broadcast %cst_146 : f32 to vector<2x64xf32>
    %500 = arith.addf %499, %498 : vector<2x64xf32>
    %501 = arith.divf %499, %500 : vector<2x64xf32>
    %502 = vector.extract_strided_slice %501 {offsets = [0, 0], sizes = [2, 16], strides = [1, 1]} : vector<2x64xf32> to vector<2x16xf32>
    %503 = vector.extract_strided_slice %501 {offsets = [0, 16], sizes = [2, 16], strides = [1, 1]} : vector<2x64xf32> to vector<2x16xf32>
    %504 = vector.extract_strided_slice %501 {offsets = [0, 32], sizes = [2, 16], strides = [1, 1]} : vector<2x64xf32> to vector<2x16xf32>
    %cst_147 = arith.constant 2.000000e+00 : f32
    %505 = vector.broadcast %cst_147 : f32 to vector<2x16xf32>
    %506 = arith.mulf %505, %504 : vector<2x16xf32>
    %cst_148 = arith.constant 1.000000e+00 : f32
    %507 = vector.broadcast %cst_148 : f32 to vector<2x16xf32>
    %508 = arith.subf %506, %507 : vector<2x16xf32>
    %509 = vector.extract_strided_slice %501 {offsets = [0, 48], sizes = [2, 16], strides = [1, 1]} : vector<2x64xf32> to vector<2x16xf32>
    %510 = arith.mulf %503, %492 : vector<2x16xf32>
    %511 = arith.mulf %502, %508 : vector<2x16xf32>
    %512 = arith.addf %510, %511 : vector<2x16xf32>
    %513 = math.tanh %512 : vector<2x16xf32>
    %514 = arith.mulf %509, %513 : vector<2x16xf32>
    %cst_149 = arith.constant dense<0.000000e+00> : vector<2x64xf32>
    %515 = tpu.matmul %514, %410, %cst_149 {dimension_numbers = #tpu.dot_dimension_numbers<[1], [0], [0], [1], [0, 0, 1, 1], [], []>} : vector<2x16xf32>, vector<16x64xf32>, vector<2x64xf32> -> vector<2x64xf32>
    %516 = arith.addf %406, %515 : vector<2x64xf32>
    %517 = arith.negf %516 : vector<2x64xf32>
    %518 = math.exp %517 : vector<2x64xf32>
    %cst_150 = arith.constant 1.000000e+00 : f32
    %519 = vector.broadcast %cst_150 : f32 to vector<2x64xf32>
    %520 = arith.addf %519, %518 : vector<2x64xf32>
    %521 = arith.divf %519, %520 : vector<2x64xf32>
    %522 = vector.extract_strided_slice %521 {offsets = [0, 0], sizes = [2, 16], strides = [1, 1]} : vector<2x64xf32> to vector<2x16xf32>
    %523 = vector.extract_strided_slice %521 {offsets = [0, 16], sizes = [2, 16], strides = [1, 1]} : vector<2x64xf32> to vector<2x16xf32>
    %524 = vector.extract_strided_slice %521 {offsets = [0, 32], sizes = [2, 16], strides = [1, 1]} : vector<2x64xf32> to vector<2x16xf32>
    %cst_151 = arith.constant 2.000000e+00 : f32
    %525 = vector.broadcast %cst_151 : f32 to vector<2x16xf32>
    %526 = arith.mulf %525, %524 : vector<2x16xf32>
    %cst_152 = arith.constant 1.000000e+00 : f32
    %527 = vector.broadcast %cst_152 : f32 to vector<2x16xf32>
    %528 = arith.subf %526, %527 : vector<2x16xf32>
    %529 = vector.extract_strided_slice %521 {offsets = [0, 48], sizes = [2, 16], strides = [1, 1]} : vector<2x64xf32> to vector<2x16xf32>
    %530 = arith.mulf %523, %512 : vector<2x16xf32>
    %531 = arith.mulf %522, %528 : vector<2x16xf32>
    %532 = arith.addf %530, %531 : vector<2x16xf32>
    %533 = math.tanh %532 : vector<2x16xf32>
    %534 = arith.mulf %529, %533 : vector<2x16xf32>
    %cst_153 = arith.constant dense<0.000000e+00> : vector<2x64xf32>
    %535 = tpu.matmul %534, %410, %cst_153 {dimension_numbers = #tpu.dot_dimension_numbers<[1], [0], [0], [1], [0, 0, 1, 1], [], []>} : vector<2x16xf32>, vector<16x64xf32>, vector<2x64xf32> -> vector<2x64xf32>
    %536 = arith.addf %407, %535 : vector<2x64xf32>
    %537 = arith.negf %536 : vector<2x64xf32>
    %538 = math.exp %537 : vector<2x64xf32>
    %cst_154 = arith.constant 1.000000e+00 : f32
    %539 = vector.broadcast %cst_154 : f32 to vector<2x64xf32>
    %540 = arith.addf %539, %538 : vector<2x64xf32>
    %541 = arith.divf %539, %540 : vector<2x64xf32>
    %542 = vector.extract_strided_slice %541 {offsets = [0, 0], sizes = [2, 16], strides = [1, 1]} : vector<2x64xf32> to vector<2x16xf32>
    %543 = vector.extract_strided_slice %541 {offsets = [0, 16], sizes = [2, 16], strides = [1, 1]} : vector<2x64xf32> to vector<2x16xf32>
    %544 = vector.extract_strided_slice %541 {offsets = [0, 32], sizes = [2, 16], strides = [1, 1]} : vector<2x64xf32> to vector<2x16xf32>
    %cst_155 = arith.constant 2.000000e+00 : f32
    %545 = vector.broadcast %cst_155 : f32 to vector<2x16xf32>
    %546 = arith.mulf %545, %544 : vector<2x16xf32>
    %cst_156 = arith.constant 1.000000e+00 : f32
    %547 = vector.broadcast %cst_156 : f32 to vector<2x16xf32>
    %548 = arith.subf %546, %547 : vector<2x16xf32>
    %549 = vector.extract_strided_slice %541 {offsets = [0, 48], sizes = [2, 16], strides = [1, 1]} : vector<2x64xf32> to vector<2x16xf32>
    %550 = arith.mulf %543, %532 : vector<2x16xf32>
    %551 = arith.mulf %542, %548 : vector<2x16xf32>
    %552 = arith.addf %550, %551 : vector<2x16xf32>
    %553 = math.tanh %552 : vector<2x16xf32>
    %554 = arith.mulf %549, %553 : vector<2x16xf32>
    %cst_157 = arith.constant dense<0.000000e+00> : vector<2x64xf32>
    %555 = tpu.matmul %554, %410, %cst_157 {dimension_numbers = #tpu.dot_dimension_numbers<[1], [0], [0], [1], [0, 0, 1, 1], [], []>} : vector<2x16xf32>, vector<16x64xf32>, vector<2x64xf32> -> vector<2x64xf32>
    %556 = arith.addf %408, %555 : vector<2x64xf32>
    %557 = arith.negf %556 : vector<2x64xf32>
    %558 = math.exp %557 : vector<2x64xf32>
    %cst_158 = arith.constant 1.000000e+00 : f32
    %559 = vector.broadcast %cst_158 : f32 to vector<2x64xf32>
    %560 = arith.addf %559, %558 : vector<2x64xf32>
    %561 = arith.divf %559, %560 : vector<2x64xf32>
    %562 = vector.extract_strided_slice %561 {offsets = [0, 0], sizes = [2, 16], strides = [1, 1]} : vector<2x64xf32> to vector<2x16xf32>
    %563 = vector.extract_strided_slice %561 {offsets = [0, 16], sizes = [2, 16], strides = [1, 1]} : vector<2x64xf32> to vector<2x16xf32>
    %564 = vector.extract_strided_slice %561 {offsets = [0, 32], sizes = [2, 16], strides = [1, 1]} : vector<2x64xf32> to vector<2x16xf32>
    %cst_159 = arith.constant 2.000000e+00 : f32
    %565 = vector.broadcast %cst_159 : f32 to vector<2x16xf32>
    %566 = arith.mulf %565, %564 : vector<2x16xf32>
    %cst_160 = arith.constant 1.000000e+00 : f32
    %567 = vector.broadcast %cst_160 : f32 to vector<2x16xf32>
    %568 = arith.subf %566, %567 : vector<2x16xf32>
    %569 = vector.extract_strided_slice %561 {offsets = [0, 48], sizes = [2, 16], strides = [1, 1]} : vector<2x64xf32> to vector<2x16xf32>
    %570 = arith.mulf %563, %552 : vector<2x16xf32>
    %571 = arith.mulf %562, %568 : vector<2x16xf32>
    %572 = arith.addf %570, %571 : vector<2x16xf32>
    %573 = math.tanh %572 : vector<2x16xf32>
    %574 = arith.mulf %569, %573 : vector<2x16xf32>
    %c0_161 = arith.constant 0 : index
    %c0_162 = arith.constant 0 : index
    %575 = vector.load %arg9[%c0_161, %c0_162] : memref<1x16xf32, #tpu.memory_space<vmem>>, vector<1x16xf32>
    %c0_163 = arith.constant 0 : index
    %c0_164 = arith.constant 0 : index
    %576 = vector.load %arg10[%c0_163, %c0_164] : memref<1x1xf32, #tpu.memory_space<vmem>>, vector<1x1xf32>
    %577 = vector.broadcast %575 : vector<1x16xf32> to vector<2x16xf32>
    %578 = arith.mulf %434, %577 : vector<2x16xf32>
    %cst_165 = arith.constant dense<0.000000e+00> : vector<2xf32>
    %579 = vector.multi_reduction <add>, %578, %cst_165 [1] : vector<2x16xf32> to vector<2xf32>
    %580 = vector.shape_cast %579 : vector<2xf32> to vector<2x1xf32>
    %581 = vector.broadcast %576 : vector<1x1xf32> to vector<2x1xf32>
    %582 = arith.addf %580, %581 : vector<2x1xf32>
    %583 = vector.broadcast %575 : vector<1x16xf32> to vector<2x16xf32>
    %584 = arith.mulf %454, %583 : vector<2x16xf32>
    %cst_166 = arith.constant dense<0.000000e+00> : vector<2xf32>
    %585 = vector.multi_reduction <add>, %584, %cst_166 [1] : vector<2x16xf32> to vector<2xf32>
    %586 = vector.shape_cast %585 : vector<2xf32> to vector<2x1xf32>
    %587 = vector.broadcast %576 : vector<1x1xf32> to vector<2x1xf32>
    %588 = arith.addf %586, %587 : vector<2x1xf32>
    %589 = vector.broadcast %575 : vector<1x16xf32> to vector<2x16xf32>
    %590 = arith.mulf %474, %589 : vector<2x16xf32>
    %cst_167 = arith.constant dense<0.000000e+00> : vector<2xf32>
    %591 = vector.multi_reduction <add>, %590, %cst_167 [1] : vector<2x16xf32> to vector<2xf32>
    %592 = vector.shape_cast %591 : vector<2xf32> to vector<2x1xf32>
    %593 = vector.broadcast %576 : vector<1x1xf32> to vector<2x1xf32>
    %594 = arith.addf %592, %593 : vector<2x1xf32>
    %595 = vector.broadcast %575 : vector<1x16xf32> to vector<2x16xf32>
    %596 = arith.mulf %494, %595 : vector<2x16xf32>
    %cst_168 = arith.constant dense<0.000000e+00> : vector<2xf32>
    %597 = vector.multi_reduction <add>, %596, %cst_168 [1] : vector<2x16xf32> to vector<2xf32>
    %598 = vector.shape_cast %597 : vector<2xf32> to vector<2x1xf32>
    %599 = vector.broadcast %576 : vector<1x1xf32> to vector<2x1xf32>
    %600 = arith.addf %598, %599 : vector<2x1xf32>
    %601 = vector.broadcast %575 : vector<1x16xf32> to vector<2x16xf32>
    %602 = arith.mulf %514, %601 : vector<2x16xf32>
    %cst_169 = arith.constant dense<0.000000e+00> : vector<2xf32>
    %603 = vector.multi_reduction <add>, %602, %cst_169 [1] : vector<2x16xf32> to vector<2xf32>
    %604 = vector.shape_cast %603 : vector<2xf32> to vector<2x1xf32>
    %605 = vector.broadcast %576 : vector<1x1xf32> to vector<2x1xf32>
    %606 = arith.addf %604, %605 : vector<2x1xf32>
    %607 = vector.broadcast %575 : vector<1x16xf32> to vector<2x16xf32>
    %608 = arith.mulf %534, %607 : vector<2x16xf32>
    %cst_170 = arith.constant dense<0.000000e+00> : vector<2xf32>
    %609 = vector.multi_reduction <add>, %608, %cst_170 [1] : vector<2x16xf32> to vector<2xf32>
    %610 = vector.shape_cast %609 : vector<2xf32> to vector<2x1xf32>
    %611 = vector.broadcast %576 : vector<1x1xf32> to vector<2x1xf32>
    %612 = arith.addf %610, %611 : vector<2x1xf32>
    %613 = vector.broadcast %575 : vector<1x16xf32> to vector<2x16xf32>
    %614 = arith.mulf %554, %613 : vector<2x16xf32>
    %cst_171 = arith.constant dense<0.000000e+00> : vector<2xf32>
    %615 = vector.multi_reduction <add>, %614, %cst_171 [1] : vector<2x16xf32> to vector<2xf32>
    %616 = vector.shape_cast %615 : vector<2xf32> to vector<2x1xf32>
    %617 = vector.broadcast %576 : vector<1x1xf32> to vector<2x1xf32>
    %618 = arith.addf %616, %617 : vector<2x1xf32>
    %619 = vector.broadcast %575 : vector<1x16xf32> to vector<2x16xf32>
    %620 = arith.mulf %574, %619 : vector<2x16xf32>
    %cst_172 = arith.constant dense<0.000000e+00> : vector<2xf32>
    %621 = vector.multi_reduction <add>, %620, %cst_172 [1] : vector<2x16xf32> to vector<2xf32>
    %622 = vector.shape_cast %621 : vector<2xf32> to vector<2x1xf32>
    %623 = vector.broadcast %576 : vector<1x1xf32> to vector<2x1xf32>
    %624 = arith.addf %622, %623 : vector<2x1xf32>
    %625 = tpu.concatenate %582, %588, %594, %600, %606, %612, %618, %624 in 1 : vector<2x1xf32>, vector<2x1xf32>, vector<2x1xf32>, vector<2x1xf32>, vector<2x1xf32>, vector<2x1xf32>, vector<2x1xf32>, vector<2x1xf32> -> vector<2x8xf32>
    %626 = arith.negf %625 : vector<2x8xf32>
    %627 = math.exp %626 : vector<2x8xf32>
    %cst_173 = arith.constant 1.000000e+00 : f32
    %628 = vector.broadcast %cst_173 : f32 to vector<2x8xf32>
    %629 = arith.addf %628, %627 : vector<2x8xf32>
    %630 = arith.divf %628, %629 : vector<2x8xf32>
    %c0_174 = arith.constant 0 : index
    %c0_175 = arith.constant 0 : index
    %631 = vector.load %arg11[%c0_174, %c0_175] : memref<2x8xf32, #tpu.memory_space<vmem>>, vector<2x8xf32>
    tpu.vector_store %arg11[%c0_174, %c0_175], %630 {strides = array<i32>} : memref<2x8xf32, #tpu.memory_space<vmem>>, vector<2x8xf32>,
    return
  }
}

</mosaic_0001>

<llo_original>
// kernel: tpu_custom_call.1
$region0: #{tpu_custom_call.1}
  #allocation0 [shape = 'u32[]', space=smem, size = 0x4, offset = 0x4, fixed_abs, tag = 'smem constant byte address 0x4 - core index']
  #allocation1 [shape = 'u32[144,128]{1,0:T(1,128)}', space=vmem, size = 0x12000, scoped, tag = 'internal scratch']
  #allocation2 [shape = 'f32[1,1]{1,0:T(1,128)S(1)}', space=vmem, size = 0x200, scoped, tag = 'scoped memory for tpu_custom_call.1']
  %s0 = inlined_call_operand.hbm [shape: f32[8,2,16], index: 0, kind: input, shape index: {}]
  %s1 = inlined_call_operand.hbm [shape: f32[3,2,16], index: 1, kind: input, shape index: {}]
  %s2 = inlined_call_operand.hbm [shape: f32[3,2,16], index: 2, kind: input, shape index: {}]
  %s3 = inlined_call_operand.hbm [shape: f32[16,64], index: 3, kind: input, shape index: {}]
  %s4 = inlined_call_operand.hbm [shape: f32[16,64], index: 4, kind: input, shape index: {}]
  %s5 = inlined_call_operand.vmem [shape: f32[1,64], index: 5, kind: input, shape index: {}]
  %s6 = inlined_call_operand.hbm [shape: f32[2,16,64], index: 6, kind: input, shape index: {}]
  %s7 = inlined_call_operand.hbm [shape: f32[2,16,64], index: 7, kind: input, shape index: {}]
  %s8 = inlined_call_operand.vmem [shape: f32[2,1,64], index: 8, kind: input, shape index: {}]
  %s9 = inlined_call_operand.vmem [shape: f32[1,16], index: 9, kind: input, shape index: {}]
  %s10 = inlined_call_operand.<no memory space> [shape: f32[1,1], index: 10, kind: input, shape index: {}]
  %s11 = inlined_call_operand.hbm [shape: f32[2,8], index: 11, kind: output, shape index: {}]
  %s12 = sld [smem:[#allocation0]]
  $region82: #{tpu_custom_call.1} parent=0
    _
  %s14 = ssub.s32 1, %s12
  %s15 = scalar_select 0, %s14, %s12
  %v16 = vstv %s10
  %17 = vst [vmem:[#allocation2] sm:$0x1] %v16
  $region1: #{tpu_custom_call.1} parent=0
    #allocation3 [shape = 'u8[8192]{0}', space=vmem, size = 0x2000, scoped, tag = 'input window, operand 0, single buffered']
    #allocation4 [shape = 's32[1]{0}', space=sflag, size = 0x4, scoped, tag = 'scoped memory for tpu_custom_call.1']
    #allocation5 [shape = 's32[1]{0}', space=sflag, size = 0x4, scoped, tag = 'scoped memory for tpu_custom_call.1']
    #allocation6 [shape = 'u8[3072]{0}', space=vmem, size = 0xc00, scoped, tag = 'input window, operand 1, single buffered']
    #allocation7 [shape = 's32[1]{0}', space=sflag, size = 0x4, scoped, tag = 'scoped memory for tpu_custom_call.1']
    #allocation8 [shape = 'u8[3072]{0}', space=vmem, size = 0xc00, scoped, tag = 'input window, operand 2, single buffered']
    #allocation9 [shape = 'u8[8192]{0}', space=vmem, size = 0x2000, scoped, tag = 'input window, operand 3, single buffered']
    #allocation10 [shape = 's32[1]{0}', space=sflag, size = 0x4, scoped, tag = 'scoped memory for tpu_custom_call.1']
    #allocation11 [shape = 'u8[8192]{0}', space=vmem, size = 0x2000, scoped, tag = 'input window, operand 4, single buffered']
    #allocation12 [shape = 'u8[16384]{0}', space=vmem, size = 0x4000, scoped, tag = 'input window, operand 6, single buffered']
    #allocation13 [shape = 's32[1]{0}', space=sflag, size = 0x4, scoped, tag = 'scoped memory for tpu_custom_call.1']
    #allocation14 [shape = 'u8[16384]{0}', space=vmem, size = 0x4000, scoped, tag = 'input window, operand 7, single buffered']
    #allocation15 [shape = 'u8[1024]{0}', space=vmem, size = 0x400, scoped, tag = 'output window, operand 0, single buffered']
    %18 = vsyncpa [#allocation4], 0
    %19 = vsyncpa [#allocation7], 0
    %20 = vsyncpa [#allocation10], 0
    %21 = vsyncpa [#allocation13], 0
    %22 = vsyncpa [#allocation5], 0
    // Predicated region
    $region2: #{tpu_custom_call.1} parent=1 // pred_check
      _
    $region3: #{tpu_custom_call.1} parent=1 // pred_check_branch
      %24 = sbr.rel (0) target = $region5
    $region4: #{tpu_custom_call.1} parent=1 // pred_region
      %s26 = ssub.s32 256, 256
      %27 = vsyncadd [#allocation4], %s26
      %s28 = sshll.u32 [#allocation3], 4
      %s29 = int_to_ptr.vmem [resolvable:$true] %s28
      %34 = dma.hbm_to_vmem [thread:$0]  %s0, 256, %s29, [#allocation4], 32, 32, 2
    $region5: #{tpu_custom_call.1} parent=1 // pred_fallthru
      _
    // Predicated region
    $region6: #{tpu_custom_call.1} parent=1 // pred_check
      _
    $region7: #{tpu_custom_call.1} parent=1 // pred_check_branch
      %36 = sbr.rel (0) target = $region9
    $region8: #{tpu_custom_call.1} parent=1 // pred_region
      %s38 = ssub.s32 96, 96
      %39 = vsyncadd [#allocation7], %s38
      %s40 = sshll.u32 [#allocation6], 4
      %s41 = int_to_ptr.vmem [resolvable:$true] %s40
      %46 = dma.hbm_to_vmem [thread:$0]  %s1, 96, %s41, [#allocation7], 32, 32, 2
    $region9: #{tpu_custom_call.1} parent=1 // pred_fallthru
      _
    // Predicated region
    $region10: #{tpu_custom_call.1} parent=1 // pred_check
      _
    $region11: #{tpu_custom_call.1} parent=1 // pred_check_branch
      %48 = sbr.rel (0) target = $region13
    $region12: #{tpu_custom_call.1} parent=1 // pred_region
      %s50 = ssub.s32 96, 96
      %51 = vsyncadd [#allocation7], %s50
      %s52 = sshll.u32 [#allocation8], 4
      %s53 = int_to_ptr.vmem [resolvable:$true] %s52
      %58 = dma.hbm_to_vmem [thread:$0]  %s2, 96, %s53, [#allocation7], 32, 32, 2
    $region13: #{tpu_custom_call.1} parent=1 // pred_fallthru
      _
    // Predicated region
    $region14: #{tpu_custom_call.1} parent=1 // pred_check
      _
    $region15: #{tpu_custom_call.1} parent=1 // pred_check_branch
      %60 = sbr.rel (0) target = $region17
    $region16: #{tpu_custom_call.1} parent=1 // pred_region
      %s62 = ssub.s32 256, 256
      %63 = vsyncadd [#allocation10], %s62
      %s64 = sshll.u32 [#allocation9], 4
      %s65 = int_to_ptr.vmem [resolvable:$true] %s64
      %70 = dma.hbm_to_vmem [thread:$0]  %s3, 256, %s65, [#allocation10], 128, 128, 8
    $region17: #{tpu_custom_call.1} parent=1 // pred_fallthru
      _
    // Predicated region
    $region18: #{tpu_custom_call.1} parent=1 // pred_check
      _
    $region19: #{tpu_custom_call.1} parent=1 // pred_check_branch
      %72 = sbr.rel (0) target = $region21
    $region20: #{tpu_custom_call.1} parent=1 // pred_region
      %s74 = ssub.s32 256, 256
      %75 = vsyncadd [#allocation10], %s74
      %s76 = sshll.u32 [#allocation11], 4
      %s77 = int_to_ptr.vmem [resolvable:$true] %s76
      %82 = dma.hbm_to_vmem [thread:$0]  %s4, 256, %s77, [#allocation10], 128, 128, 8
    $region21: #{tpu_custom_call.1} parent=1 // pred_fallthru
      _
    // Predicated region
    $region22: #{tpu_custom_call.1} parent=1 // pred_check
      _
    $region23: #{tpu_custom_call.1} parent=1 // pred_check_branch
      %84 = sbr.rel (0) target = $region25
    $region24: #{tpu_custom_call.1} parent=1 // pred_region
      _
    $region25: #{tpu_custom_call.1} parent=1 // pred_fallthru
      _
    // Predicated region
    $region26: #{tpu_custom_call.1} parent=1 // pred_check
      _
    $region27: #{tpu_custom_call.1} parent=1 // pred_check_branch
      %86 = sbr.rel (0) target = $region29
    $region28: #{tpu_custom_call.1} parent=1 // pred_region
      %s88 = ssub.s32 512, 512
      %89 = vsyncadd [#allocation13], %s88
      %s90 = sshll.u32 [#allocation12], 4
      %s91 = int_to_ptr.vmem [resolvable:$true] %s90
      %96 = dma.hbm_to_vmem [thread:$0]  %s6, 512, %s91, [#allocation13], 128, 128, 8
    $region29: #{tpu_custom_call.1} parent=1 // pred_fallthru
      _
    // Predicated region
    $region30: #{tpu_custom_call.1} parent=1 // pred_check
      _
    $region31: #{tpu_custom_call.1} parent=1 // pred_check_branch
      %98 = sbr.rel (0) target = $region33
    $region32: #{tpu_custom_call.1} parent=1 // pred_region
      %s100 = ssub.s32 512, 512
      %101 = vsyncadd [#allocation13], %s100
      %s102 = sshll.u32 [#allocation14], 4
      %s103 = int_to_ptr.vmem [resolvable:$true] %s102
      %108 = dma.hbm_to_vmem [thread:$0]  %s7, 512, %s103, [#allocation13], 128, 128, 8
    $region33: #{tpu_custom_call.1} parent=1 // pred_fallthru
      _
    // Predicated region
    $region34: #{tpu_custom_call.1} parent=1 // pred_check
      _
    $region35: #{tpu_custom_call.1} parent=1 // pred_check_branch
      %110 = sbr.rel (0) target = $region37
    $region36: #{tpu_custom_call.1} parent=1 // pred_region
      _
    $region37: #{tpu_custom_call.1} parent=1 // pred_fallthru
      _
    // Predicated region
    $region38: #{tpu_custom_call.1} parent=1 // pred_check
      _
    $region39: #{tpu_custom_call.1} parent=1 // pred_check_branch
      %112 = sbr.rel (0) target = $region41
    $region40: #{tpu_custom_call.1} parent=1 // pred_region
      _
    $region41: #{tpu_custom_call.1} parent=1 // pred_fallthru
      _
    // Predicated region
    $region42: #{tpu_custom_call.1} parent=1 // pred_check
      _
    $region43: #{tpu_custom_call.1} parent=1 // pred_check_branch
      %114 = sbr.rel (0) target = $region45
    $region44: #{tpu_custom_call.1} parent=1 // pred_region
      _
    $region45: #{tpu_custom_call.1} parent=1 // pred_fallthru
      _
    // Predicated region
    $region46: #{tpu_custom_call.1} parent=1 // pred_check
      _
    $region47: #{tpu_custom_call.1} parent=1 // pred_check_branch
      %116 = sbr.rel (0) target = $region49
    $region48: #{tpu_custom_call.1} parent=1 // pred_region
      %117 = dma.done [#allocation4], 256
    $region49: #{tpu_custom_call.1} parent=1 // pred_fallthru
      _
    // Predicated region
    $region50: #{tpu_custom_call.1} parent=1 // pred_check
      _
    $region51: #{tpu_custom_call.1} parent=1 // pred_check_branch
      %119 = sbr.rel (0) target = $region53
    $region52: #{tpu_custom_call.1} parent=1 // pred_region
      %120 = dma.done [#allocation7], 96
    $region53: #{tpu_custom_call.1} parent=1 // pred_fallthru
      _
    // Predicated region
    $region54: #{tpu_custom_call.1} parent=1 // pred_check
      _
    $region55: #{tpu_custom_call.1} parent=1 // pred_check_branch
      %122 = sbr.rel (0) target = $region57
    $region56: #{tpu_custom_call.1} parent=1 // pred_region
      %123 = dma.done [#allocation7], 96
    $region57: #{tpu_custom_call.1} parent=1 // pred_fallthru
      _
    // Predicated region
    $region58: #{tpu_custom_call.1} parent=1 // pred_check
      _
    $region59: #{tpu_custom_call.1} parent=1 // pred_check_branch
      %125 = sbr.rel (0) target = $region61
    $region60: #{tpu_custom_call.1} parent=1 // pred_region
      %126 = dma.done [#allocation10], 256
    $region61: #{tpu_custom_call.1} parent=1 // pred_fallthru
      _
    // Predicated region
    $region62: #{tpu_custom_call.1} parent=1 // pred_check
      _
    $region63: #{tpu_custom_call.1} parent=1 // pred_check_branch
      %128 = sbr.rel (0) target = $region65
    $region64: #{tpu_custom_call.1} parent=1 // pred_region
      %129 = dma.done [#allocation10], 256
    $region65: #{tpu_custom_call.1} parent=1 // pred_fallthru
      _
    // Predicated region
    $region66: #{tpu_custom_call.1} parent=1 // pred_check
      _
    $region67: #{tpu_custom_call.1} parent=1 // pred_check_branch
      %131 = sbr.rel (0) target = $region69
    $region68: #{tpu_custom_call.1} parent=1 // pred_region
      %132 = dma.done [#allocation13], 512
    $region69: #{tpu_custom_call.1} parent=1 // pred_fallthru
      _
    // Predicated region
    $region70: #{tpu_custom_call.1} parent=1 // pred_check
      _
    $region71: #{tpu_custom_call.1} parent=1 // pred_check_branch
      %134 = sbr.rel (0) target = $region73
    $region72: #{tpu_custom_call.1} parent=1 // pred_region
      %135 = dma.done [#allocation13], 512
    $region73: #{tpu_custom_call.1} parent=1 // pred_fallthru
      _
    %v136 = vld [vmem:[#allocation3] sm:$0x3]
    %s137 = scalar_lea.vmem [#allocation3], 2
    %v138 = vld [vmem:[%s137] sm:$0x3]
    %s139 = scalar_lea.vmem [#allocation3], 4
    %v140 = vld [vmem:[%s139] sm:$0x3]
    %s141 = scalar_lea.vmem [#allocation3], 6
    %v142 = vld [vmem:[%s141] sm:$0x3]
    %s143 = scalar_lea.vmem [#allocation3], 8
    %v144 = vld [vmem:[%s143] sm:$0x3]
    %s145 = scalar_lea.vmem [#allocation3], 10
    %v146 = vld [vmem:[%s145] sm:$0x3]
    %s147 = scalar_lea.vmem [#allocation3], 12
    %v148 = vld [vmem:[%s147] sm:$0x3]
    %s149 = scalar_lea.vmem [#allocation3], 14
    %v150 = vld [vmem:[%s149] sm:$0x3]
    %v152 = vrot.slane %v138, 6
    %v155 = vrot.slane %v140, 4
    %v158 = vrot.slane %v142, 2
    %v161 = vrot.slane %v146, 6
    %v164 = vrot.slane %v148, 4
    %v167 = vrot.slane %v150, 2
    %vm169 = vcmask 1041408
    %v170 = vsel %vm169, %v136, %v152
    %vm171 = vcmask 1043456
    %v172 = vsel %vm171, %v170, %v155
    %vm173 = vcmask 1045504
    %v174 = vsel %vm173, %v172, %v158
    %v175 = vsel %vm169, %v144, %v161
    %v176 = vsel %vm171, %v175, %v164
    %v177 = vsel %vm173, %v176, %v167
    %vm178 = vcmask 130048
    %v179 = vsel %vm178, %v174, 0.0
    %180 = vadd.xlane.f32.xlu0 %v179
    %v181 = vpop.xlane.xlu0 %180
    %v182 = vsel %vm178, %v177, 0.0
    %183 = vadd.xlane.f32.xlu0 %v182
    %v184 = vpop.xlane.xlu0 %183
    %v185 = vrcp.pop 16.0
    %v186 = vmul.f32 %v181, %v185
    %v187 = vmul.f32 %v184, %v185
    %v188 = vsub.f32 %v174, %v186
    %v189 = vsub.f32 %v177, %v187
    %v190 = vmul.f32 %v188, %v188
    %v191 = vmul.f32 %v189, %v189
    %v192 = vsel %vm178, %v190, 0.0
    %193 = vadd.xlane.f32.xlu0 %v192
    %v194 = vpop.xlane.xlu0 %193
    %v195 = vsel %vm178, %v191, 0.0
    %196 = vadd.xlane.f32.xlu0 %v195
    %v197 = vpop.xlane.xlu0 %196
    %v198 = vmul.f32 %v194, 0.06666667
    %v199 = vmul.f32 %v197, 0.06666667
    %v200 = vrsqrt.pop %v198
    %v201 = vmul.f32 %v198, %v200
    %vm202 = vcmp.eq.f32.partialorder %v198, inf
    %v203 = vsel %vm202, %v198, %v201
    %vm204 = vcmp.eq.f32.partialorder %v198, 0.0
    %v205 = vand.u32 %v198, 2147483648
    %v206 = vsel %vm204, %v205, %v203
    %v207 = vrsqrt.pop %v199
    %v208 = vmul.f32 %v199, %v207
    %vm209 = vcmp.eq.f32.partialorder %v199, inf
    %v210 = vsel %vm209, %v199, %v208
    %vm211 = vcmp.eq.f32.partialorder %v199, 0.0
    %v212 = vand.u32 %v199, 2147483648
    %v213 = vsel %vm211, %v212, %v210
    %v214 = vadd.f32 %v206, 1e-09
    %v215 = vadd.f32 %v213, 1e-09
    %v216 = vrcp.pop %v214
    %v217 = vmul.f32 %v188, %v216
    %v218 = vrcp.pop %v215
    %v219 = vmul.f32 %v189, %v218
    %v220 = vld [vmem:[#allocation9] sm:$0xff]
    %v221 = vld [vmem:[#allocation9 + $0x8] sm:$0xff]
    %v222 = vld [vmem:[%s5] sm:$0x1]
    %v224 = vlaneseq
    %v225 = vshrl.u32 %v224, 7
    %v226 = vsub.s32 0, %v225
    %v227 = vrot.slane %v222, %v226
    %v230 = vsel %vm178, %v217, 0
    %v233 = vsel %vm178, %v219, 0
    %235 = vmatprep.subr.mxu0 0.0
    %236 = vmatpush1.msra.mxu0 0.0
    %237 = vmatprep.subr.mxu0 0.0
    %238 = vmatpush1.msra.mxu0 0.0
    %239 = vmatprep.subr.mxu0 0.0
    %240 = vmatpush1.msra.mxu0 0.0
    %241 = vmatprep.subr.mxu0 0.0
    %242 = vmatpush1.msra.mxu0 0.0
    %243 = vmatprep.subr.mxu0 0.0
    %244 = vmatpush1.msra.mxu0 0.0
    %245 = vmatprep.subr.mxu0 0.0
    %246 = vmatpush1.msra.mxu0 0.0
    %247 = vmatprep.subr.mxu0 0.0
    %248 = vmatpush1.msra.mxu0 0.0
    %249 = vmatprep.subr.mxu0 0.0
    %250 = vmatpush1.msra.mxu0 0.0
    %251 = vmatprep.subr.mxu0 0.0
    %252 = vmatpush1.msra.mxu0 0.0
    %253 = vmatprep.subr.mxu0 0.0
    %254 = vmatpush1.msra.mxu0 0.0
    %255 = vmatprep.subr.mxu0 0.0
    %256 = vmatpush1.msra.mxu0 0.0
    %257 = vmatprep.subr.mxu0 0.0
    %258 = vmatpush1.msra.mxu0 0.0
    %259 = vmatprep.subr.mxu0 0.0
    %260 = vmatpush1.msra.mxu0 0.0
    %261 = vmatprep.subr.mxu0 0.0
    %262 = vmatpush1.msra.mxu0 0.0
    %263 = vmatprep.subr.mxu0 0.0
    %264 = vmatpush1.msra.mxu0 %v221
    %265 = vmatprep.subr.mxu0 0.0
    %266 = vmatpush1.msra.mxu0 %v220
    %267 = vmatprep.subr.mxu0 0.0
    %268 = vmatpush2.msra.mxu0 0.0
    %269 = vmatprep.subr.mxu0 0.0
    %270 = vmatpush2.msra.mxu0 0.0
    %271 = vmatprep.subr.mxu0 0.0
    %272 = vmatpush2.msra.mxu0 0.0
    %273 = vmatprep.subr.mxu0 0.0
    %274 = vmatpush2.msra.mxu0 0.0
    %275 = vmatprep.subr.mxu0 0.0
    %276 = vmatpush2.msra.mxu0 0.0
    %277 = vmatprep.subr.mxu0 0.0
    %278 = vmatpush2.msra.mxu0 0.0
    %279 = vmatprep.subr.mxu0 0.0
    %280 = vmatpush2.msra.mxu0 0.0
    %281 = vmatprep.subr.mxu0 0.0
    %282 = vmatpush2.msra.mxu0 0.0
    %283 = vmatprep.subr.mxu0 0.0
    %284 = vmatpush2.msra.mxu0 0.0
    %285 = vmatprep.subr.mxu0 0.0
    %286 = vmatpush2.msra.mxu0 0.0
    %287 = vmatprep.subr.mxu0 0.0
    %288 = vmatpush2.msra.mxu0 0.0
    %289 = vmatprep.subr.mxu0 0.0
    %290 = vmatpush2.msra.mxu0 0.0
    %291 = vmatprep.subr.mxu0 0.0
    %292 = vmatpush2.msra.mxu0 0.0
    %293 = vmatprep.subr.mxu0 0.0
    %294 = vmatpush2.msra.mxu0 0.0
    %295 = vmatprep.subr.mxu0 0.0
    %296 = vmatpush2.msra.mxu0 0.0
    %297 = vmatprep.subr.mxu0 0.0
    %298 = vmatpush2.msra.mxu0 0.0
    %299 = vmatprep.mubr.f32.mxu0 0.0
    %300 = vmatmul.mubr.f32.gmra.mxu0 %v230
    %v301 = vpop.f32.mrf.mxu0
    %v302 = vadd.f32 %v227, %v301
    %v303 = vpop.f32.mrf.mxu0
    %304 = vmatprep.mubr.f32.mxu0 0.0
    %305 = vmatmul.mubr.f32.gmra.mxu0 %v233
    %v306 = vpop.f32.mrf.mxu0
    %v307 = vadd.f32 %v227, %v306
    %v308 = vpop.f32.mrf.mxu0
    %309 = vdwg.mxu0
    %v310 = vld [vmem:[#allocation11] sm:$0xff]
    %v311 = vld [vmem:[#allocation11 + $0x8] sm:$0xff]
    %v312 = vld [vmem:[#allocation6] sm:$0x3]
    %v313 = vld [vmem:[#allocation8] sm:$0x3]
    %v315 = vsel %vm178, %v312, 0
    %317 = vmatprep.subr.mxu0 0.0
    %318 = vmatpush1.msra.mxu0 0.0
    %319 = vmatprep.subr.mxu0 0.0
    %320 = vmatpush1.msra.mxu0 0.0
    %321 = vmatprep.subr.mxu0 0.0
    %322 = vmatpush1.msra.mxu0 0.0
    %323 = vmatprep.subr.mxu0 0.0
    %324 = vmatpush1.msra.mxu0 0.0
    %325 = vmatprep.subr.mxu0 0.0
    %326 = vmatpush1.msra.mxu0 0.0
    %327 = vmatprep.subr.mxu0 0.0
    %328 = vmatpush1.msra.mxu0 0.0
    %329 = vmatprep.subr.mxu0 0.0
    %330 = vmatpush1.msra.mxu0 0.0
    %331 = vmatprep.subr.mxu0 0.0
    %332 = vmatpush1.msra.mxu0 0.0
    %333 = vmatprep.subr.mxu0 0.0
    %334 = vmatpush1.msra.mxu0 0.0
    %335 = vmatprep.subr.mxu0 0.0
    %336 = vmatpush1.msra.mxu0 0.0
    %337 = vmatprep.subr.mxu0 0.0
    %338 = vmatpush1.msra.mxu0 0.0
    %339 = vmatprep.subr.mxu0 0.0
    %340 = vmatpush1.msra.mxu0 0.0
    %341 = vmatprep.subr.mxu0 0.0
    %342 = vmatpush1.msra.mxu0 0.0
    %343 = vmatprep.subr.mxu0 0.0
    %344 = vmatpush1.msra.mxu0 0.0
    %345 = vmatprep.subr.mxu0 0.0
    %346 = vmatpush1.msra.mxu0 %v311
    %347 = vmatprep.subr.mxu0 0.0
    %348 = vmatpush1.msra.mxu0 %v310
    %349 = vmatprep.subr.mxu0 0.0
    %350 = vmatpush2.msra.mxu0 0.0
    %351 = vmatprep.subr.mxu0 0.0
    %352 = vmatpush2.msra.mxu0 0.0
    %353 = vmatprep.subr.mxu0 0.0
    %354 = vmatpush2.msra.mxu0 0.0
    %355 = vmatprep.subr.mxu0 0.0
    %356 = vmatpush2.msra.mxu0 0.0
    %357 = vmatprep.subr.mxu0 0.0
    %358 = vmatpush2.msra.mxu0 0.0
    %359 = vmatprep.subr.mxu0 0.0
    %360 = vmatpush2.msra.mxu0 0.0
    %361 = vmatprep.subr.mxu0 0.0
    %362 = vmatpush2.msra.mxu0 0.0
    %363 = vmatprep.subr.mxu0 0.0
    %364 = vmatpush2.msra.mxu0 0.0
    %365 = vmatprep.subr.mxu0 0.0
    %366 = vmatpush2.msra.mxu0 0.0
    %367 = vmatprep.subr.mxu0 0.0
    %368 = vmatpush2.msra.mxu0 0.0
    %369 = vmatprep.subr.mxu0 0.0
    %370 = vmatpush2.msra.mxu0 0.0
    %371 = vmatprep.subr.mxu0 0.0
    %372 = vmatpush2.msra.mxu0 0.0
    %373 = vmatprep.subr.mxu0 0.0
    %374 = vmatpush2.msra.mxu0 0.0
    %375 = vmatprep.subr.mxu0 0.0
    %376 = vmatpush2.msra.mxu0 0.0
    %377 = vmatprep.subr.mxu0 0.0
    %378 = vmatpush2.msra.mxu0 0.0
    %379 = vmatprep.subr.mxu0 0.0
    %380 = vmatpush2.msra.mxu0 0.0
    %381 = vmatprep.mubr.f32.mxu0 0.0
    %382 = vmatmul.mubr.f32.gmra.mxu0 %v315
    %v383 = vpop.f32.mrf.mxu0
    %v384 = vadd.f32 0.0, %v383
    %v385 = vpop.f32.mrf.mxu0
    %386 = vdwg.mxu0
    %v387 = vadd.f32 %v302, %v384
    %v388 = vxor.u32 %v387, 2147483648
    %v389 = vmul.f32 %v388, 1.442695
    %v390 = vpow.pop %v389
    %v391 = vadd.f32 %v390, 1.0
    %v392 = vrcp.pop %v391
    %v393 = vmul.f32 1.0, %v392
    %v394 = vmul.f32 %v393, 2.0
    %v395 = vsub.f32 %v394, 1.0
    %397 = vrot.lane.b32.xlu0 %v313, 16
    %v398 = vpop.permute.xlu0 %397
    %v400 = vmul.f32 %v393, %v398
    %402 = vrot.lane.b32.xlu0 %v395, 96
    %v403 = vpop.permute.xlu0 %402
    %v405 = vmul.f32 %v393, %v403
    %407 = vrot.lane.b32.xlu0 %v405, 16
    %v408 = vpop.permute.xlu0 %407
    %v410 = vadd.f32 %v400, %v408
    %v411 = vtanh.pop %v410
    %413 = vrot.lane.b32.xlu0 %v411, 32
    %v414 = vpop.permute.xlu0 %413
    %v416 = vmul.f32 %v393, %v414
    %418 = vrot.lane.b32.xlu0 %v416, 80
    %v419 = vpop.permute.xlu0 %418
    %v420 = vsel %vm178, %v419, 0
    %422 = vmatprep.subr.mxu0 0.0
    %423 = vmatpush1.msra.mxu0 0.0
    %424 = vmatprep.subr.mxu0 0.0
    %425 = vmatpush1.msra.mxu0 0.0
    %426 = vmatprep.subr.mxu0 0.0
    %427 = vmatpush1.msra.mxu0 0.0
    %428 = vmatprep.subr.mxu0 0.0
    %429 = vmatpush1.msra.mxu0 0.0
    %430 = vmatprep.subr.mxu0 0.0
    %431 = vmatpush1.msra.mxu0 0.0
    %432 = vmatprep.subr.mxu0 0.0
    %433 = vmatpush1.msra.mxu0 0.0
    %434 = vmatprep.subr.mxu0 0.0
    %435 = vmatpush1.msra.mxu0 0.0
    %436 = vmatprep.subr.mxu0 0.0
    %437 = vmatpush1.msra.mxu0 0.0
    %438 = vmatprep.subr.mxu0 0.0
    %439 = vmatpush1.msra.mxu0 0.0
    %440 = vmatprep.subr.mxu0 0.0
    %441 = vmatpush1.msra.mxu0 0.0
    %442 = vmatprep.subr.mxu0 0.0
    %443 = vmatpush1.msra.mxu0 0.0
    %444 = vmatprep.subr.mxu0 0.0
    %445 = vmatpush1.msra.mxu0 0.0
    %446 = vmatprep.subr.mxu0 0.0
    %447 = vmatpush1.msra.mxu0 0.0
    %448 = vmatprep.subr.mxu0 0.0
    %449 = vmatpush1.msra.mxu0 0.0
    %450 = vmatprep.subr.mxu0 0.0
    %451 = vmatpush1.msra.mxu0 %v311
    %452 = vmatprep.subr.mxu0 0.0
    %453 = vmatpush1.msra.mxu0 %v310
    %454 = vmatprep.subr.mxu0 0.0
    %455 = vmatpush2.msra.mxu0 0.0
    %456 = vmatprep.subr.mxu0 0.0
    %457 = vmatpush2.msra.mxu0 0.0
    %458 = vmatprep.subr.mxu0 0.0
    %459 = vmatpush2.msra.mxu0 0.0
    %460 = vmatprep.subr.mxu0 0.0
    %461 = vmatpush2.msra.mxu0 0.0
    %462 = vmatprep.subr.mxu0 0.0
    %463 = vmatpush2.msra.mxu0 0.0
    %464 = vmatprep.subr.mxu0 0.0
    %465 = vmatpush2.msra.mxu0 0.0
    %466 = vmatprep.subr.mxu0 0.0
    %467 = vmatpush2.msra.mxu0 0.0
    %468 = vmatprep.subr.mxu0 0.0
    %469 = vmatpush2.msra.mxu0 0.0
    %470 = vmatprep.subr.mxu0 0.0
    %471 = vmatpush2.msra.mxu0 0.0
    %472 = vmatprep.subr.mxu0 0.0
    %473 = vmatpush2.msra.mxu0 0.0
    %474 = vmatprep.subr.mxu0 0.0
    %475 = vmatpush2.msra.mxu0 0.0
    %476 = vmatprep.subr.mxu0 0.0
    %477 = vmatpush2.msra.mxu0 0.0
    %478 = vmatprep.subr.mxu0 0.0
    %479 = vmatpush2.msra.mxu0 0.0
    %480 = vmatprep.subr.mxu0 0.0
    %481 = vmatpush2.msra.mxu0 0.0
    %482 = vmatprep.subr.mxu0 0.0
    %483 = vmatpush2.msra.mxu0 0.0
    %484 = vmatprep.subr.mxu0 0.0
    %485 = vmatpush2.msra.mxu0 0.0
    %486 = vmatprep.mubr.f32.mxu0 0.0
    %487 = vmatmul.mubr.f32.gmra.mxu0 %v420
    %v488 = vpop.f32.mrf.mxu0
    %v489 = vadd.f32 0.0, %v488
    %v490 = vpop.f32.mrf.mxu0
    %491 = vdwg.mxu0
    %v493 = vrot.slane %v489, 6
    %v495 = vadd.f32 %v302, %v493
    %v496 = vxor.u32 %v495, 2147483648
    %v497 = vmul.f32 %v496, 1.442695
    %v498 = vpow.pop %v497
    %v499 = vadd.f32 %v498, 1.0
    %v500 = vrcp.pop %v499
    %v501 = vmul.f32 1.0, %v500
    %v502 = vmul.f32 %v501, 2.0
    %v503 = vsub.f32 %v502, 1.0
    %v505 = vrot.slane %v410, 6
    %v507 = vmul.f32 %v501, %v505
    %509 = vrot.lane.b32.xlu0 %v503, 96
    %v510 = vpop.permute.xlu0 %509
    %v512 = vmul.f32 %v501, %v510
    %514 = vrot.lane.b32.xlu0 %v512, 16
    %v515 = vpop.permute.xlu0 %514
    %v517 = vadd.f32 %v507, %v515
    %v518 = vtanh.pop %v517
    %520 = vrot.lane.b32.xlu0 %v518, 32
    %v521 = vpop.permute.xlu0 %520
    %v523 = vmul.f32 %v501, %v521
    %v525 = vrot.slane %v523, 2
    %526 = vrot.lane.b32.xlu0 %v525, 80
    %v527 = vpop.permute.xlu0 %526
    %v528 = vsel %vm178, %v527, 0
    %530 = vmatprep.subr.mxu0 0.0
    %531 = vmatpush1.msra.mxu0 0.0
    %532 = vmatprep.subr.mxu0 0.0
    %533 = vmatpush1.msra.mxu0 0.0
    %534 = vmatprep.subr.mxu0 0.0
    %535 = vmatpush1.msra.mxu0 0.0
    %536 = vmatprep.subr.mxu0 0.0
    %537 = vmatpush1.msra.mxu0 0.0
    %538 = vmatprep.subr.mxu0 0.0
    %539 = vmatpush1.msra.mxu0 0.0
    %540 = vmatprep.subr.mxu0 0.0
    %541 = vmatpush1.msra.mxu0 0.0
    %542 = vmatprep.subr.mxu0 0.0
    %543 = vmatpush1.msra.mxu0 0.0
    %544 = vmatprep.subr.mxu0 0.0
    %545 = vmatpush1.msra.mxu0 0.0
    %546 = vmatprep.subr.mxu0 0.0
    %547 = vmatpush1.msra.mxu0 0.0
    %548 = vmatprep.subr.mxu0 0.0
    %549 = vmatpush1.msra.mxu0 0.0
    %550 = vmatprep.subr.mxu0 0.0
    %551 = vmatpush1.msra.mxu0 0.0
    %552 = vmatprep.subr.mxu0 0.0
    %553 = vmatpush1.msra.mxu0 0.0
    %554 = vmatprep.subr.mxu0 0.0
    %555 = vmatpush1.msra.mxu0 0.0
    %556 = vmatprep.subr.mxu0 0.0
    %557 = vmatpush1.msra.mxu0 0.0
    %558 = vmatprep.subr.mxu0 0.0
    %559 = vmatpush1.msra.mxu0 %v311
    %560 = vmatprep.subr.mxu0 0.0
    %561 = vmatpush1.msra.mxu0 %v310
    %562 = vmatprep.subr.mxu0 0.0
    %563 = vmatpush2.msra.mxu0 0.0
    %564 = vmatprep.subr.mxu0 0.0
    %565 = vmatpush2.msra.mxu0 0.0
    %566 = vmatprep.subr.mxu0 0.0
    %567 = vmatpush2.msra.mxu0 0.0
    %568 = vmatprep.subr.mxu0 0.0
    %569 = vmatpush2.msra.mxu0 0.0
    %570 = vmatprep.subr.mxu0 0.0
    %571 = vmatpush2.msra.mxu0 0.0
    %572 = vmatprep.subr.mxu0 0.0
    %573 = vmatpush2.msra.mxu0 0.0
    %574 = vmatprep.subr.mxu0 0.0
    %575 = vmatpush2.msra.mxu0 0.0
    %576 = vmatprep.subr.mxu0 0.0
    %577 = vmatpush2.msra.mxu0 0.0
    %578 = vmatprep.subr.mxu0 0.0
    %579 = vmatpush2.msra.mxu0 0.0
    %580 = vmatprep.subr.mxu0 0.0
    %581 = vmatpush2.msra.mxu0 0.0
    %582 = vmatprep.subr.mxu0 0.0
    %583 = vmatpush2.msra.mxu0 0.0
    %584 = vmatprep.subr.mxu0 0.0
    %585 = vmatpush2.msra.mxu0 0.0
    %586 = vmatprep.subr.mxu0 0.0
    %587 = vmatpush2.msra.mxu0 0.0
    %588 = vmatprep.subr.mxu0 0.0
    %589 = vmatpush2.msra.mxu0 0.0
    %590 = vmatprep.subr.mxu0 0.0
    %591 = vmatpush2.msra.mxu0 0.0
    %592 = vmatprep.subr.mxu0 0.0
    %593 = vmatpush2.msra.mxu0 0.0
    %594 = vmatprep.mubr.f32.mxu0 0.0
    %595 = vmatmul.mubr.f32.gmra.mxu0 %v528
    %v596 = vpop.f32.mrf.mxu0
    %v597 = vadd.f32 0.0, %v596
    %v598 = vpop.f32.mrf.mxu0
    %599 = vdwg.mxu0
    %v601 = vrot.slane %v597, 4
    %v603 = vadd.f32 %v302, %v601
    %v604 = vxor.u32 %v603, 2147483648
    %v605 = vmul.f32 %v604, 1.442695
    %v606 = vpow.pop %v605
    %v607 = vadd.f32 %v606, 1.0
    %v608 = vrcp.pop %v607
    %v609 = vmul.f32 1.0, %v608
    %v610 = vmul.f32 %v609, 2.0
    %v611 = vsub.f32 %v610, 1.0
    %v613 = vrot.slane %v517, 6
    %v615 = vmul.f32 %v609, %v613
    %617 = vrot.lane.b32.xlu0 %v611, 96
    %v618 = vpop.permute.xlu0 %617
    %v620 = vmul.f32 %v609, %v618
    %622 = vrot.lane.b32.xlu0 %v620, 16
    %v623 = vpop.permute.xlu0 %622
    %v625 = vadd.f32 %v615, %v623
    %v626 = vtanh.pop %v625
    %628 = vrot.lane.b32.xlu0 %v626, 32
    %v629 = vpop.permute.xlu0 %628
    %v631 = vmul.f32 %v609, %v629
    %v633 = vrot.slane %v631, 4
    %634 = vrot.lane.b32.xlu0 %v633, 80
    %v635 = vpop.permute.xlu0 %634
    %v636 = vsel %vm178, %v635, 0
    %638 = vmatprep.subr.mxu0 0.0
    %639 = vmatpush1.msra.mxu0 0.0
    %640 = vmatprep.subr.mxu0 0.0
    %641 = vmatpush1.msra.mxu0 0.0
    %642 = vmatprep.subr.mxu0 0.0
    %643 = vmatpush1.msra.mxu0 0.0
    %644 = vmatprep.subr.mxu0 0.0
    %645 = vmatpush1.msra.mxu0 0.0
    %646 = vmatprep.subr.mxu0 0.0
    %647 = vmatpush1.msra.mxu0 0.0
    %648 = vmatprep.subr.mxu0 0.0
    %649 = vmatpush1.msra.mxu0 0.0
    %650 = vmatprep.subr.mxu0 0.0
    %651 = vmatpush1.msra.mxu0 0.0
    %652 = vmatprep.subr.mxu0 0.0
    %653 = vmatpush1.msra.mxu0 0.0
    %654 = vmatprep.subr.mxu0 0.0
    %655 = vmatpush1.msra.mxu0 0.0
    %656 = vmatprep.subr.mxu0 0.0
    %657 = vmatpush1.msra.mxu0 0.0
    %658 = vmatprep.subr.mxu0 0.0
    %659 = vmatpush1.msra.mxu0 0.0
    %660 = vmatprep.subr.mxu0 0.0
    %661 = vmatpush1.msra.mxu0 0.0
    %662 = vmatprep.subr.mxu0 0.0
    %663 = vmatpush1.msra.mxu0 0.0
    %664 = vmatprep.subr.mxu0 0.0
    %665 = vmatpush1.msra.mxu0 0.0
    %666 = vmatprep.subr.mxu0 0.0
    %667 = vmatpush1.msra.mxu0 %v311
    %668 = vmatprep.subr.mxu0 0.0
    %669 = vmatpush1.msra.mxu0 %v310
    %670 = vmatprep.subr.mxu0 0.0
    %671 = vmatpush2.msra.mxu0 0.0
    %672 = vmatprep.subr.mxu0 0.0
    %673 = vmatpush2.msra.mxu0 0.0
    %674 = vmatprep.subr.mxu0 0.0
    %675 = vmatpush2.msra.mxu0 0.0
    %676 = vmatprep.subr.mxu0 0.0
    %677 = vmatpush2.msra.mxu0 0.0
    %678 = vmatprep.subr.mxu0 0.0
    %679 = vmatpush2.msra.mxu0 0.0
    %680 = vmatprep.subr.mxu0 0.0
    %681 = vmatpush2.msra.mxu0 0.0
    %682 = vmatprep.subr.mxu0 0.0
    %683 = vmatpush2.msra.mxu0 0.0
    %684 = vmatprep.subr.mxu0 0.0
    %685 = vmatpush2.msra.mxu0 0.0
    %686 = vmatprep.subr.mxu0 0.0
    %687 = vmatpush2.msra.mxu0 0.0
    %688 = vmatprep.subr.mxu0 0.0
    %689 = vmatpush2.msra.mxu0 0.0
    %690 = vmatprep.subr.mxu0 0.0
    %691 = vmatpush2.msra.mxu0 0.0
    %692 = vmatprep.subr.mxu0 0.0
    %693 = vmatpush2.msra.mxu0 0.0
    %694 = vmatprep.subr.mxu0 0.0
    %695 = vmatpush2.msra.mxu0 0.0
    %696 = vmatprep.subr.mxu0 0.0
    %697 = vmatpush2.msra.mxu0 0.0
    %698 = vmatprep.subr.mxu0 0.0
    %699 = vmatpush2.msra.mxu0 0.0
    %700 = vmatprep.subr.mxu0 0.0
    %701 = vmatpush2.msra.mxu0 0.0
    %702 = vmatprep.mubr.f32.mxu0 0.0
    %703 = vmatmul.mubr.f32.gmra.mxu0 %v636
    %v704 = vpop.f32.mrf.mxu0
    %v705 = vadd.f32 0.0, %v704
    %v706 = vpop.f32.mrf.mxu0
    %707 = vdwg.mxu0
    %v709 = vrot.slane %v705, 2
    %v711 = vadd.f32 %v302, %v709
    %v712 = vxor.u32 %v711, 2147483648
    %v713 = vmul.f32 %v712, 1.442695
    %v714 = vpow.pop %v713
    %v715 = vadd.f32 %v714, 1.0
    %v716 = vrcp.pop %v715
    %v717 = vmul.f32 1.0, %v716
    %v718 = vmul.f32 %v717, 2.0
    %v719 = vsub.f32 %v718, 1.0
    %v721 = vrot.slane %v625, 6
    %v723 = vmul.f32 %v717, %v721
    %725 = vrot.lane.b32.xlu0 %v719, 96
    %v726 = vpop.permute.xlu0 %725
    %v728 = vmul.f32 %v717, %v726
    %730 = vrot.lane.b32.xlu0 %v728, 16
    %v731 = vpop.permute.xlu0 %730
    %v733 = vadd.f32 %v723, %v731
    %v734 = vtanh.pop %v733
    %736 = vrot.lane.b32.xlu0 %v734, 32
    %v737 = vpop.permute.xlu0 %736
    %v739 = vmul.f32 %v717, %v737
    %v741 = vrot.slane %v739, 6
    %742 = vrot.lane.b32.xlu0 %v741, 80
    %v743 = vpop.permute.xlu0 %742
    %v744 = vsel %vm178, %v743, 0
    %746 = vmatprep.subr.mxu0 0.0
    %747 = vmatpush1.msra.mxu0 0.0
    %748 = vmatprep.subr.mxu0 0.0
    %749 = vmatpush1.msra.mxu0 0.0
    %750 = vmatprep.subr.mxu0 0.0
    %751 = vmatpush1.msra.mxu0 0.0
    %752 = vmatprep.subr.mxu0 0.0
    %753 = vmatpush1.msra.mxu0 0.0
    %754 = vmatprep.subr.mxu0 0.0
    %755 = vmatpush1.msra.mxu0 0.0
    %756 = vmatprep.subr.mxu0 0.0
    %757 = vmatpush1.msra.mxu0 0.0
    %758 = vmatprep.subr.mxu0 0.0
    %759 = vmatpush1.msra.mxu0 0.0
    %760 = vmatprep.subr.mxu0 0.0
    %761 = vmatpush1.msra.mxu0 0.0
    %762 = vmatprep.subr.mxu0 0.0
    %763 = vmatpush1.msra.mxu0 0.0
    %764 = vmatprep.subr.mxu0 0.0
    %765 = vmatpush1.msra.mxu0 0.0
    %766 = vmatprep.subr.mxu0 0.0
    %767 = vmatpush1.msra.mxu0 0.0
    %768 = vmatprep.subr.mxu0 0.0
    %769 = vmatpush1.msra.mxu0 0.0
    %770 = vmatprep.subr.mxu0 0.0
    %771 = vmatpush1.msra.mxu0 0.0
    %772 = vmatprep.subr.mxu0 0.0
    %773 = vmatpush1.msra.mxu0 0.0
    %774 = vmatprep.subr.mxu0 0.0
    %775 = vmatpush1.msra.mxu0 %v311
    %776 = vmatprep.subr.mxu0 0.0
    %777 = vmatpush1.msra.mxu0 %v310
    %778 = vmatprep.subr.mxu0 0.0
    %779 = vmatpush2.msra.mxu0 0.0
    %780 = vmatprep.subr.mxu0 0.0
    %781 = vmatpush2.msra.mxu0 0.0
    %782 = vmatprep.subr.mxu0 0.0
    %783 = vmatpush2.msra.mxu0 0.0
    %784 = vmatprep.subr.mxu0 0.0
    %785 = vmatpush2.msra.mxu0 0.0
    %786 = vmatprep.subr.mxu0 0.0
    %787 = vmatpush2.msra.mxu0 0.0
    %788 = vmatprep.subr.mxu0 0.0
    %789 = vmatpush2.msra.mxu0 0.0
    %790 = vmatprep.subr.mxu0 0.0
    %791 = vmatpush2.msra.mxu0 0.0
    %792 = vmatprep.subr.mxu0 0.0
    %793 = vmatpush2.msra.mxu0 0.0
    %794 = vmatprep.subr.mxu0 0.0
    %795 = vmatpush2.msra.mxu0 0.0
    %796 = vmatprep.subr.mxu0 0.0
    %797 = vmatpush2.msra.mxu0 0.0
    %798 = vmatprep.subr.mxu0 0.0
    %799 = vmatpush2.msra.mxu0 0.0
    %800 = vmatprep.subr.mxu0 0.0
    %801 = vmatpush2.msra.mxu0 0.0
    %802 = vmatprep.subr.mxu0 0.0
    %803 = vmatpush2.msra.mxu0 0.0
    %804 = vmatprep.subr.mxu0 0.0
    %805 = vmatpush2.msra.mxu0 0.0
    %806 = vmatprep.subr.mxu0 0.0
    %807 = vmatpush2.msra.mxu0 0.0
    %808 = vmatprep.subr.mxu0 0.0
    %809 = vmatpush2.msra.mxu0 0.0
    %810 = vmatprep.mubr.f32.mxu0 0.0
    %811 = vmatmul.mubr.f32.gmra.mxu0 %v744
    %v812 = vpop.f32.mrf.mxu0
    %v813 = vadd.f32 0.0, %v812
    %v814 = vpop.f32.mrf.mxu0
    %815 = vdwg.mxu0
    %v816 = vadd.f32 %v307, %v813
    %v817 = vxor.u32 %v816, 2147483648
    %v818 = vmul.f32 %v817, 1.442695
    %v819 = vpow.pop %v818
    %v820 = vadd.f32 %v819, 1.0
    %v821 = vrcp.pop %v820
    %v822 = vmul.f32 1.0, %v821
    %v823 = vmul.f32 %v822, 2.0
    %v824 = vsub.f32 %v823, 1.0
    %v826 = vrot.slane %v733, 6
    %v828 = vmul.f32 %v822, %v826
    %830 = vrot.lane.b32.xlu0 %v824, 96
    %v831 = vpop.permute.xlu0 %830
    %v833 = vmul.f32 %v822, %v831
    %835 = vrot.lane.b32.xlu0 %v833, 16
    %v836 = vpop.permute.xlu0 %835
    %v838 = vadd.f32 %v828, %v836
    %v839 = vtanh.pop %v838
    %841 = vrot.lane.b32.xlu0 %v839, 32
    %v842 = vpop.permute.xlu0 %841
    %v844 = vmul.f32 %v822, %v842
    %846 = vrot.lane.b32.xlu0 %v844, 80
    %v847 = vpop.permute.xlu0 %846
    %v848 = vsel %vm178, %v847, 0
    %850 = vmatprep.subr.mxu0 0.0
    %851 = vmatpush1.msra.mxu0 0.0
    %852 = vmatprep.subr.mxu0 0.0
    %853 = vmatpush1.msra.mxu0 0.0
    %854 = vmatprep.subr.mxu0 0.0
    %855 = vmatpush1.msra.mxu0 0.0
    %856 = vmatprep.subr.mxu0 0.0
    %857 = vmatpush1.msra.mxu0 0.0
    %858 = vmatprep.subr.mxu0 0.0
    %859 = vmatpush1.msra.mxu0 0.0
    %860 = vmatprep.subr.mxu0 0.0
    %861 = vmatpush1.msra.mxu0 0.0
    %862 = vmatprep.subr.mxu0 0.0
    %863 = vmatpush1.msra.mxu0 0.0
    %864 = vmatprep.subr.mxu0 0.0
    %865 = vmatpush1.msra.mxu0 0.0
    %866 = vmatprep.subr.mxu0 0.0
    %867 = vmatpush1.msra.mxu0 0.0
    %868 = vmatprep.subr.mxu0 0.0
    %869 = vmatpush1.msra.mxu0 0.0
    %870 = vmatprep.subr.mxu0 0.0
    %871 = vmatpush1.msra.mxu0 0.0
    %872 = vmatprep.subr.mxu0 0.0
    %873 = vmatpush1.msra.mxu0 0.0
    %874 = vmatprep.subr.mxu0 0.0
    %875 = vmatpush1.msra.mxu0 0.0
    %876 = vmatprep.subr.mxu0 0.0
    %877 = vmatpush1.msra.mxu0 0.0
    %878 = vmatprep.subr.mxu0 0.0
    %879 = vmatpush1.msra.mxu0 %v311
    %880 = vmatprep.subr.mxu0 0.0
    %881 = vmatpush1.msra.mxu0 %v310
    %882 = vmatprep.subr.mxu0 0.0
    %883 = vmatpush2.msra.mxu0 0.0
    %884 = vmatprep.subr.mxu0 0.0
    %885 = vmatpush2.msra.mxu0 0.0
    %886 = vmatprep.subr.mxu0 0.0
    %887 = vmatpush2.msra.mxu0 0.0
    %888 = vmatprep.subr.mxu0 0.0
    %889 = vmatpush2.msra.mxu0 0.0
    %890 = vmatprep.subr.mxu0 0.0
    %891 = vmatpush2.msra.mxu0 0.0
    %892 = vmatprep.subr.mxu0 0.0
    %893 = vmatpush2.msra.mxu0 0.0
    %894 = vmatprep.subr.mxu0 0.0
    %895 = vmatpush2.msra.mxu0 0.0
    %896 = vmatprep.subr.mxu0 0.0
    %897 = vmatpush2.msra.mxu0 0.0
    %898 = vmatprep.subr.mxu0 0.0
    %899 = vmatpush2.msra.mxu0 0.0
    %900 = vmatprep.subr.mxu0 0.0
    %901 = vmatpush2.msra.mxu0 0.0
    %902 = vmatprep.subr.mxu0 0.0
    %903 = vmatpush2.msra.mxu0 0.0
    %904 = vmatprep.subr.mxu0 0.0
    %905 = vmatpush2.msra.mxu0 0.0
    %906 = vmatprep.subr.mxu0 0.0
    %907 = vmatpush2.msra.mxu0 0.0
    %908 = vmatprep.subr.mxu0 0.0
    %909 = vmatpush2.msra.mxu0 0.0
    %910 = vmatprep.subr.mxu0 0.0
    %911 = vmatpush2.msra.mxu0 0.0
    %912 = vmatprep.subr.mxu0 0.0
    %913 = vmatpush2.msra.mxu0 0.0
    %914 = vmatprep.mubr.f32.mxu0 0.0
    %915 = vmatmul.mubr.f32.gmra.mxu0 %v848
    %v916 = vpop.f32.mrf.mxu0
    %v917 = vadd.f32 0.0, %v916
    %v918 = vpop.f32.mrf.mxu0
    %919 = vdwg.mxu0
    %v921 = vrot.slane %v917, 6
    %v923 = vadd.f32 %v307, %v921
    %v924 = vxor.u32 %v923, 2147483648
    %v925 = vmul.f32 %v924, 1.442695
    %v926 = vpow.pop %v925
    %v927 = vadd.f32 %v926, 1.0
    %v928 = vrcp.pop %v927
    %v929 = vmul.f32 1.0, %v928
    %v930 = vmul.f32 %v929, 2.0
    %v931 = vsub.f32 %v930, 1.0
    %v933 = vrot.slane %v838, 6
    %v935 = vmul.f32 %v929, %v933
    %937 = vrot.lane.b32.xlu0 %v931, 96
    %v938 = vpop.permute.xlu0 %937
    %v940 = vmul.f32 %v929, %v938
    %942 = vrot.lane.b32.xlu0 %v940, 16
    %v943 = vpop.permute.xlu0 %942
    %v945 = vadd.f32 %v935, %v943
    %v946 = vtanh.pop %v945
    %948 = vrot.lane.b32.xlu0 %v946, 32
    %v949 = vpop.permute.xlu0 %948
    %v951 = vmul.f32 %v929, %v949
    %v953 = vrot.slane %v951, 2
    %954 = vrot.lane.b32.xlu0 %v953, 80
    %v955 = vpop.permute.xlu0 %954
    %v956 = vsel %vm178, %v955, 0
    %958 = vmatprep.subr.mxu0 0.0
    %959 = vmatpush1.msra.mxu0 0.0
    %960 = vmatprep.subr.mxu0 0.0
    %961 = vmatpush1.msra.mxu0 0.0
    %962 = vmatprep.subr.mxu0 0.0
    %963 = vmatpush1.msra.mxu0 0.0
    %964 = vmatprep.subr.mxu0 0.0
    %965 = vmatpush1.msra.mxu0 0.0
    %966 = vmatprep.subr.mxu0 0.0
    %967 = vmatpush1.msra.mxu0 0.0
    %968 = vmatprep.subr.mxu0 0.0
    %969 = vmatpush1.msra.mxu0 0.0
    %970 = vmatprep.subr.mxu0 0.0
    %971 = vmatpush1.msra.mxu0 0.0
    %972 = vmatprep.subr.mxu0 0.0
    %973 = vmatpush1.msra.mxu0 0.0
    %974 = vmatprep.subr.mxu0 0.0
    %975 = vmatpush1.msra.mxu0 0.0
    %976 = vmatprep.subr.mxu0 0.0
    %977 = vmatpush1.msra.mxu0 0.0
    %978 = vmatprep.subr.mxu0 0.0
    %979 = vmatpush1.msra.mxu0 0.0
    %980 = vmatprep.subr.mxu0 0.0
    %981 = vmatpush1.msra.mxu0 0.0
    %982 = vmatprep.subr.mxu0 0.0
    %983 = vmatpush1.msra.mxu0 0.0
    %984 = vmatprep.subr.mxu0 0.0
    %985 = vmatpush1.msra.mxu0 0.0
    %986 = vmatprep.subr.mxu0 0.0
    %987 = vmatpush1.msra.mxu0 %v311
    %988 = vmatprep.subr.mxu0 0.0
    %989 = vmatpush1.msra.mxu0 %v310
    %990 = vmatprep.subr.mxu0 0.0
    %991 = vmatpush2.msra.mxu0 0.0
    %992 = vmatprep.subr.mxu0 0.0
    %993 = vmatpush2.msra.mxu0 0.0
    %994 = vmatprep.subr.mxu0 0.0
    %995 = vmatpush2.msra.mxu0 0.0
    %996 = vmatprep.subr.mxu0 0.0
    %997 = vmatpush2.msra.mxu0 0.0
    %998 = vmatprep.subr.mxu0 0.0
    %999 = vmatpush2.msra.mxu0 0.0
    %1000 = vmatprep.subr.mxu0 0.0
    %1001 = vmatpush2.msra.mxu0 0.0
    %1002 = vmatprep.subr.mxu0 0.0
    %1003 = vmatpush2.msra.mxu0 0.0
    %1004 = vmatprep.subr.mxu0 0.0
    %1005 = vmatpush2.msra.mxu0 0.0
    %1006 = vmatprep.subr.mxu0 0.0
    %1007 = vmatpush2.msra.mxu0 0.0
    %1008 = vmatprep.subr.mxu0 0.0
    %1009 = vmatpush2.msra.mxu0 0.0
    %1010 = vmatprep.subr.mxu0 0.0
    %1011 = vmatpush2.msra.mxu0 0.0
    %1012 = vmatprep.subr.mxu0 0.0
    %1013 = vmatpush2.msra.mxu0 0.0
    %1014 = vmatprep.subr.mxu0 0.0
    %1015 = vmatpush2.msra.mxu0 0.0
    %1016 = vmatprep.subr.mxu0 0.0
    %1017 = vmatpush2.msra.mxu0 0.0
    %1018 = vmatprep.subr.mxu0 0.0
    %1019 = vmatpush2.msra.mxu0 0.0
    %1020 = vmatprep.subr.mxu0 0.0
    %1021 = vmatpush2.msra.mxu0 0.0
    %1022 = vmatprep.mubr.f32.mxu0 0.0
    %1023 = vmatmul.mubr.f32.gmra.mxu0 %v956
    %v1024 = vpop.f32.mrf.mxu0
    %v1025 = vadd.f32 0.0, %v1024
    %v1026 = vpop.f32.mrf.mxu0
    %1027 = vdwg.mxu0
    %v1029 = vrot.slane %v1025, 4
    %v1031 = vadd.f32 %v307, %v1029
    %v1032 = vxor.u32 %v1031, 2147483648
    %v1033 = vmul.f32 %v1032, 1.442695
    %v1034 = vpow.pop %v1033
    %v1035 = vadd.f32 %v1034, 1.0
    %v1036 = vrcp.pop %v1035
    %v1037 = vmul.f32 1.0, %v1036
    %v1038 = vmul.f32 %v1037, 2.0
    %v1039 = vsub.f32 %v1038, 1.0
    %v1041 = vrot.slane %v945, 6
    %v1043 = vmul.f32 %v1037, %v1041
    %1045 = vrot.lane.b32.xlu0 %v1039, 96
    %v1046 = vpop.permute.xlu0 %1045
    %v1048 = vmul.f32 %v1037, %v1046
    %1050 = vrot.lane.b32.xlu0 %v1048, 16
    %v1051 = vpop.permute.xlu0 %1050
    %v1053 = vadd.f32 %v1043, %v1051
    %v1054 = vtanh.pop %v1053
    %1056 = vrot.lane.b32.xlu0 %v1054, 32
    %v1057 = vpop.permute.xlu0 %1056
    %v1059 = vmul.f32 %v1037, %v1057
    %v1061 = vrot.slane %v1059, 4
    %1062 = vrot.lane.b32.xlu0 %v1061, 80
    %v1063 = vpop.permute.xlu0 %1062
    %v1064 = vsel %vm178, %v1063, 0
    %1066 = vmatprep.subr.mxu0 0.0
    %1067 = vmatpush1.msra.mxu0 0.0
    %1068 = vmatprep.subr.mxu0 0.0
    %1069 = vmatpush1.msra.mxu0 0.0
    %1070 = vmatprep.subr.mxu0 0.0
    %1071 = vmatpush1.msra.mxu0 0.0
    %1072 = vmatprep.subr.mxu0 0.0
    %1073 = vmatpush1.msra.mxu0 0.0
    %1074 = vmatprep.subr.mxu0 0.0
    %1075 = vmatpush1.msra.mxu0 0.0
    %1076 = vmatprep.subr.mxu0 0.0
    %1077 = vmatpush1.msra.mxu0 0.0
    %1078 = vmatprep.subr.mxu0 0.0
    %1079 = vmatpush1.msra.mxu0 0.0
    %1080 = vmatprep.subr.mxu0 0.0
    %1081 = vmatpush1.msra.mxu0 0.0
    %1082 = vmatprep.subr.mxu0 0.0
    %1083 = vmatpush1.msra.mxu0 0.0
    %1084 = vmatprep.subr.mxu0 0.0
    %1085 = vmatpush1.msra.mxu0 0.0
    %1086 = vmatprep.subr.mxu0 0.0
    %1087 = vmatpush1.msra.mxu0 0.0
    %1088 = vmatprep.subr.mxu0 0.0
    %1089 = vmatpush1.msra.mxu0 0.0
    %1090 = vmatprep.subr.mxu0 0.0
    %1091 = vmatpush1.msra.mxu0 0.0
    %1092 = vmatprep.subr.mxu0 0.0
    %1093 = vmatpush1.msra.mxu0 0.0
    %1094 = vmatprep.subr.mxu0 0.0
    %1095 = vmatpush1.msra.mxu0 %v311
    %1096 = vmatprep.subr.mxu0 0.0
    %1097 = vmatpush1.msra.mxu0 %v310
    %1098 = vmatprep.subr.mxu0 0.0
    %1099 = vmatpush2.msra.mxu0 0.0
    %1100 = vmatprep.subr.mxu0 0.0
    %1101 = vmatpush2.msra.mxu0 0.0
    %1102 = vmatprep.subr.mxu0 0.0
    %1103 = vmatpush2.msra.mxu0 0.0
    %1104 = vmatprep.subr.mxu0 0.0
    %1105 = vmatpush2.msra.mxu0 0.0
    %1106 = vmatprep.subr.mxu0 0.0
    %1107 = vmatpush2.msra.mxu0 0.0
    %1108 = vmatprep.subr.mxu0 0.0
    %1109 = vmatpush2.msra.mxu0 0.0
    %1110 = vmatprep.subr.mxu0 0.0
    %1111 = vmatpush2.msra.mxu0 0.0
    %1112 = vmatprep.subr.mxu0 0.0
    %1113 = vmatpush2.msra.mxu0 0.0
    %1114 = vmatprep.subr.mxu0 0.0
    %1115 = vmatpush2.msra.mxu0 0.0
    %1116 = vmatprep.subr.mxu0 0.0
    %1117 = vmatpush2.msra.mxu0 0.0
    %1118 = vmatprep.subr.mxu0 0.0
    %1119 = vmatpush2.msra.mxu0 0.0
    %1120 = vmatprep.subr.mxu0 0.0
    %1121 = vmatpush2.msra.mxu0 0.0
    %1122 = vmatprep.subr.mxu0 0.0
    %1123 = vmatpush2.msra.mxu0 0.0
    %1124 = vmatprep.subr.mxu0 0.0
    %1125 = vmatpush2.msra.mxu0 0.0
    %1126 = vmatprep.subr.mxu0 0.0
    %1127 = vmatpush2.msra.mxu0 0.0
    %1128 = vmatprep.subr.mxu0 0.0
    %1129 = vmatpush2.msra.mxu0 0.0
    %1130 = vmatprep.mubr.f32.mxu0 0.0
    %1131 = vmatmul.mubr.f32.gmra.mxu0 %v1064
    %v1132 = vpop.f32.mrf.mxu0
    %v1133 = vadd.f32 0.0, %v1132
    %v1134 = vpop.f32.mrf.mxu0
    %1135 = vdwg.mxu0
    %v1137 = vrot.slane %v1133, 2
    %v1139 = vadd.f32 %v307, %v1137
    %v1140 = vxor.u32 %v1139, 2147483648
    %v1141 = vmul.f32 %v1140, 1.442695
    %v1142 = vpow.pop %v1141
    %v1143 = vadd.f32 %v1142, 1.0
    %v1144 = vrcp.pop %v1143
    %v1145 = vmul.f32 1.0, %v1144
    %v1146 = vmul.f32 %v1145, 2.0
    %v1147 = vsub.f32 %v1146, 1.0
    %v1149 = vrot.slane %v1053, 6
    %v1151 = vmul.f32 %v1145, %v1149
    %1153 = vrot.lane.b32.xlu0 %v1147, 96
    %v1154 = vpop.permute.xlu0 %1153
    %v1156 = vmul.f32 %v1145, %v1154
    %1158 = vrot.lane.b32.xlu0 %v1156, 16
    %v1159 = vpop.permute.xlu0 %1158
    %v1161 = vadd.f32 %v1151, %v1159
    %v1162 = vtanh.pop %v1161
    %1164 = vrot.lane.b32.xlu0 %v1162, 32
    %v1165 = vpop.permute.xlu0 %1164
    %v1167 = vmul.f32 %v1145, %v1165
    %v1168 = vsel %vm169, %v416, %v523
    %v1169 = vsel %vm171, %v1168, %v631
    %v1170 = vsel %vm173, %v1169, %v739
    %v1171 = vsel %vm169, %v844, %v951
    %v1172 = vsel %vm171, %v1171, %v1059
    %v1173 = vsel %vm173, %v1172, %v1167
    %v1174 = vld [vmem:[#allocation12] sm:$0xff]
    %v1175 = vld [vmem:[#allocation12 + $0x8] sm:$0xff]
    %v1176 = vld [vmem:[%s8] sm:$0x1]
    %v1178 = vlaneseq
    %v1179 = vshrl.u32 %v1178, 7
    %v1180 = vsub.s32 0, %v1179
    %v1181 = vrot.slane %v1176, %v1180
    %1185 = vrot.lane.b32.xlu0 %v1170, 80
    %v1186 = vpop.permute.xlu0 %1185
    %1187 = vrot.lane.b32.xlu0 %v1173, 80
    %v1188 = vpop.permute.xlu0 %1187
    %v1189 = vsel %vm178, %v1186, 0
    %v1191 = vsel %vm178, %v1188, 0
    %1193 = vmatprep.subr.mxu0 0.0
    %1194 = vmatpush1.msra.mxu0 0.0
    %1195 = vmatprep.subr.mxu0 0.0
    %1196 = vmatpush1.msra.mxu0 0.0
    %1197 = vmatprep.subr.mxu0 0.0
    %1198 = vmatpush1.msra.mxu0 0.0
    %1199 = vmatprep.subr.mxu0 0.0
    %1200 = vmatpush1.msra.mxu0 0.0
    %1201 = vmatprep.subr.mxu0 0.0
    %1202 = vmatpush1.msra.mxu0 0.0
    %1203 = vmatprep.subr.mxu0 0.0
    %1204 = vmatpush1.msra.mxu0 0.0
    %1205 = vmatprep.subr.mxu0 0.0
    %1206 = vmatpush1.msra.mxu0 0.0
    %1207 = vmatprep.subr.mxu0 0.0
    %1208 = vmatpush1.msra.mxu0 0.0
    %1209 = vmatprep.subr.mxu0 0.0
    %1210 = vmatpush1.msra.mxu0 0.0
    %1211 = vmatprep.subr.mxu0 0.0
    %1212 = vmatpush1.msra.mxu0 0.0
    %1213 = vmatprep.subr.mxu0 0.0
    %1214 = vmatpush1.msra.mxu0 0.0
    %1215 = vmatprep.subr.mxu0 0.0
    %1216 = vmatpush1.msra.mxu0 0.0
    %1217 = vmatprep.subr.mxu0 0.0
    %1218 = vmatpush1.msra.mxu0 0.0
    %1219 = vmatprep.subr.mxu0 0.0
    %1220 = vmatpush1.msra.mxu0 0.0
    %1221 = vmatprep.subr.mxu0 0.0
    %1222 = vmatpush1.msra.mxu0 %v1175
    %1223 = vmatprep.subr.mxu0 0.0
    %1224 = vmatpush1.msra.mxu0 %v1174
    %1225 = vmatprep.subr.mxu0 0.0
    %1226 = vmatpush2.msra.mxu0 0.0
    %1227 = vmatprep.subr.mxu0 0.0
    %1228 = vmatpush2.msra.mxu0 0.0
    %1229 = vmatprep.subr.mxu0 0.0
    %1230 = vmatpush2.msra.mxu0 0.0
    %1231 = vmatprep.subr.mxu0 0.0
    %1232 = vmatpush2.msra.mxu0 0.0
    %1233 = vmatprep.subr.mxu0 0.0
    %1234 = vmatpush2.msra.mxu0 0.0
    %1235 = vmatprep.subr.mxu0 0.0
    %1236 = vmatpush2.msra.mxu0 0.0
    %1237 = vmatprep.subr.mxu0 0.0
    %1238 = vmatpush2.msra.mxu0 0.0
    %1239 = vmatprep.subr.mxu0 0.0
    %1240 = vmatpush2.msra.mxu0 0.0
    %1241 = vmatprep.subr.mxu0 0.0
    %1242 = vmatpush2.msra.mxu0 0.0
    %1243 = vmatprep.subr.mxu0 0.0
    %1244 = vmatpush2.msra.mxu0 0.0
    %1245 = vmatprep.subr.mxu0 0.0
    %1246 = vmatpush2.msra.mxu0 0.0
    %1247 = vmatprep.subr.mxu0 0.0
    %1248 = vmatpush2.msra.mxu0 0.0
    %1249 = vmatprep.subr.mxu0 0.0
    %1250 = vmatpush2.msra.mxu0 0.0
    %1251 = vmatprep.subr.mxu0 0.0
    %1252 = vmatpush2.msra.mxu0 0.0
    %1253 = vmatprep.subr.mxu0 0.0
    %1254 = vmatpush2.msra.mxu0 0.0
    %1255 = vmatprep.subr.mxu0 0.0
    %1256 = vmatpush2.msra.mxu0 0.0
    %1257 = vmatprep.mubr.f32.mxu0 0.0
    %1258 = vmatmul.mubr.f32.gmra.mxu0 %v1189
    %v1259 = vpop.f32.mrf.mxu0
    %v1260 = vadd.f32 %v1181, %v1259
    %v1261 = vpop.f32.mrf.mxu0
    %1262 = vmatprep.mubr.f32.mxu0 0.0
    %1263 = vmatmul.mubr.f32.gmra.mxu0 %v1191
    %v1264 = vpop.f32.mrf.mxu0
    %v1265 = vadd.f32 %v1181, %v1264
    %v1266 = vpop.f32.mrf.mxu0
    %1267 = vdwg.mxu0
    %v1268 = vld [vmem:[#allocation14] sm:$0xff]
    %v1269 = vld [vmem:[#allocation14 + $0x8] sm:$0xff]
    %s1270 = scalar_lea.vmem [#allocation6], 2
    %v1271 = vld [vmem:[%s1270] sm:$0x3]
    %s1272 = scalar_lea.vmem [#allocation8], 2
    %v1273 = vld [vmem:[%s1272] sm:$0x3]
    %v1275 = vsel %vm178, %v1271, 0
    %1277 = vmatprep.subr.mxu0 0.0
    %1278 = vmatpush1.msra.mxu0 0.0
    %1279 = vmatprep.subr.mxu0 0.0
    %1280 = vmatpush1.msra.mxu0 0.0
    %1281 = vmatprep.subr.mxu0 0.0
    %1282 = vmatpush1.msra.mxu0 0.0
    %1283 = vmatprep.subr.mxu0 0.0
    %1284 = vmatpush1.msra.mxu0 0.0
    %1285 = vmatprep.subr.mxu0 0.0
    %1286 = vmatpush1.msra.mxu0 0.0
    %1287 = vmatprep.subr.mxu0 0.0
    %1288 = vmatpush1.msra.mxu0 0.0
    %1289 = vmatprep.subr.mxu0 0.0
    %1290 = vmatpush1.msra.mxu0 0.0
    %1291 = vmatprep.subr.mxu0 0.0
    %1292 = vmatpush1.msra.mxu0 0.0
    %1293 = vmatprep.subr.mxu0 0.0
    %1294 = vmatpush1.msra.mxu0 0.0
    %1295 = vmatprep.subr.mxu0 0.0
    %1296 = vmatpush1.msra.mxu0 0.0
    %1297 = vmatprep.subr.mxu0 0.0
    %1298 = vmatpush1.msra.mxu0 0.0
    %1299 = vmatprep.subr.mxu0 0.0
    %1300 = vmatpush1.msra.mxu0 0.0
    %1301 = vmatprep.subr.mxu0 0.0
    %1302 = vmatpush1.msra.mxu0 0.0
    %1303 = vmatprep.subr.mxu0 0.0
    %1304 = vmatpush1.msra.mxu0 0.0
    %1305 = vmatprep.subr.mxu0 0.0
    %1306 = vmatpush1.msra.mxu0 %v1269
    %1307 = vmatprep.subr.mxu0 0.0
    %1308 = vmatpush1.msra.mxu0 %v1268
    %1309 = vmatprep.subr.mxu0 0.0
    %1310 = vmatpush2.msra.mxu0 0.0
    %1311 = vmatprep.subr.mxu0 0.0
    %1312 = vmatpush2.msra.mxu0 0.0
    %1313 = vmatprep.subr.mxu0 0.0
    %1314 = vmatpush2.msra.mxu0 0.0
    %1315 = vmatprep.subr.mxu0 0.0
    %1316 = vmatpush2.msra.mxu0 0.0
    %1317 = vmatprep.subr.mxu0 0.0
    %1318 = vmatpush2.msra.mxu0 0.0
    %1319 = vmatprep.subr.mxu0 0.0
    %1320 = vmatpush2.msra.mxu0 0.0
    %1321 = vmatprep.subr.mxu0 0.0
    %1322 = vmatpush2.msra.mxu0 0.0
    %1323 = vmatprep.subr.mxu0 0.0
    %1324 = vmatpush2.msra.mxu0 0.0
    %1325 = vmatprep.subr.mxu0 0.0
    %1326 = vmatpush2.msra.mxu0 0.0
    %1327 = vmatprep.subr.mxu0 0.0
    %1328 = vmatpush2.msra.mxu0 0.0
    %1329 = vmatprep.subr.mxu0 0.0
    %1330 = vmatpush2.msra.mxu0 0.0
    %1331 = vmatprep.subr.mxu0 0.0
    %1332 = vmatpush2.msra.mxu0 0.0
    %1333 = vmatprep.subr.mxu0 0.0
    %1334 = vmatpush2.msra.mxu0 0.0
    %1335 = vmatprep.subr.mxu0 0.0
    %1336 = vmatpush2.msra.mxu0 0.0
    %1337 = vmatprep.subr.mxu0 0.0
    %1338 = vmatpush2.msra.mxu0 0.0
    %1339 = vmatprep.subr.mxu0 0.0
    %1340 = vmatpush2.msra.mxu0 0.0
    %1341 = vmatprep.mubr.f32.mxu0 0.0
    %1342 = vmatmul.mubr.f32.gmra.mxu0 %v1275
    %v1343 = vpop.f32.mrf.mxu0
    %v1344 = vadd.f32 0.0, %v1343
    %v1345 = vpop.f32.mrf.mxu0
    %1346 = vdwg.mxu0
    %v1347 = vadd.f32 %v1260, %v1344
    %v1348 = vxor.u32 %v1347, 2147483648
    %v1349 = vmul.f32 %v1348, 1.442695
    %v1350 = vpow.pop %v1349
    %v1351 = vadd.f32 %v1350, 1.0
    %v1352 = vrcp.pop %v1351
    %v1353 = vmul.f32 1.0, %v1352
    %v1354 = vmul.f32 %v1353, 2.0
    %v1355 = vsub.f32 %v1354, 1.0
    %1357 = vrot.lane.b32.xlu0 %v1273, 16
    %v1358 = vpop.permute.xlu0 %1357
    %v1360 = vmul.f32 %v1353, %v1358
    %1362 = vrot.lane.b32.xlu0 %v1355, 96
    %v1363 = vpop.permute.xlu0 %1362
    %v1365 = vmul.f32 %v1353, %v1363
    %1367 = vrot.lane.b32.xlu0 %v1365, 16
    %v1368 = vpop.permute.xlu0 %1367
    %v1370 = vadd.f32 %v1360, %v1368
    %v1371 = vtanh.pop %v1370
    %1373 = vrot.lane.b32.xlu0 %v1371, 32
    %v1374 = vpop.permute.xlu0 %1373
    %v1376 = vmul.f32 %v1353, %v1374
    %1378 = vrot.lane.b32.xlu0 %v1376, 80
    %v1379 = vpop.permute.xlu0 %1378
    %v1380 = vsel %vm178, %v1379, 0
    %1382 = vmatprep.subr.mxu0 0.0
    %1383 = vmatpush1.msra.mxu0 0.0
    %1384 = vmatprep.subr.mxu0 0.0
    %1385 = vmatpush1.msra.mxu0 0.0
    %1386 = vmatprep.subr.mxu0 0.0
    %1387 = vmatpush1.msra.mxu0 0.0
    %1388 = vmatprep.subr.mxu0 0.0
    %1389 = vmatpush1.msra.mxu0 0.0
    %1390 = vmatprep.subr.mxu0 0.0
    %1391 = vmatpush1.msra.mxu0 0.0
    %1392 = vmatprep.subr.mxu0 0.0
    %1393 = vmatpush1.msra.mxu0 0.0
    %1394 = vmatprep.subr.mxu0 0.0
    %1395 = vmatpush1.msra.mxu0 0.0
    %1396 = vmatprep.subr.mxu0 0.0
    %1397 = vmatpush1.msra.mxu0 0.0
    %1398 = vmatprep.subr.mxu0 0.0
    %1399 = vmatpush1.msra.mxu0 0.0
    %1400 = vmatprep.subr.mxu0 0.0
    %1401 = vmatpush1.msra.mxu0 0.0
    %1402 = vmatprep.subr.mxu0 0.0
    %1403 = vmatpush1.msra.mxu0 0.0
    %1404 = vmatprep.subr.mxu0 0.0
    %1405 = vmatpush1.msra.mxu0 0.0
    %1406 = vmatprep.subr.mxu0 0.0
    %1407 = vmatpush1.msra.mxu0 0.0
    %1408 = vmatprep.subr.mxu0 0.0
    %1409 = vmatpush1.msra.mxu0 0.0
    %1410 = vmatprep.subr.mxu0 0.0
    %1411 = vmatpush1.msra.mxu0 %v1269
    %1412 = vmatprep.subr.mxu0 0.0
    %1413 = vmatpush1.msra.mxu0 %v1268
    %1414 = vmatprep.subr.mxu0 0.0
    %1415 = vmatpush2.msra.mxu0 0.0
    %1416 = vmatprep.subr.mxu0 0.0
    %1417 = vmatpush2.msra.mxu0 0.0
    %1418 = vmatprep.subr.mxu0 0.0
    %1419 = vmatpush2.msra.mxu0 0.0
    %1420 = vmatprep.subr.mxu0 0.0
    %1421 = vmatpush2.msra.mxu0 0.0
    %1422 = vmatprep.subr.mxu0 0.0
    %1423 = vmatpush2.msra.mxu0 0.0
    %1424 = vmatprep.subr.mxu0 0.0
    %1425 = vmatpush2.msra.mxu0 0.0
    %1426 = vmatprep.subr.mxu0 0.0
    %1427 = vmatpush2.msra.mxu0 0.0
    %1428 = vmatprep.subr.mxu0 0.0
    %1429 = vmatpush2.msra.mxu0 0.0
    %1430 = vmatprep.subr.mxu0 0.0
    %1431 = vmatpush2.msra.mxu0 0.0
    %1432 = vmatprep.subr.mxu0 0.0
    %1433 = vmatpush2.msra.mxu0 0.0
    %1434 = vmatprep.subr.mxu0 0.0
    %1435 = vmatpush2.msra.mxu0 0.0
    %1436 = vmatprep.subr.mxu0 0.0
    %1437 = vmatpush2.msra.mxu0 0.0
    %1438 = vmatprep.subr.mxu0 0.0
    %1439 = vmatpush2.msra.mxu0 0.0
    %1440 = vmatprep.subr.mxu0 0.0
    %1441 = vmatpush2.msra.mxu0 0.0
    %1442 = vmatprep.subr.mxu0 0.0
    %1443 = vmatpush2.msra.mxu0 0.0
    %1444 = vmatprep.subr.mxu0 0.0
    %1445 = vmatpush2.msra.mxu0 0.0
    %1446 = vmatprep.mubr.f32.mxu0 0.0
    %1447 = vmatmul.mubr.f32.gmra.mxu0 %v1380
    %v1448 = vpop.f32.mrf.mxu0
    %v1449 = vadd.f32 0.0, %v1448
    %v1450 = vpop.f32.mrf.mxu0
    %1451 = vdwg.mxu0
    %v1453 = vrot.slane %v1449, 6
    %v1455 = vadd.f32 %v1260, %v1453
    %v1456 = vxor.u32 %v1455, 2147483648
    %v1457 = vmul.f32 %v1456, 1.442695
    %v1458 = vpow.pop %v1457
    %v1459 = vadd.f32 %v1458, 1.0
    %v1460 = vrcp.pop %v1459
    %v1461 = vmul.f32 1.0, %v1460
    %v1462 = vmul.f32 %v1461, 2.0
    %v1463 = vsub.f32 %v1462, 1.0
    %v1465 = vrot.slane %v1370, 6
    %v1467 = vmul.f32 %v1461, %v1465
    %1469 = vrot.lane.b32.xlu0 %v1463, 96
    %v1470 = vpop.permute.xlu0 %1469
    %v1472 = vmul.f32 %v1461, %v1470
    %1474 = vrot.lane.b32.xlu0 %v1472, 16
    %v1475 = vpop.permute.xlu0 %1474
    %v1477 = vadd.f32 %v1467, %v1475
    %v1478 = vtanh.pop %v1477
    %1480 = vrot.lane.b32.xlu0 %v1478, 32
    %v1481 = vpop.permute.xlu0 %1480
    %v1483 = vmul.f32 %v1461, %v1481
    %v1485 = vrot.slane %v1483, 2
    %1486 = vrot.lane.b32.xlu0 %v1485, 80
    %v1487 = vpop.permute.xlu0 %1486
    %v1488 = vsel %vm178, %v1487, 0
    %1490 = vmatprep.subr.mxu0 0.0
    %1491 = vmatpush1.msra.mxu0 0.0
    %1492 = vmatprep.subr.mxu0 0.0
    %1493 = vmatpush1.msra.mxu0 0.0
    %1494 = vmatprep.subr.mxu0 0.0
    %1495 = vmatpush1.msra.mxu0 0.0
    %1496 = vmatprep.subr.mxu0 0.0
    %1497 = vmatpush1.msra.mxu0 0.0
    %1498 = vmatprep.subr.mxu0 0.0
    %1499 = vmatpush1.msra.mxu0 0.0
    %1500 = vmatprep.subr.mxu0 0.0
    %1501 = vmatpush1.msra.mxu0 0.0
    %1502 = vmatprep.subr.mxu0 0.0
    %1503 = vmatpush1.msra.mxu0 0.0
    %1504 = vmatprep.subr.mxu0 0.0
    %1505 = vmatpush1.msra.mxu0 0.0
    %1506 = vmatprep.subr.mxu0 0.0
    %1507 = vmatpush1.msra.mxu0 0.0
    %1508 = vmatprep.subr.mxu0 0.0
    %1509 = vmatpush1.msra.mxu0 0.0
    %1510 = vmatprep.subr.mxu0 0.0
    %1511 = vmatpush1.msra.mxu0 0.0
    %1512 = vmatprep.subr.mxu0 0.0
    %1513 = vmatpush1.msra.mxu0 0.0
    %1514 = vmatprep.subr.mxu0 0.0
    %1515 = vmatpush1.msra.mxu0 0.0
    %1516 = vmatprep.subr.mxu0 0.0
    %1517 = vmatpush1.msra.mxu0 0.0
    %1518 = vmatprep.subr.mxu0 0.0
    %1519 = vmatpush1.msra.mxu0 %v1269
    %1520 = vmatprep.subr.mxu0 0.0
    %1521 = vmatpush1.msra.mxu0 %v1268
    %1522 = vmatprep.subr.mxu0 0.0
    %1523 = vmatpush2.msra.mxu0 0.0
    %1524 = vmatprep.subr.mxu0 0.0
    %1525 = vmatpush2.msra.mxu0 0.0
    %1526 = vmatprep.subr.mxu0 0.0
    %1527 = vmatpush2.msra.mxu0 0.0
    %1528 = vmatprep.subr.mxu0 0.0
    %1529 = vmatpush2.msra.mxu0 0.0
    %1530 = vmatprep.subr.mxu0 0.0
    %1531 = vmatpush2.msra.mxu0 0.0
    %1532 = vmatprep.subr.mxu0 0.0
    %1533 = vmatpush2.msra.mxu0 0.0
    %1534 = vmatprep.subr.mxu0 0.0
    %1535 = vmatpush2.msra.mxu0 0.0
    %1536 = vmatprep.subr.mxu0 0.0
    %1537 = vmatpush2.msra.mxu0 0.0
    %1538 = vmatprep.subr.mxu0 0.0
    %1539 = vmatpush2.msra.mxu0 0.0
    %1540 = vmatprep.subr.mxu0 0.0
    %1541 = vmatpush2.msra.mxu0 0.0
    %1542 = vmatprep.subr.mxu0 0.0
    %1543 = vmatpush2.msra.mxu0 0.0
    %1544 = vmatprep.subr.mxu0 0.0
    %1545 = vmatpush2.msra.mxu0 0.0
    %1546 = vmatprep.subr.mxu0 0.0
    %1547 = vmatpush2.msra.mxu0 0.0
    %1548 = vmatprep.subr.mxu0 0.0
    %1549 = vmatpush2.msra.mxu0 0.0
    %1550 = vmatprep.subr.mxu0 0.0
    %1551 = vmatpush2.msra.mxu0 0.0
    %1552 = vmatprep.subr.mxu0 0.0
    %1553 = vmatpush2.msra.mxu0 0.0
    %1554 = vmatprep.mubr.f32.mxu0 0.0
    %1555 = vmatmul.mubr.f32.gmra.mxu0 %v1488
    %v1556 = vpop.f32.mrf.mxu0
    %v1557 = vadd.f32 0.0, %v1556
    %v1558 = vpop.f32.mrf.mxu0
    %1559 = vdwg.mxu0
    %v1561 = vrot.slane %v1557, 4
    %v1563 = vadd.f32 %v1260, %v1561
    %v1564 = vxor.u32 %v1563, 2147483648
    %v1565 = vmul.f32 %v1564, 1.442695
    %v1566 = vpow.pop %v1565
    %v1567 = vadd.f32 %v1566, 1.0
    %v1568 = vrcp.pop %v1567
    %v1569 = vmul.f32 1.0, %v1568
    %v1570 = vmul.f32 %v1569, 2.0
    %v1571 = vsub.f32 %v1570, 1.0
    %v1573 = vrot.slane %v1477, 6
    %v1575 = vmul.f32 %v1569, %v1573
    %1577 = vrot.lane.b32.xlu0 %v1571, 96
    %v1578 = vpop.permute.xlu0 %1577
    %v1580 = vmul.f32 %v1569, %v1578
    %1582 = vrot.lane.b32.xlu0 %v1580, 16
    %v1583 = vpop.permute.xlu0 %1582
    %v1585 = vadd.f32 %v1575, %v1583
    %v1586 = vtanh.pop %v1585
    %1588 = vrot.lane.b32.xlu0 %v1586, 32
    %v1589 = vpop.permute.xlu0 %1588
    %v1591 = vmul.f32 %v1569, %v1589
    %v1593 = vrot.slane %v1591, 4
    %1594 = vrot.lane.b32.xlu0 %v1593, 80
    %v1595 = vpop.permute.xlu0 %1594
    %v1596 = vsel %vm178, %v1595, 0
    %1598 = vmatprep.subr.mxu0 0.0
    %1599 = vmatpush1.msra.mxu0 0.0
    %1600 = vmatprep.subr.mxu0 0.0
    %1601 = vmatpush1.msra.mxu0 0.0
    %1602 = vmatprep.subr.mxu0 0.0
    %1603 = vmatpush1.msra.mxu0 0.0
    %1604 = vmatprep.subr.mxu0 0.0
    %1605 = vmatpush1.msra.mxu0 0.0
    %1606 = vmatprep.subr.mxu0 0.0
    %1607 = vmatpush1.msra.mxu0 0.0
    %1608 = vmatprep.subr.mxu0 0.0
    %1609 = vmatpush1.msra.mxu0 0.0
    %1610 = vmatprep.subr.mxu0 0.0
    %1611 = vmatpush1.msra.mxu0 0.0
    %1612 = vmatprep.subr.mxu0 0.0
    %1613 = vmatpush1.msra.mxu0 0.0
    %1614 = vmatprep.subr.mxu0 0.0
    %1615 = vmatpush1.msra.mxu0 0.0
    %1616 = vmatprep.subr.mxu0 0.0
    %1617 = vmatpush1.msra.mxu0 0.0
    %1618 = vmatprep.subr.mxu0 0.0
    %1619 = vmatpush1.msra.mxu0 0.0
    %1620 = vmatprep.subr.mxu0 0.0
    %1621 = vmatpush1.msra.mxu0 0.0
    %1622 = vmatprep.subr.mxu0 0.0
    %1623 = vmatpush1.msra.mxu0 0.0
    %1624 = vmatprep.subr.mxu0 0.0
    %1625 = vmatpush1.msra.mxu0 0.0
    %1626 = vmatprep.subr.mxu0 0.0
    %1627 = vmatpush1.msra.mxu0 %v1269
    %1628 = vmatprep.subr.mxu0 0.0
    %1629 = vmatpush1.msra.mxu0 %v1268
    %1630 = vmatprep.subr.mxu0 0.0
    %1631 = vmatpush2.msra.mxu0 0.0
    %1632 = vmatprep.subr.mxu0 0.0
    %1633 = vmatpush2.msra.mxu0 0.0
    %1634 = vmatprep.subr.mxu0 0.0
    %1635 = vmatpush2.msra.mxu0 0.0
    %1636 = vmatprep.subr.mxu0 0.0
    %1637 = vmatpush2.msra.mxu0 0.0
    %1638 = vmatprep.subr.mxu0 0.0
    %1639 = vmatpush2.msra.mxu0 0.0
    %1640 = vmatprep.subr.mxu0 0.0
    %1641 = vmatpush2.msra.mxu0 0.0
    %1642 = vmatprep.subr.mxu0 0.0
    %1643 = vmatpush2.msra.mxu0 0.0
    %1644 = vmatprep.subr.mxu0 0.0
    %1645 = vmatpush2.msra.mxu0 0.0
    %1646 = vmatprep.subr.mxu0 0.0
    %1647 = vmatpush2.msra.mxu0 0.0
    %1648 = vmatprep.subr.mxu0 0.0
    %1649 = vmatpush2.msra.mxu0 0.0
    %1650 = vmatprep.subr.mxu0 0.0
    %1651 = vmatpush2.msra.mxu0 0.0
    %1652 = vmatprep.subr.mxu0 0.0
    %1653 = vmatpush2.msra.mxu0 0.0
    %1654 = vmatprep.subr.mxu0 0.0
    %1655 = vmatpush2.msra.mxu0 0.0
    %1656 = vmatprep.subr.mxu0 0.0
    %1657 = vmatpush2.msra.mxu0 0.0
    %1658 = vmatprep.subr.mxu0 0.0
    %1659 = vmatpush2.msra.mxu0 0.0
    %1660 = vmatprep.subr.mxu0 0.0
    %1661 = vmatpush2.msra.mxu0 0.0
    %1662 = vmatprep.mubr.f32.mxu0 0.0
    %1663 = vmatmul.mubr.f32.gmra.mxu0 %v1596
    %v1664 = vpop.f32.mrf.mxu0
    %v1665 = vadd.f32 0.0, %v1664
    %v1666 = vpop.f32.mrf.mxu0
    %1667 = vdwg.mxu0
    %v1669 = vrot.slane %v1665, 2
    %v1671 = vadd.f32 %v1260, %v1669
    %v1672 = vxor.u32 %v1671, 2147483648
    %v1673 = vmul.f32 %v1672, 1.442695
    %v1674 = vpow.pop %v1673
    %v1675 = vadd.f32 %v1674, 1.0
    %v1676 = vrcp.pop %v1675
    %v1677 = vmul.f32 1.0, %v1676
    %v1678 = vmul.f32 %v1677, 2.0
    %v1679 = vsub.f32 %v1678, 1.0
    %v1681 = vrot.slane %v1585, 6
    %v1683 = vmul.f32 %v1677, %v1681
    %1685 = vrot.lane.b32.xlu0 %v1679, 96
    %v1686 = vpop.permute.xlu0 %1685
    %v1688 = vmul.f32 %v1677, %v1686
    %1690 = vrot.lane.b32.xlu0 %v1688, 16
    %v1691 = vpop.permute.xlu0 %1690
    %v1693 = vadd.f32 %v1683, %v1691
    %v1694 = vtanh.pop %v1693
    %1696 = vrot.lane.b32.xlu0 %v1694, 32
    %v1697 = vpop.permute.xlu0 %1696
    %v1699 = vmul.f32 %v1677, %v1697
    %v1701 = vrot.slane %v1699, 6
    %1702 = vrot.lane.b32.xlu0 %v1701, 80
    %v1703 = vpop.permute.xlu0 %1702
    %v1704 = vsel %vm178, %v1703, 0
    %1706 = vmatprep.subr.mxu0 0.0
    %1707 = vmatpush1.msra.mxu0 0.0
    %1708 = vmatprep.subr.mxu0 0.0
    %1709 = vmatpush1.msra.mxu0 0.0
    %1710 = vmatprep.subr.mxu0 0.0
    %1711 = vmatpush1.msra.mxu0 0.0
    %1712 = vmatprep.subr.mxu0 0.0
    %1713 = vmatpush1.msra.mxu0 0.0
    %1714 = vmatprep.subr.mxu0 0.0
    %1715 = vmatpush1.msra.mxu0 0.0
    %1716 = vmatprep.subr.mxu0 0.0
    %1717 = vmatpush1.msra.mxu0 0.0
    %1718 = vmatprep.subr.mxu0 0.0
    %1719 = vmatpush1.msra.mxu0 0.0
    %1720 = vmatprep.subr.mxu0 0.0
    %1721 = vmatpush1.msra.mxu0 0.0
    %1722 = vmatprep.subr.mxu0 0.0
    %1723 = vmatpush1.msra.mxu0 0.0
    %1724 = vmatprep.subr.mxu0 0.0
    %1725 = vmatpush1.msra.mxu0 0.0
    %1726 = vmatprep.subr.mxu0 0.0
    %1727 = vmatpush1.msra.mxu0 0.0
    %1728 = vmatprep.subr.mxu0 0.0
    %1729 = vmatpush1.msra.mxu0 0.0
    %1730 = vmatprep.subr.mxu0 0.0
    %1731 = vmatpush1.msra.mxu0 0.0
    %1732 = vmatprep.subr.mxu0 0.0
    %1733 = vmatpush1.msra.mxu0 0.0
    %1734 = vmatprep.subr.mxu0 0.0
    %1735 = vmatpush1.msra.mxu0 %v1269
    %1736 = vmatprep.subr.mxu0 0.0
    %1737 = vmatpush1.msra.mxu0 %v1268
    %1738 = vmatprep.subr.mxu0 0.0
    %1739 = vmatpush2.msra.mxu0 0.0
    %1740 = vmatprep.subr.mxu0 0.0
    %1741 = vmatpush2.msra.mxu0 0.0
    %1742 = vmatprep.subr.mxu0 0.0
    %1743 = vmatpush2.msra.mxu0 0.0
    %1744 = vmatprep.subr.mxu0 0.0
    %1745 = vmatpush2.msra.mxu0 0.0
    %1746 = vmatprep.subr.mxu0 0.0
    %1747 = vmatpush2.msra.mxu0 0.0
    %1748 = vmatprep.subr.mxu0 0.0
    %1749 = vmatpush2.msra.mxu0 0.0
    %1750 = vmatprep.subr.mxu0 0.0
    %1751 = vmatpush2.msra.mxu0 0.0
    %1752 = vmatprep.subr.mxu0 0.0
    %1753 = vmatpush2.msra.mxu0 0.0
    %1754 = vmatprep.subr.mxu0 0.0
    %1755 = vmatpush2.msra.mxu0 0.0
    %1756 = vmatprep.subr.mxu0 0.0
    %1757 = vmatpush2.msra.mxu0 0.0
    %1758 = vmatprep.subr.mxu0 0.0
    %1759 = vmatpush2.msra.mxu0 0.0
    %1760 = vmatprep.subr.mxu0 0.0
    %1761 = vmatpush2.msra.mxu0 0.0
    %1762 = vmatprep.subr.mxu0 0.0
    %1763 = vmatpush2.msra.mxu0 0.0
    %1764 = vmatprep.subr.mxu0 0.0
    %1765 = vmatpush2.msra.mxu0 0.0
    %1766 = vmatprep.subr.mxu0 0.0
    %1767 = vmatpush2.msra.mxu0 0.0
    %1768 = vmatprep.subr.mxu0 0.0
    %1769 = vmatpush2.msra.mxu0 0.0
    %1770 = vmatprep.mubr.f32.mxu0 0.0
    %1771 = vmatmul.mubr.f32.gmra.mxu0 %v1704
    %v1772 = vpop.f32.mrf.mxu0
    %v1773 = vadd.f32 0.0, %v1772
    %v1774 = vpop.f32.mrf.mxu0
    %1775 = vdwg.mxu0
    %v1776 = vadd.f32 %v1265, %v1773
    %v1777 = vxor.u32 %v1776, 2147483648
    %v1778 = vmul.f32 %v1777, 1.442695
    %v1779 = vpow.pop %v1778
    %v1780 = vadd.f32 %v1779, 1.0
    %v1781 = vrcp.pop %v1780
    %v1782 = vmul.f32 1.0, %v1781
    %v1783 = vmul.f32 %v1782, 2.0
    %v1784 = vsub.f32 %v1783, 1.0
    %v1786 = vrot.slane %v1693, 6
    %v1788 = vmul.f32 %v1782, %v1786
    %1790 = vrot.lane.b32.xlu0 %v1784, 96
    %v1791 = vpop.permute.xlu0 %1790
    %v1793 = vmul.f32 %v1782, %v1791
    %1795 = vrot.lane.b32.xlu0 %v1793, 16
    %v1796 = vpop.permute.xlu0 %1795
    %v1798 = vadd.f32 %v1788, %v1796
    %v1799 = vtanh.pop %v1798
    %1801 = vrot.lane.b32.xlu0 %v1799, 32
    %v1802 = vpop.permute.xlu0 %1801
    %v1804 = vmul.f32 %v1782, %v1802
    %1806 = vrot.lane.b32.xlu0 %v1804, 80
    %v1807 = vpop.permute.xlu0 %1806
    %v1808 = vsel %vm178, %v1807, 0
    %1810 = vmatprep.subr.mxu0 0.0
    %1811 = vmatpush1.msra.mxu0 0.0
    %1812 = vmatprep.subr.mxu0 0.0
    %1813 = vmatpush1.msra.mxu0 0.0
    %1814 = vmatprep.subr.mxu0 0.0
    %1815 = vmatpush1.msra.mxu0 0.0
    %1816 = vmatprep.subr.mxu0 0.0
    %1817 = vmatpush1.msra.mxu0 0.0
    %1818 = vmatprep.subr.mxu0 0.0
    %1819 = vmatpush1.msra.mxu0 0.0
    %1820 = vmatprep.subr.mxu0 0.0
    %1821 = vmatpush1.msra.mxu0 0.0
    %1822 = vmatprep.subr.mxu0 0.0
    %1823 = vmatpush1.msra.mxu0 0.0
    %1824 = vmatprep.subr.mxu0 0.0
    %1825 = vmatpush1.msra.mxu0 0.0
    %1826 = vmatprep.subr.mxu0 0.0
    %1827 = vmatpush1.msra.mxu0 0.0
    %1828 = vmatprep.subr.mxu0 0.0
    %1829 = vmatpush1.msra.mxu0 0.0
    %1830 = vmatprep.subr.mxu0 0.0
    %1831 = vmatpush1.msra.mxu0 0.0
    %1832 = vmatprep.subr.mxu0 0.0
    %1833 = vmatpush1.msra.mxu0 0.0
    %1834 = vmatprep.subr.mxu0 0.0
    %1835 = vmatpush1.msra.mxu0 0.0
    %1836 = vmatprep.subr.mxu0 0.0
    %1837 = vmatpush1.msra.mxu0 0.0
    %1838 = vmatprep.subr.mxu0 0.0
    %1839 = vmatpush1.msra.mxu0 %v1269
    %1840 = vmatprep.subr.mxu0 0.0
    %1841 = vmatpush1.msra.mxu0 %v1268
    %1842 = vmatprep.subr.mxu0 0.0
    %1843 = vmatpush2.msra.mxu0 0.0
    %1844 = vmatprep.subr.mxu0 0.0
    %1845 = vmatpush2.msra.mxu0 0.0
    %1846 = vmatprep.subr.mxu0 0.0
    %1847 = vmatpush2.msra.mxu0 0.0
    %1848 = vmatprep.subr.mxu0 0.0
    %1849 = vmatpush2.msra.mxu0 0.0
    %1850 = vmatprep.subr.mxu0 0.0
    %1851 = vmatpush2.msra.mxu0 0.0
    %1852 = vmatprep.subr.mxu0 0.0
    %1853 = vmatpush2.msra.mxu0 0.0
    %1854 = vmatprep.subr.mxu0 0.0
    %1855 = vmatpush2.msra.mxu0 0.0
    %1856 = vmatprep.subr.mxu0 0.0
    %1857 = vmatpush2.msra.mxu0 0.0
    %1858 = vmatprep.subr.mxu0 0.0
    %1859 = vmatpush2.msra.mxu0 0.0
    %1860 = vmatprep.subr.mxu0 0.0
    %1861 = vmatpush2.msra.mxu0 0.0
    %1862 = vmatprep.subr.mxu0 0.0
    %1863 = vmatpush2.msra.mxu0 0.0
    %1864 = vmatprep.subr.mxu0 0.0
    %1865 = vmatpush2.msra.mxu0 0.0
    %1866 = vmatprep.subr.mxu0 0.0
    %1867 = vmatpush2.msra.mxu0 0.0
    %1868 = vmatprep.subr.mxu0 0.0
    %1869 = vmatpush2.msra.mxu0 0.0
    %1870 = vmatprep.subr.mxu0 0.0
    %1871 = vmatpush2.msra.mxu0 0.0
    %1872 = vmatprep.subr.mxu0 0.0
    %1873 = vmatpush2.msra.mxu0 0.0
    %1874 = vmatprep.mubr.f32.mxu0 0.0
    %1875 = vmatmul.mubr.f32.gmra.mxu0 %v1808
    %v1876 = vpop.f32.mrf.mxu0
    %v1877 = vadd.f32 0.0, %v1876
    %v1878 = vpop.f32.mrf.mxu0
    %1879 = vdwg.mxu0
    %v1881 = vrot.slane %v1877, 6
    %v1883 = vadd.f32 %v1265, %v1881
    %v1884 = vxor.u32 %v1883, 2147483648
    %v1885 = vmul.f32 %v1884, 1.442695
    %v1886 = vpow.pop %v1885
    %v1887 = vadd.f32 %v1886, 1.0
    %v1888 = vrcp.pop %v1887
    %v1889 = vmul.f32 1.0, %v1888
    %v1890 = vmul.f32 %v1889, 2.0
    %v1891 = vsub.f32 %v1890, 1.0
    %v1893 = vrot.slane %v1798, 6
    %v1895 = vmul.f32 %v1889, %v1893
    %1897 = vrot.lane.b32.xlu0 %v1891, 96
    %v1898 = vpop.permute.xlu0 %1897
    %v1900 = vmul.f32 %v1889, %v1898
    %1902 = vrot.lane.b32.xlu0 %v1900, 16
    %v1903 = vpop.permute.xlu0 %1902
    %v1905 = vadd.f32 %v1895, %v1903
    %v1906 = vtanh.pop %v1905
    %1908 = vrot.lane.b32.xlu0 %v1906, 32
    %v1909 = vpop.permute.xlu0 %1908
    %v1911 = vmul.f32 %v1889, %v1909
    %v1913 = vrot.slane %v1911, 2
    %1914 = vrot.lane.b32.xlu0 %v1913, 80
    %v1915 = vpop.permute.xlu0 %1914
    %v1916 = vsel %vm178, %v1915, 0
    %1918 = vmatprep.subr.mxu0 0.0
    %1919 = vmatpush1.msra.mxu0 0.0
    %1920 = vmatprep.subr.mxu0 0.0
    %1921 = vmatpush1.msra.mxu0 0.0
    %1922 = vmatprep.subr.mxu0 0.0
    %1923 = vmatpush1.msra.mxu0 0.0
    %1924 = vmatprep.subr.mxu0 0.0
    %1925 = vmatpush1.msra.mxu0 0.0
    %1926 = vmatprep.subr.mxu0 0.0
    %1927 = vmatpush1.msra.mxu0 0.0
    %1928 = vmatprep.subr.mxu0 0.0
    %1929 = vmatpush1.msra.mxu0 0.0
    %1930 = vmatprep.subr.mxu0 0.0
    %1931 = vmatpush1.msra.mxu0 0.0
    %1932 = vmatprep.subr.mxu0 0.0
    %1933 = vmatpush1.msra.mxu0 0.0
    %1934 = vmatprep.subr.mxu0 0.0
    %1935 = vmatpush1.msra.mxu0 0.0
    %1936 = vmatprep.subr.mxu0 0.0
    %1937 = vmatpush1.msra.mxu0 0.0
    %1938 = vmatprep.subr.mxu0 0.0
    %1939 = vmatpush1.msra.mxu0 0.0
    %1940 = vmatprep.subr.mxu0 0.0
    %1941 = vmatpush1.msra.mxu0 0.0
    %1942 = vmatprep.subr.mxu0 0.0
    %1943 = vmatpush1.msra.mxu0 0.0
    %1944 = vmatprep.subr.mxu0 0.0
    %1945 = vmatpush1.msra.mxu0 0.0
    %1946 = vmatprep.subr.mxu0 0.0
    %1947 = vmatpush1.msra.mxu0 %v1269
    %1948 = vmatprep.subr.mxu0 0.0
    %1949 = vmatpush1.msra.mxu0 %v1268
    %1950 = vmatprep.subr.mxu0 0.0
    %1951 = vmatpush2.msra.mxu0 0.0
    %1952 = vmatprep.subr.mxu0 0.0
    %1953 = vmatpush2.msra.mxu0 0.0
    %1954 = vmatprep.subr.mxu0 0.0
    %1955 = vmatpush2.msra.mxu0 0.0
    %1956 = vmatprep.subr.mxu0 0.0
    %1957 = vmatpush2.msra.mxu0 0.0
    %1958 = vmatprep.subr.mxu0 0.0
    %1959 = vmatpush2.msra.mxu0 0.0
    %1960 = vmatprep.subr.mxu0 0.0
    %1961 = vmatpush2.msra.mxu0 0.0
    %1962 = vmatprep.subr.mxu0 0.0
    %1963 = vmatpush2.msra.mxu0 0.0
    %1964 = vmatprep.subr.mxu0 0.0
    %1965 = vmatpush2.msra.mxu0 0.0
    %1966 = vmatprep.subr.mxu0 0.0
    %1967 = vmatpush2.msra.mxu0 0.0
    %1968 = vmatprep.subr.mxu0 0.0
    %1969 = vmatpush2.msra.mxu0 0.0
    %1970 = vmatprep.subr.mxu0 0.0
    %1971 = vmatpush2.msra.mxu0 0.0
    %1972 = vmatprep.subr.mxu0 0.0
    %1973 = vmatpush2.msra.mxu0 0.0
    %1974 = vmatprep.subr.mxu0 0.0
    %1975 = vmatpush2.msra.mxu0 0.0
    %1976 = vmatprep.subr.mxu0 0.0
    %1977 = vmatpush2.msra.mxu0 0.0
    %1978 = vmatprep.subr.mxu0 0.0
    %1979 = vmatpush2.msra.mxu0 0.0
    %1980 = vmatprep.subr.mxu0 0.0
    %1981 = vmatpush2.msra.mxu0 0.0
    %1982 = vmatprep.mubr.f32.mxu0 0.0
    %1983 = vmatmul.mubr.f32.gmra.mxu0 %v1916
    %v1984 = vpop.f32.mrf.mxu0
    %v1985 = vadd.f32 0.0, %v1984
    %v1986 = vpop.f32.mrf.mxu0
    %1987 = vdwg.mxu0
    %v1989 = vrot.slane %v1985, 4
    %v1991 = vadd.f32 %v1265, %v1989
    %v1992 = vxor.u32 %v1991, 2147483648
    %v1993 = vmul.f32 %v1992, 1.442695
    %v1994 = vpow.pop %v1993
    %v1995 = vadd.f32 %v1994, 1.0
    %v1996 = vrcp.pop %v1995
    %v1997 = vmul.f32 1.0, %v1996
    %v1998 = vmul.f32 %v1997, 2.0
    %v1999 = vsub.f32 %v1998, 1.0
    %v2001 = vrot.slane %v1905, 6
    %v2003 = vmul.f32 %v1997, %v2001
    %2005 = vrot.lane.b32.xlu0 %v1999, 96
    %v2006 = vpop.permute.xlu0 %2005
    %v2008 = vmul.f32 %v1997, %v2006
    %2010 = vrot.lane.b32.xlu0 %v2008, 16
    %v2011 = vpop.permute.xlu0 %2010
    %v2013 = vadd.f32 %v2003, %v2011
    %v2014 = vtanh.pop %v2013
    %2016 = vrot.lane.b32.xlu0 %v2014, 32
    %v2017 = vpop.permute.xlu0 %2016
    %v2019 = vmul.f32 %v1997, %v2017
    %v2021 = vrot.slane %v2019, 4
    %2022 = vrot.lane.b32.xlu0 %v2021, 80
    %v2023 = vpop.permute.xlu0 %2022
    %v2024 = vsel %vm178, %v2023, 0
    %2026 = vmatprep.subr.mxu0 0.0
    %2027 = vmatpush1.msra.mxu0 0.0
    %2028 = vmatprep.subr.mxu0 0.0
    %2029 = vmatpush1.msra.mxu0 0.0
    %2030 = vmatprep.subr.mxu0 0.0
    %2031 = vmatpush1.msra.mxu0 0.0
    %2032 = vmatprep.subr.mxu0 0.0
    %2033 = vmatpush1.msra.mxu0 0.0
    %2034 = vmatprep.subr.mxu0 0.0
    %2035 = vmatpush1.msra.mxu0 0.0
    %2036 = vmatprep.subr.mxu0 0.0
    %2037 = vmatpush1.msra.mxu0 0.0
    %2038 = vmatprep.subr.mxu0 0.0
    %2039 = vmatpush1.msra.mxu0 0.0
    %2040 = vmatprep.subr.mxu0 0.0
    %2041 = vmatpush1.msra.mxu0 0.0
    %2042 = vmatprep.subr.mxu0 0.0
    %2043 = vmatpush1.msra.mxu0 0.0
    %2044 = vmatprep.subr.mxu0 0.0
    %2045 = vmatpush1.msra.mxu0 0.0
    %2046 = vmatprep.subr.mxu0 0.0
    %2047 = vmatpush1.msra.mxu0 0.0
    %2048 = vmatprep.subr.mxu0 0.0
    %2049 = vmatpush1.msra.mxu0 0.0
    %2050 = vmatprep.subr.mxu0 0.0
    %2051 = vmatpush1.msra.mxu0 0.0
    %2052 = vmatprep.subr.mxu0 0.0
    %2053 = vmatpush1.msra.mxu0 0.0
    %2054 = vmatprep.subr.mxu0 0.0
    %2055 = vmatpush1.msra.mxu0 %v1269
    %2056 = vmatprep.subr.mxu0 0.0
    %2057 = vmatpush1.msra.mxu0 %v1268
    %2058 = vmatprep.subr.mxu0 0.0
    %2059 = vmatpush2.msra.mxu0 0.0
    %2060 = vmatprep.subr.mxu0 0.0
    %2061 = vmatpush2.msra.mxu0 0.0
    %2062 = vmatprep.subr.mxu0 0.0
    %2063 = vmatpush2.msra.mxu0 0.0
    %2064 = vmatprep.subr.mxu0 0.0
    %2065 = vmatpush2.msra.mxu0 0.0
    %2066 = vmatprep.subr.mxu0 0.0
    %2067 = vmatpush2.msra.mxu0 0.0
    %2068 = vmatprep.subr.mxu0 0.0
    %2069 = vmatpush2.msra.mxu0 0.0
    %2070 = vmatprep.subr.mxu0 0.0
    %2071 = vmatpush2.msra.mxu0 0.0
    %2072 = vmatprep.subr.mxu0 0.0
    %2073 = vmatpush2.msra.mxu0 0.0
    %2074 = vmatprep.subr.mxu0 0.0
    %2075 = vmatpush2.msra.mxu0 0.0
    %2076 = vmatprep.subr.mxu0 0.0
    %2077 = vmatpush2.msra.mxu0 0.0
    %2078 = vmatprep.subr.mxu0 0.0
    %2079 = vmatpush2.msra.mxu0 0.0
    %2080 = vmatprep.subr.mxu0 0.0
    %2081 = vmatpush2.msra.mxu0 0.0
    %2082 = vmatprep.subr.mxu0 0.0
    %2083 = vmatpush2.msra.mxu0 0.0
    %2084 = vmatprep.subr.mxu0 0.0
    %2085 = vmatpush2.msra.mxu0 0.0
    %2086 = vmatprep.subr.mxu0 0.0
    %2087 = vmatpush2.msra.mxu0 0.0
    %2088 = vmatprep.subr.mxu0 0.0
    %2089 = vmatpush2.msra.mxu0 0.0
    %2090 = vmatprep.mubr.f32.mxu0 0.0
    %2091 = vmatmul.mubr.f32.gmra.mxu0 %v2024
    %v2092 = vpop.f32.mrf.mxu0
    %v2093 = vadd.f32 0.0, %v2092
    %v2094 = vpop.f32.mrf.mxu0
    %2095 = vdwg.mxu0
    %v2097 = vrot.slane %v2093, 2
    %v2099 = vadd.f32 %v1265, %v2097
    %v2100 = vxor.u32 %v2099, 2147483648
    %v2101 = vmul.f32 %v2100, 1.442695
    %v2102 = vpow.pop %v2101
    %v2103 = vadd.f32 %v2102, 1.0
    %v2104 = vrcp.pop %v2103
    %v2105 = vmul.f32 1.0, %v2104
    %v2106 = vmul.f32 %v2105, 2.0
    %v2107 = vsub.f32 %v2106, 1.0
    %v2109 = vrot.slane %v2013, 6
    %v2111 = vmul.f32 %v2105, %v2109
    %2113 = vrot.lane.b32.xlu0 %v2107, 96
    %v2114 = vpop.permute.xlu0 %2113
    %v2116 = vmul.f32 %v2105, %v2114
    %2118 = vrot.lane.b32.xlu0 %v2116, 16
    %v2119 = vpop.permute.xlu0 %2118
    %v2121 = vadd.f32 %v2111, %v2119
    %v2122 = vtanh.pop %v2121
    %2124 = vrot.lane.b32.xlu0 %v2122, 32
    %v2125 = vpop.permute.xlu0 %2124
    %v2127 = vmul.f32 %v2105, %v2125
    %v2128 = vsel %vm169, %v1376, %v1483
    %v2129 = vsel %vm171, %v2128, %v1591
    %v2130 = vsel %vm173, %v2129, %v1699
    %v2131 = vsel %vm169, %v1804, %v1911
    %v2132 = vsel %vm171, %v2131, %v2019
    %v2133 = vsel %vm173, %v2132, %v2127
    %s2134 = scalar_lea.vmem [#allocation12], 16
    %v2135 = vld [vmem:[%s2134] sm:$0xff]
    %v2136 = vld [vmem:[%s2134 + $0x8] sm:$0xff]
    %s2137 = scalar_lea.vmem %s8, 1
    %v2138 = vld [vmem:[%s2137] sm:$0x1]
    %v2140 = vlaneseq
    %v2141 = vshrl.u32 %v2140, 7
    %v2142 = vsub.s32 0, %v2141
    %v2143 = vrot.slane %v2138, %v2142
    %2147 = vrot.lane.b32.xlu0 %v2130, 80
    %v2148 = vpop.permute.xlu0 %2147
    %2149 = vrot.lane.b32.xlu0 %v2133, 80
    %v2150 = vpop.permute.xlu0 %2149
    %v2151 = vsel %vm178, %v2148, 0
    %v2153 = vsel %vm178, %v2150, 0
    %2155 = vmatprep.subr.mxu0 0.0
    %2156 = vmatpush1.msra.mxu0 0.0
    %2157 = vmatprep.subr.mxu0 0.0
    %2158 = vmatpush1.msra.mxu0 0.0
    %2159 = vmatprep.subr.mxu0 0.0
    %2160 = vmatpush1.msra.mxu0 0.0
    %2161 = vmatprep.subr.mxu0 0.0
    %2162 = vmatpush1.msra.mxu0 0.0
    %2163 = vmatprep.subr.mxu0 0.0
    %2164 = vmatpush1.msra.mxu0 0.0
    %2165 = vmatprep.subr.mxu0 0.0
    %2166 = vmatpush1.msra.mxu0 0.0
    %2167 = vmatprep.subr.mxu0 0.0
    %2168 = vmatpush1.msra.mxu0 0.0
    %2169 = vmatprep.subr.mxu0 0.0
    %2170 = vmatpush1.msra.mxu0 0.0
    %2171 = vmatprep.subr.mxu0 0.0
    %2172 = vmatpush1.msra.mxu0 0.0
    %2173 = vmatprep.subr.mxu0 0.0
    %2174 = vmatpush1.msra.mxu0 0.0
    %2175 = vmatprep.subr.mxu0 0.0
    %2176 = vmatpush1.msra.mxu0 0.0
    %2177 = vmatprep.subr.mxu0 0.0
    %2178 = vmatpush1.msra.mxu0 0.0
    %2179 = vmatprep.subr.mxu0 0.0
    %2180 = vmatpush1.msra.mxu0 0.0
    %2181 = vmatprep.subr.mxu0 0.0
    %2182 = vmatpush1.msra.mxu0 0.0
    %2183 = vmatprep.subr.mxu0 0.0
    %2184 = vmatpush1.msra.mxu0 %v2136
    %2185 = vmatprep.subr.mxu0 0.0
    %2186 = vmatpush1.msra.mxu0 %v2135
    %2187 = vmatprep.subr.mxu0 0.0
    %2188 = vmatpush2.msra.mxu0 0.0
    %2189 = vmatprep.subr.mxu0 0.0
    %2190 = vmatpush2.msra.mxu0 0.0
    %2191 = vmatprep.subr.mxu0 0.0
    %2192 = vmatpush2.msra.mxu0 0.0
    %2193 = vmatprep.subr.mxu0 0.0
    %2194 = vmatpush2.msra.mxu0 0.0
    %2195 = vmatprep.subr.mxu0 0.0
    %2196 = vmatpush2.msra.mxu0 0.0
    %2197 = vmatprep.subr.mxu0 0.0
    %2198 = vmatpush2.msra.mxu0 0.0
    %2199 = vmatprep.subr.mxu0 0.0
    %2200 = vmatpush2.msra.mxu0 0.0
    %2201 = vmatprep.subr.mxu0 0.0
    %2202 = vmatpush2.msra.mxu0 0.0
    %2203 = vmatprep.subr.mxu0 0.0
    %2204 = vmatpush2.msra.mxu0 0.0
    %2205 = vmatprep.subr.mxu0 0.0
    %2206 = vmatpush2.msra.mxu0 0.0
    %2207 = vmatprep.subr.mxu0 0.0
    %2208 = vmatpush2.msra.mxu0 0.0
    %2209 = vmatprep.subr.mxu0 0.0
    %2210 = vmatpush2.msra.mxu0 0.0
    %2211 = vmatprep.subr.mxu0 0.0
    %2212 = vmatpush2.msra.mxu0 0.0
    %2213 = vmatprep.subr.mxu0 0.0
    %2214 = vmatpush2.msra.mxu0 0.0
    %2215 = vmatprep.subr.mxu0 0.0
    %2216 = vmatpush2.msra.mxu0 0.0
    %2217 = vmatprep.subr.mxu0 0.0
    %2218 = vmatpush2.msra.mxu0 0.0
    %2219 = vmatprep.mubr.f32.mxu0 0.0
    %2220 = vmatmul.mubr.f32.gmra.mxu0 %v2151
    %v2221 = vpop.f32.mrf.mxu0
    %v2222 = vadd.f32 %v2143, %v2221
    %v2223 = vpop.f32.mrf.mxu0
    %2224 = vmatprep.mubr.f32.mxu0 0.0
    %2225 = vmatmul.mubr.f32.gmra.mxu0 %v2153
    %v2226 = vpop.f32.mrf.mxu0
    %v2227 = vadd.f32 %v2143, %v2226
    %v2228 = vpop.f32.mrf.mxu0
    %2229 = vdwg.mxu0
    %s2230 = scalar_lea.vmem [#allocation14], 16
    %v2231 = vld [vmem:[%s2230] sm:$0xff]
    %v2232 = vld [vmem:[%s2230 + $0x8] sm:$0xff]
    %s2233 = scalar_lea.vmem [#allocation6], 4
    %v2234 = vld [vmem:[%s2233] sm:$0x3]
    %s2235 = scalar_lea.vmem [#allocation8], 4
    %v2236 = vld [vmem:[%s2235] sm:$0x3]
    %v2238 = vsel %vm178, %v2234, 0
    %2240 = vmatprep.subr.mxu0 0.0
    %2241 = vmatpush1.msra.mxu0 0.0
    %2242 = vmatprep.subr.mxu0 0.0
    %2243 = vmatpush1.msra.mxu0 0.0
    %2244 = vmatprep.subr.mxu0 0.0
    %2245 = vmatpush1.msra.mxu0 0.0
    %2246 = vmatprep.subr.mxu0 0.0
    %2247 = vmatpush1.msra.mxu0 0.0
    %2248 = vmatprep.subr.mxu0 0.0
    %2249 = vmatpush1.msra.mxu0 0.0
    %2250 = vmatprep.subr.mxu0 0.0
    %2251 = vmatpush1.msra.mxu0 0.0
    %2252 = vmatprep.subr.mxu0 0.0
    %2253 = vmatpush1.msra.mxu0 0.0
    %2254 = vmatprep.subr.mxu0 0.0
    %2255 = vmatpush1.msra.mxu0 0.0
    %2256 = vmatprep.subr.mxu0 0.0
    %2257 = vmatpush1.msra.mxu0 0.0
    %2258 = vmatprep.subr.mxu0 0.0
    %2259 = vmatpush1.msra.mxu0 0.0
    %2260 = vmatprep.subr.mxu0 0.0
    %2261 = vmatpush1.msra.mxu0 0.0
    %2262 = vmatprep.subr.mxu0 0.0
    %2263 = vmatpush1.msra.mxu0 0.0
    %2264 = vmatprep.subr.mxu0 0.0
    %2265 = vmatpush1.msra.mxu0 0.0
    %2266 = vmatprep.subr.mxu0 0.0
    %2267 = vmatpush1.msra.mxu0 0.0
    %2268 = vmatprep.subr.mxu0 0.0
    %2269 = vmatpush1.msra.mxu0 %v2232
    %2270 = vmatprep.subr.mxu0 0.0
    %2271 = vmatpush1.msra.mxu0 %v2231
    %2272 = vmatprep.subr.mxu0 0.0
    %2273 = vmatpush2.msra.mxu0 0.0
    %2274 = vmatprep.subr.mxu0 0.0
    %2275 = vmatpush2.msra.mxu0 0.0
    %2276 = vmatprep.subr.mxu0 0.0
    %2277 = vmatpush2.msra.mxu0 0.0
    %2278 = vmatprep.subr.mxu0 0.0
    %2279 = vmatpush2.msra.mxu0 0.0
    %2280 = vmatprep.subr.mxu0 0.0
    %2281 = vmatpush2.msra.mxu0 0.0
    %2282 = vmatprep.subr.mxu0 0.0
    %2283 = vmatpush2.msra.mxu0 0.0
    %2284 = vmatprep.subr.mxu0 0.0
    %2285 = vmatpush2.msra.mxu0 0.0
    %2286 = vmatprep.subr.mxu0 0.0
    %2287 = vmatpush2.msra.mxu0 0.0
    %2288 = vmatprep.subr.mxu0 0.0
    %2289 = vmatpush2.msra.mxu0 0.0
    %2290 = vmatprep.subr.mxu0 0.0
    %2291 = vmatpush2.msra.mxu0 0.0
    %2292 = vmatprep.subr.mxu0 0.0
    %2293 = vmatpush2.msra.mxu0 0.0
    %2294 = vmatprep.subr.mxu0 0.0
    %2295 = vmatpush2.msra.mxu0 0.0
    %2296 = vmatprep.subr.mxu0 0.0
    %2297 = vmatpush2.msra.mxu0 0.0
    %2298 = vmatprep.subr.mxu0 0.0
    %2299 = vmatpush2.msra.mxu0 0.0
    %2300 = vmatprep.subr.mxu0 0.0
    %2301 = vmatpush2.msra.mxu0 0.0
    %2302 = vmatprep.subr.mxu0 0.0
    %2303 = vmatpush2.msra.mxu0 0.0
    %2304 = vmatprep.mubr.f32.mxu0 0.0
    %2305 = vmatmul.mubr.f32.gmra.mxu0 %v2238
    %v2306 = vpop.f32.mrf.mxu0
    %v2307 = vadd.f32 0.0, %v2306
    %v2308 = vpop.f32.mrf.mxu0
    %2309 = vdwg.mxu0
    %v2310 = vadd.f32 %v2222, %v2307
    %v2311 = vxor.u32 %v2310, 2147483648
    %v2312 = vmul.f32 %v2311, 1.442695
    %v2313 = vpow.pop %v2312
    %v2314 = vadd.f32 %v2313, 1.0
    %v2315 = vrcp.pop %v2314
    %v2316 = vmul.f32 1.0, %v2315
    %v2317 = vmul.f32 %v2316, 2.0
    %v2318 = vsub.f32 %v2317, 1.0
    %2320 = vrot.lane.b32.xlu0 %v2236, 16
    %v2321 = vpop.permute.xlu0 %2320
    %v2323 = vmul.f32 %v2316, %v2321
    %2325 = vrot.lane.b32.xlu0 %v2318, 96
    %v2326 = vpop.permute.xlu0 %2325
    %v2328 = vmul.f32 %v2316, %v2326
    %2330 = vrot.lane.b32.xlu0 %v2328, 16
    %v2331 = vpop.permute.xlu0 %2330
    %v2333 = vadd.f32 %v2323, %v2331
    %v2334 = vtanh.pop %v2333
    %2336 = vrot.lane.b32.xlu0 %v2334, 32
    %v2337 = vpop.permute.xlu0 %2336
    %v2339 = vmul.f32 %v2316, %v2337
    %2341 = vrot.lane.b32.xlu0 %v2339, 80
    %v2342 = vpop.permute.xlu0 %2341
    %v2343 = vsel %vm178, %v2342, 0
    %2345 = vmatprep.subr.mxu0 0.0
    %2346 = vmatpush1.msra.mxu0 0.0
    %2347 = vmatprep.subr.mxu0 0.0
    %2348 = vmatpush1.msra.mxu0 0.0
    %2349 = vmatprep.subr.mxu0 0.0
    %2350 = vmatpush1.msra.mxu0 0.0
    %2351 = vmatprep.subr.mxu0 0.0
    %2352 = vmatpush1.msra.mxu0 0.0
    %2353 = vmatprep.subr.mxu0 0.0
    %2354 = vmatpush1.msra.mxu0 0.0
    %2355 = vmatprep.subr.mxu0 0.0
    %2356 = vmatpush1.msra.mxu0 0.0
    %2357 = vmatprep.subr.mxu0 0.0
    %2358 = vmatpush1.msra.mxu0 0.0
    %2359 = vmatprep.subr.mxu0 0.0
    %2360 = vmatpush1.msra.mxu0 0.0
    %2361 = vmatprep.subr.mxu0 0.0
    %2362 = vmatpush1.msra.mxu0 0.0
    %2363 = vmatprep.subr.mxu0 0.0
    %2364 = vmatpush1.msra.mxu0 0.0
    %2365 = vmatprep.subr.mxu0 0.0
    %2366 = vmatpush1.msra.mxu0 0.0
    %2367 = vmatprep.subr.mxu0 0.0
    %2368 = vmatpush1.msra.mxu0 0.0
    %2369 = vmatprep.subr.mxu0 0.0
    %2370 = vmatpush1.msra.mxu0 0.0
    %2371 = vmatprep.subr.mxu0 0.0
    %2372 = vmatpush1.msra.mxu0 0.0
    %2373 = vmatprep.subr.mxu0 0.0
    %2374 = vmatpush1.msra.mxu0 %v2232
    %2375 = vmatprep.subr.mxu0 0.0
    %2376 = vmatpush1.msra.mxu0 %v2231
    %2377 = vmatprep.subr.mxu0 0.0
    %2378 = vmatpush2.msra.mxu0 0.0
    %2379 = vmatprep.subr.mxu0 0.0
    %2380 = vmatpush2.msra.mxu0 0.0
    %2381 = vmatprep.subr.mxu0 0.0
    %2382 = vmatpush2.msra.mxu0 0.0
    %2383 = vmatprep.subr.mxu0 0.0
    %2384 = vmatpush2.msra.mxu0 0.0
    %2385 = vmatprep.subr.mxu0 0.0
    %2386 = vmatpush2.msra.mxu0 0.0
    %2387 = vmatprep.subr.mxu0 0.0
    %2388 = vmatpush2.msra.mxu0 0.0
    %2389 = vmatprep.subr.mxu0 0.0
    %2390 = vmatpush2.msra.mxu0 0.0
    %2391 = vmatprep.subr.mxu0 0.0
    %2392 = vmatpush2.msra.mxu0 0.0
    %2393 = vmatprep.subr.mxu0 0.0
    %2394 = vmatpush2.msra.mxu0 0.0
    %2395 = vmatprep.subr.mxu0 0.0
    %2396 = vmatpush2.msra.mxu0 0.0
    %2397 = vmatprep.subr.mxu0 0.0
    %2398 = vmatpush2.msra.mxu0 0.0
    %2399 = vmatprep.subr.mxu0 0.0
    %2400 = vmatpush2.msra.mxu0 0.0
    %2401 = vmatprep.subr.mxu0 0.0
    %2402 = vmatpush2.msra.mxu0 0.0
    %2403 = vmatprep.subr.mxu0 0.0
    %2404 = vmatpush2.msra.mxu0 0.0
    %2405 = vmatprep.subr.mxu0 0.0
    %2406 = vmatpush2.msra.mxu0 0.0
    %2407 = vmatprep.subr.mxu0 0.0
    %2408 = vmatpush2.msra.mxu0 0.0
    %2409 = vmatprep.mubr.f32.mxu0 0.0
    %2410 = vmatmul.mubr.f32.gmra.mxu0 %v2343
    %v2411 = vpop.f32.mrf.mxu0
    %v2412 = vadd.f32 0.0, %v2411
    %v2413 = vpop.f32.mrf.mxu0
    %2414 = vdwg.mxu0
    %v2416 = vrot.slane %v2412, 6
    %v2418 = vadd.f32 %v2222, %v2416
    %v2419 = vxor.u32 %v2418, 2147483648
    %v2420 = vmul.f32 %v2419, 1.442695
    %v2421 = vpow.pop %v2420
    %v2422 = vadd.f32 %v2421, 1.0
    %v2423 = vrcp.pop %v2422
    %v2424 = vmul.f32 1.0, %v2423
    %v2425 = vmul.f32 %v2424, 2.0
    %v2426 = vsub.f32 %v2425, 1.0
    %v2428 = vrot.slane %v2333, 6
    %v2430 = vmul.f32 %v2424, %v2428
    %2432 = vrot.lane.b32.xlu0 %v2426, 96
    %v2433 = vpop.permute.xlu0 %2432
    %v2435 = vmul.f32 %v2424, %v2433
    %2437 = vrot.lane.b32.xlu0 %v2435, 16
    %v2438 = vpop.permute.xlu0 %2437
    %v2440 = vadd.f32 %v2430, %v2438
    %v2441 = vtanh.pop %v2440
    %2443 = vrot.lane.b32.xlu0 %v2441, 32
    %v2444 = vpop.permute.xlu0 %2443
    %v2446 = vmul.f32 %v2424, %v2444
    %v2448 = vrot.slane %v2446, 2
    %2449 = vrot.lane.b32.xlu0 %v2448, 80
    %v2450 = vpop.permute.xlu0 %2449
    %v2451 = vsel %vm178, %v2450, 0
    %2453 = vmatprep.subr.mxu0 0.0
    %2454 = vmatpush1.msra.mxu0 0.0
    %2455 = vmatprep.subr.mxu0 0.0
    %2456 = vmatpush1.msra.mxu0 0.0
    %2457 = vmatprep.subr.mxu0 0.0
    %2458 = vmatpush1.msra.mxu0 0.0
    %2459 = vmatprep.subr.mxu0 0.0
    %2460 = vmatpush1.msra.mxu0 0.0
    %2461 = vmatprep.subr.mxu0 0.0
    %2462 = vmatpush1.msra.mxu0 0.0
    %2463 = vmatprep.subr.mxu0 0.0
    %2464 = vmatpush1.msra.mxu0 0.0
    %2465 = vmatprep.subr.mxu0 0.0
    %2466 = vmatpush1.msra.mxu0 0.0
    %2467 = vmatprep.subr.mxu0 0.0
    %2468 = vmatpush1.msra.mxu0 0.0
    %2469 = vmatprep.subr.mxu0 0.0
    %2470 = vmatpush1.msra.mxu0 0.0
    %2471 = vmatprep.subr.mxu0 0.0
    %2472 = vmatpush1.msra.mxu0 0.0
    %2473 = vmatprep.subr.mxu0 0.0
    %2474 = vmatpush1.msra.mxu0 0.0
    %2475 = vmatprep.subr.mxu0 0.0
    %2476 = vmatpush1.msra.mxu0 0.0
    %2477 = vmatprep.subr.mxu0 0.0
    %2478 = vmatpush1.msra.mxu0 0.0
    %2479 = vmatprep.subr.mxu0 0.0
    %2480 = vmatpush1.msra.mxu0 0.0
    %2481 = vmatprep.subr.mxu0 0.0
    %2482 = vmatpush1.msra.mxu0 %v2232
    %2483 = vmatprep.subr.mxu0 0.0
    %2484 = vmatpush1.msra.mxu0 %v2231
    %2485 = vmatprep.subr.mxu0 0.0
    %2486 = vmatpush2.msra.mxu0 0.0
    %2487 = vmatprep.subr.mxu0 0.0
    %2488 = vmatpush2.msra.mxu0 0.0
    %2489 = vmatprep.subr.mxu0 0.0
    %2490 = vmatpush2.msra.mxu0 0.0
    %2491 = vmatprep.subr.mxu0 0.0
    %2492 = vmatpush2.msra.mxu0 0.0
    %2493 = vmatprep.subr.mxu0 0.0
    %2494 = vmatpush2.msra.mxu0 0.0
    %2495 = vmatprep.subr.mxu0 0.0
    %2496 = vmatpush2.msra.mxu0 0.0
    %2497 = vmatprep.subr.mxu0 0.0
    %2498 = vmatpush2.msra.mxu0 0.0
    %2499 = vmatprep.subr.mxu0 0.0
    %2500 = vmatpush2.msra.mxu0 0.0
    %2501 = vmatprep.subr.mxu0 0.0
    %2502 = vmatpush2.msra.mxu0 0.0
    %2503 = vmatprep.subr.mxu0 0.0
    %2504 = vmatpush2.msra.mxu0 0.0
    %2505 = vmatprep.subr.mxu0 0.0
    %2506 = vmatpush2.msra.mxu0 0.0
    %2507 = vmatprep.subr.mxu0 0.0
    %2508 = vmatpush2.msra.mxu0 0.0
    %2509 = vmatprep.subr.mxu0 0.0
    %2510 = vmatpush2.msra.mxu0 0.0
    %2511 = vmatprep.subr.mxu0 0.0
    %2512 = vmatpush2.msra.mxu0 0.0
    %2513 = vmatprep.subr.mxu0 0.0
    %2514 = vmatpush2.msra.mxu0 0.0
    %2515 = vmatprep.subr.mxu0 0.0
    %2516 = vmatpush2.msra.mxu0 0.0
    %2517 = vmatprep.mubr.f32.mxu0 0.0
    %2518 = vmatmul.mubr.f32.gmra.mxu0 %v2451
    %v2519 = vpop.f32.mrf.mxu0
    %v2520 = vadd.f32 0.0, %v2519
    %v2521 = vpop.f32.mrf.mxu0
    %2522 = vdwg.mxu0
    %v2524 = vrot.slane %v2520, 4
    %v2526 = vadd.f32 %v2222, %v2524
    %v2527 = vxor.u32 %v2526, 2147483648
    %v2528 = vmul.f32 %v2527, 1.442695
    %v2529 = vpow.pop %v2528
    %v2530 = vadd.f32 %v2529, 1.0
    %v2531 = vrcp.pop %v2530
    %v2532 = vmul.f32 1.0, %v2531
    %v2533 = vmul.f32 %v2532, 2.0
    %v2534 = vsub.f32 %v2533, 1.0
    %v2536 = vrot.slane %v2440, 6
    %v2538 = vmul.f32 %v2532, %v2536
    %2540 = vrot.lane.b32.xlu0 %v2534, 96
    %v2541 = vpop.permute.xlu0 %2540
    %v2543 = vmul.f32 %v2532, %v2541
    %2545 = vrot.lane.b32.xlu0 %v2543, 16
    %v2546 = vpop.permute.xlu0 %2545
    %v2548 = vadd.f32 %v2538, %v2546
    %v2549 = vtanh.pop %v2548
    %2551 = vrot.lane.b32.xlu0 %v2549, 32
    %v2552 = vpop.permute.xlu0 %2551
    %v2554 = vmul.f32 %v2532, %v2552
    %v2556 = vrot.slane %v2554, 4
    %2557 = vrot.lane.b32.xlu0 %v2556, 80
    %v2558 = vpop.permute.xlu0 %2557
    %v2559 = vsel %vm178, %v2558, 0
    %2561 = vmatprep.subr.mxu0 0.0
    %2562 = vmatpush1.msra.mxu0 0.0
    %2563 = vmatprep.subr.mxu0 0.0
    %2564 = vmatpush1.msra.mxu0 0.0
    %2565 = vmatprep.subr.mxu0 0.0
    %2566 = vmatpush1.msra.mxu0 0.0
    %2567 = vmatprep.subr.mxu0 0.0
    %2568 = vmatpush1.msra.mxu0 0.0
    %2569 = vmatprep.subr.mxu0 0.0
    %2570 = vmatpush1.msra.mxu0 0.0
    %2571 = vmatprep.subr.mxu0 0.0
    %2572 = vmatpush1.msra.mxu0 0.0
    %2573 = vmatprep.subr.mxu0 0.0
    %2574 = vmatpush1.msra.mxu0 0.0
    %2575 = vmatprep.subr.mxu0 0.0
    %2576 = vmatpush1.msra.mxu0 0.0
    %2577 = vmatprep.subr.mxu0 0.0
    %2578 = vmatpush1.msra.mxu0 0.0
    %2579 = vmatprep.subr.mxu0 0.0
    %2580 = vmatpush1.msra.mxu0 0.0
    %2581 = vmatprep.subr.mxu0 0.0
    %2582 = vmatpush1.msra.mxu0 0.0
    %2583 = vmatprep.subr.mxu0 0.0
    %2584 = vmatpush1.msra.mxu0 0.0
    %2585 = vmatprep.subr.mxu0 0.0
    %2586 = vmatpush1.msra.mxu0 0.0
    %2587 = vmatprep.subr.mxu0 0.0
    %2588 = vmatpush1.msra.mxu0 0.0
    %2589 = vmatprep.subr.mxu0 0.0
    %2590 = vmatpush1.msra.mxu0 %v2232
    %2591 = vmatprep.subr.mxu0 0.0
    %2592 = vmatpush1.msra.mxu0 %v2231
    %2593 = vmatprep.subr.mxu0 0.0
    %2594 = vmatpush2.msra.mxu0 0.0
    %2595 = vmatprep.subr.mxu0 0.0
    %2596 = vmatpush2.msra.mxu0 0.0
    %2597 = vmatprep.subr.mxu0 0.0
    %2598 = vmatpush2.msra.mxu0 0.0
    %2599 = vmatprep.subr.mxu0 0.0
    %2600 = vmatpush2.msra.mxu0 0.0
    %2601 = vmatprep.subr.mxu0 0.0
    %2602 = vmatpush2.msra.mxu0 0.0
    %2603 = vmatprep.subr.mxu0 0.0
    %2604 = vmatpush2.msra.mxu0 0.0
    %2605 = vmatprep.subr.mxu0 0.0
    %2606 = vmatpush2.msra.mxu0 0.0
    %2607 = vmatprep.subr.mxu0 0.0
    %2608 = vmatpush2.msra.mxu0 0.0
    %2609 = vmatprep.subr.mxu0 0.0
    %2610 = vmatpush2.msra.mxu0 0.0
    %2611 = vmatprep.subr.mxu0 0.0
    %2612 = vmatpush2.msra.mxu0 0.0
    %2613 = vmatprep.subr.mxu0 0.0
    %2614 = vmatpush2.msra.mxu0 0.0
    %2615 = vmatprep.subr.mxu0 0.0
    %2616 = vmatpush2.msra.mxu0 0.0
    %2617 = vmatprep.subr.mxu0 0.0
    %2618 = vmatpush2.msra.mxu0 0.0
    %2619 = vmatprep.subr.mxu0 0.0
    %2620 = vmatpush2.msra.mxu0 0.0
    %2621 = vmatprep.subr.mxu0 0.0
    %2622 = vmatpush2.msra.mxu0 0.0
    %2623 = vmatprep.subr.mxu0 0.0
    %2624 = vmatpush2.msra.mxu0 0.0
    %2625 = vmatprep.mubr.f32.mxu0 0.0
    %2626 = vmatmul.mubr.f32.gmra.mxu0 %v2559
    %v2627 = vpop.f32.mrf.mxu0
    %v2628 = vadd.f32 0.0, %v2627
    %v2629 = vpop.f32.mrf.mxu0
    %2630 = vdwg.mxu0
    %v2632 = vrot.slane %v2628, 2
    %v2634 = vadd.f32 %v2222, %v2632
    %v2635 = vxor.u32 %v2634, 2147483648
    %v2636 = vmul.f32 %v2635, 1.442695
    %v2637 = vpow.pop %v2636
    %v2638 = vadd.f32 %v2637, 1.0
    %v2639 = vrcp.pop %v2638
    %v2640 = vmul.f32 1.0, %v2639
    %v2641 = vmul.f32 %v2640, 2.0
    %v2642 = vsub.f32 %v2641, 1.0
    %v2644 = vrot.slane %v2548, 6
    %v2646 = vmul.f32 %v2640, %v2644
    %2648 = vrot.lane.b32.xlu0 %v2642, 96
    %v2649 = vpop.permute.xlu0 %2648
    %v2651 = vmul.f32 %v2640, %v2649
    %2653 = vrot.lane.b32.xlu0 %v2651, 16
    %v2654 = vpop.permute.xlu0 %2653
    %v2656 = vadd.f32 %v2646, %v2654
    %v2657 = vtanh.pop %v2656
    %2659 = vrot.lane.b32.xlu0 %v2657, 32
    %v2660 = vpop.permute.xlu0 %2659
    %v2662 = vmul.f32 %v2640, %v2660
    %v2664 = vrot.slane %v2662, 6
    %2665 = vrot.lane.b32.xlu0 %v2664, 80
    %v2666 = vpop.permute.xlu0 %2665
    %v2667 = vsel %vm178, %v2666, 0
    %2669 = vmatprep.subr.mxu0 0.0
    %2670 = vmatpush1.msra.mxu0 0.0
    %2671 = vmatprep.subr.mxu0 0.0
    %2672 = vmatpush1.msra.mxu0 0.0
    %2673 = vmatprep.subr.mxu0 0.0
    %2674 = vmatpush1.msra.mxu0 0.0
    %2675 = vmatprep.subr.mxu0 0.0
    %2676 = vmatpush1.msra.mxu0 0.0
    %2677 = vmatprep.subr.mxu0 0.0
    %2678 = vmatpush1.msra.mxu0 0.0
    %2679 = vmatprep.subr.mxu0 0.0
    %2680 = vmatpush1.msra.mxu0 0.0
    %2681 = vmatprep.subr.mxu0 0.0
    %2682 = vmatpush1.msra.mxu0 0.0
    %2683 = vmatprep.subr.mxu0 0.0
    %2684 = vmatpush1.msra.mxu0 0.0
    %2685 = vmatprep.subr.mxu0 0.0
    %2686 = vmatpush1.msra.mxu0 0.0
    %2687 = vmatprep.subr.mxu0 0.0
    %2688 = vmatpush1.msra.mxu0 0.0
    %2689 = vmatprep.subr.mxu0 0.0
    %2690 = vmatpush1.msra.mxu0 0.0
    %2691 = vmatprep.subr.mxu0 0.0
    %2692 = vmatpush1.msra.mxu0 0.0
    %2693 = vmatprep.subr.mxu0 0.0
    %2694 = vmatpush1.msra.mxu0 0.0
    %2695 = vmatprep.subr.mxu0 0.0
    %2696 = vmatpush1.msra.mxu0 0.0
    %2697 = vmatprep.subr.mxu0 0.0
    %2698 = vmatpush1.msra.mxu0 %v2232
    %2699 = vmatprep.subr.mxu0 0.0
    %2700 = vmatpush1.msra.mxu0 %v2231
    %2701 = vmatprep.subr.mxu0 0.0
    %2702 = vmatpush2.msra.mxu0 0.0
    %2703 = vmatprep.subr.mxu0 0.0
    %2704 = vmatpush2.msra.mxu0 0.0
    %2705 = vmatprep.subr.mxu0 0.0
    %2706 = vmatpush2.msra.mxu0 0.0
    %2707 = vmatprep.subr.mxu0 0.0
    %2708 = vmatpush2.msra.mxu0 0.0
    %2709 = vmatprep.subr.mxu0 0.0
    %2710 = vmatpush2.msra.mxu0 0.0
    %2711 = vmatprep.subr.mxu0 0.0
    %2712 = vmatpush2.msra.mxu0 0.0
    %2713 = vmatprep.subr.mxu0 0.0
    %2714 = vmatpush2.msra.mxu0 0.0
    %2715 = vmatprep.subr.mxu0 0.0
    %2716 = vmatpush2.msra.mxu0 0.0
    %2717 = vmatprep.subr.mxu0 0.0
    %2718 = vmatpush2.msra.mxu0 0.0
    %2719 = vmatprep.subr.mxu0 0.0
    %2720 = vmatpush2.msra.mxu0 0.0
    %2721 = vmatprep.subr.mxu0 0.0
    %2722 = vmatpush2.msra.mxu0 0.0
    %2723 = vmatprep.subr.mxu0 0.0
    %2724 = vmatpush2.msra.mxu0 0.0
    %2725 = vmatprep.subr.mxu0 0.0
    %2726 = vmatpush2.msra.mxu0 0.0
    %2727 = vmatprep.subr.mxu0 0.0
    %2728 = vmatpush2.msra.mxu0 0.0
    %2729 = vmatprep.subr.mxu0 0.0
    %2730 = vmatpush2.msra.mxu0 0.0
    %2731 = vmatprep.subr.mxu0 0.0
    %2732 = vmatpush2.msra.mxu0 0.0
    %2733 = vmatprep.mubr.f32.mxu0 0.0
    %2734 = vmatmul.mubr.f32.gmra.mxu0 %v2667
    %v2735 = vpop.f32.mrf.mxu0
    %v2736 = vadd.f32 0.0, %v2735
    %v2737 = vpop.f32.mrf.mxu0
    %2738 = vdwg.mxu0
    %v2739 = vadd.f32 %v2227, %v2736
    %v2740 = vxor.u32 %v2739, 2147483648
    %v2741 = vmul.f32 %v2740, 1.442695
    %v2742 = vpow.pop %v2741
    %v2743 = vadd.f32 %v2742, 1.0
    %v2744 = vrcp.pop %v2743
    %v2745 = vmul.f32 1.0, %v2744
    %v2746 = vmul.f32 %v2745, 2.0
    %v2747 = vsub.f32 %v2746, 1.0
    %v2749 = vrot.slane %v2656, 6
    %v2751 = vmul.f32 %v2745, %v2749
    %2753 = vrot.lane.b32.xlu0 %v2747, 96
    %v2754 = vpop.permute.xlu0 %2753
    %v2756 = vmul.f32 %v2745, %v2754
    %2758 = vrot.lane.b32.xlu0 %v2756, 16
    %v2759 = vpop.permute.xlu0 %2758
    %v2761 = vadd.f32 %v2751, %v2759
    %v2762 = vtanh.pop %v2761
    %2764 = vrot.lane.b32.xlu0 %v2762, 32
    %v2765 = vpop.permute.xlu0 %2764
    %v2767 = vmul.f32 %v2745, %v2765
    %2769 = vrot.lane.b32.xlu0 %v2767, 80
    %v2770 = vpop.permute.xlu0 %2769
    %v2771 = vsel %vm178, %v2770, 0
    %2773 = vmatprep.subr.mxu0 0.0
    %2774 = vmatpush1.msra.mxu0 0.0
    %2775 = vmatprep.subr.mxu0 0.0
    %2776 = vmatpush1.msra.mxu0 0.0
    %2777 = vmatprep.subr.mxu0 0.0
    %2778 = vmatpush1.msra.mxu0 0.0
    %2779 = vmatprep.subr.mxu0 0.0
    %2780 = vmatpush1.msra.mxu0 0.0
    %2781 = vmatprep.subr.mxu0 0.0
    %2782 = vmatpush1.msra.mxu0 0.0
    %2783 = vmatprep.subr.mxu0 0.0
    %2784 = vmatpush1.msra.mxu0 0.0
    %2785 = vmatprep.subr.mxu0 0.0
    %2786 = vmatpush1.msra.mxu0 0.0
    %2787 = vmatprep.subr.mxu0 0.0
    %2788 = vmatpush1.msra.mxu0 0.0
    %2789 = vmatprep.subr.mxu0 0.0
    %2790 = vmatpush1.msra.mxu0 0.0
    %2791 = vmatprep.subr.mxu0 0.0
    %2792 = vmatpush1.msra.mxu0 0.0
    %2793 = vmatprep.subr.mxu0 0.0
    %2794 = vmatpush1.msra.mxu0 0.0
    %2795 = vmatprep.subr.mxu0 0.0
    %2796 = vmatpush1.msra.mxu0 0.0
    %2797 = vmatprep.subr.mxu0 0.0
    %2798 = vmatpush1.msra.mxu0 0.0
    %2799 = vmatprep.subr.mxu0 0.0
    %2800 = vmatpush1.msra.mxu0 0.0
    %2801 = vmatprep.subr.mxu0 0.0
    %2802 = vmatpush1.msra.mxu0 %v2232
    %2803 = vmatprep.subr.mxu0 0.0
    %2804 = vmatpush1.msra.mxu0 %v2231
    %2805 = vmatprep.subr.mxu0 0.0
    %2806 = vmatpush2.msra.mxu0 0.0
    %2807 = vmatprep.subr.mxu0 0.0
    %2808 = vmatpush2.msra.mxu0 0.0
    %2809 = vmatprep.subr.mxu0 0.0
    %2810 = vmatpush2.msra.mxu0 0.0
    %2811 = vmatprep.subr.mxu0 0.0
    %2812 = vmatpush2.msra.mxu0 0.0
    %2813 = vmatprep.subr.mxu0 0.0
    %2814 = vmatpush2.msra.mxu0 0.0
    %2815 = vmatprep.subr.mxu0 0.0
    %2816 = vmatpush2.msra.mxu0 0.0
    %2817 = vmatprep.subr.mxu0 0.0
    %2818 = vmatpush2.msra.mxu0 0.0
    %2819 = vmatprep.subr.mxu0 0.0
    %2820 = vmatpush2.msra.mxu0 0.0
    %2821 = vmatprep.subr.mxu0 0.0
    %2822 = vmatpush2.msra.mxu0 0.0
    %2823 = vmatprep.subr.mxu0 0.0
    %2824 = vmatpush2.msra.mxu0 0.0
    %2825 = vmatprep.subr.mxu0 0.0
    %2826 = vmatpush2.msra.mxu0 0.0
    %2827 = vmatprep.subr.mxu0 0.0
    %2828 = vmatpush2.msra.mxu0 0.0
    %2829 = vmatprep.subr.mxu0 0.0
    %2830 = vmatpush2.msra.mxu0 0.0
    %2831 = vmatprep.subr.mxu0 0.0
    %2832 = vmatpush2.msra.mxu0 0.0
    %2833 = vmatprep.subr.mxu0 0.0
    %2834 = vmatpush2.msra.mxu0 0.0
    %2835 = vmatprep.subr.mxu0 0.0
    %2836 = vmatpush2.msra.mxu0 0.0
    %2837 = vmatprep.mubr.f32.mxu0 0.0
    %2838 = vmatmul.mubr.f32.gmra.mxu0 %v2771
    %v2839 = vpop.f32.mrf.mxu0
    %v2840 = vadd.f32 0.0, %v2839
    %v2841 = vpop.f32.mrf.mxu0
    %2842 = vdwg.mxu0
    %v2844 = vrot.slane %v2840, 6
    %v2846 = vadd.f32 %v2227, %v2844
    %v2847 = vxor.u32 %v2846, 2147483648
    %v2848 = vmul.f32 %v2847, 1.442695
    %v2849 = vpow.pop %v2848
    %v2850 = vadd.f32 %v2849, 1.0
    %v2851 = vrcp.pop %v2850
    %v2852 = vmul.f32 1.0, %v2851
    %v2853 = vmul.f32 %v2852, 2.0
    %v2854 = vsub.f32 %v2853, 1.0
    %v2856 = vrot.slane %v2761, 6
    %v2858 = vmul.f32 %v2852, %v2856
    %2860 = vrot.lane.b32.xlu0 %v2854, 96
    %v2861 = vpop.permute.xlu0 %2860
    %v2863 = vmul.f32 %v2852, %v2861
    %2865 = vrot.lane.b32.xlu0 %v2863, 16
    %v2866 = vpop.permute.xlu0 %2865
    %v2868 = vadd.f32 %v2858, %v2866
    %v2869 = vtanh.pop %v2868
    %2871 = vrot.lane.b32.xlu0 %v2869, 32
    %v2872 = vpop.permute.xlu0 %2871
    %v2874 = vmul.f32 %v2852, %v2872
    %v2876 = vrot.slane %v2874, 2
    %2877 = vrot.lane.b32.xlu0 %v2876, 80
    %v2878 = vpop.permute.xlu0 %2877
    %v2879 = vsel %vm178, %v2878, 0
    %2881 = vmatprep.subr.mxu0 0.0
    %2882 = vmatpush1.msra.mxu0 0.0
    %2883 = vmatprep.subr.mxu0 0.0
    %2884 = vmatpush1.msra.mxu0 0.0
    %2885 = vmatprep.subr.mxu0 0.0
    %2886 = vmatpush1.msra.mxu0 0.0
    %2887 = vmatprep.subr.mxu0 0.0
    %2888 = vmatpush1.msra.mxu0 0.0
    %2889 = vmatprep.subr.mxu0 0.0
    %2890 = vmatpush1.msra.mxu0 0.0
    %2891 = vmatprep.subr.mxu0 0.0
    %2892 = vmatpush1.msra.mxu0 0.0
    %2893 = vmatprep.subr.mxu0 0.0
    %2894 = vmatpush1.msra.mxu0 0.0
    %2895 = vmatprep.subr.mxu0 0.0
    %2896 = vmatpush1.msra.mxu0 0.0
    %2897 = vmatprep.subr.mxu0 0.0
    %2898 = vmatpush1.msra.mxu0 0.0
    %2899 = vmatprep.subr.mxu0 0.0
    %2900 = vmatpush1.msra.mxu0 0.0
    %2901 = vmatprep.subr.mxu0 0.0
    %2902 = vmatpush1.msra.mxu0 0.0
    %2903 = vmatprep.subr.mxu0 0.0
    %2904 = vmatpush1.msra.mxu0 0.0
    %2905 = vmatprep.subr.mxu0 0.0
    %2906 = vmatpush1.msra.mxu0 0.0
    %2907 = vmatprep.subr.mxu0 0.0
    %2908 = vmatpush1.msra.mxu0 0.0
    %2909 = vmatprep.subr.mxu0 0.0
    %2910 = vmatpush1.msra.mxu0 %v2232
    %2911 = vmatprep.subr.mxu0 0.0
    %2912 = vmatpush1.msra.mxu0 %v2231
    %2913 = vmatprep.subr.mxu0 0.0
    %2914 = vmatpush2.msra.mxu0 0.0
    %2915 = vmatprep.subr.mxu0 0.0
    %2916 = vmatpush2.msra.mxu0 0.0
    %2917 = vmatprep.subr.mxu0 0.0
    %2918 = vmatpush2.msra.mxu0 0.0
    %2919 = vmatprep.subr.mxu0 0.0
    %2920 = vmatpush2.msra.mxu0 0.0
    %2921 = vmatprep.subr.mxu0 0.0
    %2922 = vmatpush2.msra.mxu0 0.0
    %2923 = vmatprep.subr.mxu0 0.0
    %2924 = vmatpush2.msra.mxu0 0.0
    %2925 = vmatprep.subr.mxu0 0.0
    %2926 = vmatpush2.msra.mxu0 0.0
    %2927 = vmatprep.subr.mxu0 0.0
    %2928 = vmatpush2.msra.mxu0 0.0
    %2929 = vmatprep.subr.mxu0 0.0
    %2930 = vmatpush2.msra.mxu0 0.0
    %2931 = vmatprep.subr.mxu0 0.0
    %2932 = vmatpush2.msra.mxu0 0.0
    %2933 = vmatprep.subr.mxu0 0.0
    %2934 = vmatpush2.msra.mxu0 0.0
    %2935 = vmatprep.subr.mxu0 0.0
    %2936 = vmatpush2.msra.mxu0 0.0
    %2937 = vmatprep.subr.mxu0 0.0
    %2938 = vmatpush2.msra.mxu0 0.0
    %2939 = vmatprep.subr.mxu0 0.0
    %2940 = vmatpush2.msra.mxu0 0.0
    %2941 = vmatprep.subr.mxu0 0.0
    %2942 = vmatpush2.msra.mxu0 0.0
    %2943 = vmatprep.subr.mxu0 0.0
    %2944 = vmatpush2.msra.mxu0 0.0
    %2945 = vmatprep.mubr.f32.mxu0 0.0
    %2946 = vmatmul.mubr.f32.gmra.mxu0 %v2879
    %v2947 = vpop.f32.mrf.mxu0
    %v2948 = vadd.f32 0.0, %v2947
    %v2949 = vpop.f32.mrf.mxu0
    %2950 = vdwg.mxu0
    %v2952 = vrot.slane %v2948, 4
    %v2954 = vadd.f32 %v2227, %v2952
    %v2955 = vxor.u32 %v2954, 2147483648
    %v2956 = vmul.f32 %v2955, 1.442695
    %v2957 = vpow.pop %v2956
    %v2958 = vadd.f32 %v2957, 1.0
    %v2959 = vrcp.pop %v2958
    %v2960 = vmul.f32 1.0, %v2959
    %v2961 = vmul.f32 %v2960, 2.0
    %v2962 = vsub.f32 %v2961, 1.0
    %v2964 = vrot.slane %v2868, 6
    %v2966 = vmul.f32 %v2960, %v2964
    %2968 = vrot.lane.b32.xlu0 %v2962, 96
    %v2969 = vpop.permute.xlu0 %2968
    %v2971 = vmul.f32 %v2960, %v2969
    %2973 = vrot.lane.b32.xlu0 %v2971, 16
    %v2974 = vpop.permute.xlu0 %2973
    %v2976 = vadd.f32 %v2966, %v2974
    %v2977 = vtanh.pop %v2976
    %2979 = vrot.lane.b32.xlu0 %v2977, 32
    %v2980 = vpop.permute.xlu0 %2979
    %v2982 = vmul.f32 %v2960, %v2980
    %v2984 = vrot.slane %v2982, 4
    %2985 = vrot.lane.b32.xlu0 %v2984, 80
    %v2986 = vpop.permute.xlu0 %2985
    %v2987 = vsel %vm178, %v2986, 0
    %2989 = vmatprep.subr.mxu0 0.0
    %2990 = vmatpush1.msra.mxu0 0.0
    %2991 = vmatprep.subr.mxu0 0.0
    %2992 = vmatpush1.msra.mxu0 0.0
    %2993 = vmatprep.subr.mxu0 0.0
    %2994 = vmatpush1.msra.mxu0 0.0
    %2995 = vmatprep.subr.mxu0 0.0
    %2996 = vmatpush1.msra.mxu0 0.0
    %2997 = vmatprep.subr.mxu0 0.0
    %2998 = vmatpush1.msra.mxu0 0.0
    %2999 = vmatprep.subr.mxu0 0.0
    %3000 = vmatpush1.msra.mxu0 0.0
    %3001 = vmatprep.subr.mxu0 0.0
    %3002 = vmatpush1.msra.mxu0 0.0
    %3003 = vmatprep.subr.mxu0 0.0
    %3004 = vmatpush1.msra.mxu0 0.0
    %3005 = vmatprep.subr.mxu0 0.0
    %3006 = vmatpush1.msra.mxu0 0.0
    %3007 = vmatprep.subr.mxu0 0.0
    %3008 = vmatpush1.msra.mxu0 0.0
    %3009 = vmatprep.subr.mxu0 0.0
    %3010 = vmatpush1.msra.mxu0 0.0
    %3011 = vmatprep.subr.mxu0 0.0
    %3012 = vmatpush1.msra.mxu0 0.0
    %3013 = vmatprep.subr.mxu0 0.0
    %3014 = vmatpush1.msra.mxu0 0.0
    %3015 = vmatprep.subr.mxu0 0.0
    %3016 = vmatpush1.msra.mxu0 0.0
    %3017 = vmatprep.subr.mxu0 0.0
    %3018 = vmatpush1.msra.mxu0 %v2232
    %3019 = vmatprep.subr.mxu0 0.0
    %3020 = vmatpush1.msra.mxu0 %v2231
    %3021 = vmatprep.subr.mxu0 0.0
    %3022 = vmatpush2.msra.mxu0 0.0
    %3023 = vmatprep.subr.mxu0 0.0
    %3024 = vmatpush2.msra.mxu0 0.0
    %3025 = vmatprep.subr.mxu0 0.0
    %3026 = vmatpush2.msra.mxu0 0.0
    %3027 = vmatprep.subr.mxu0 0.0
    %3028 = vmatpush2.msra.mxu0 0.0
    %3029 = vmatprep.subr.mxu0 0.0
    %3030 = vmatpush2.msra.mxu0 0.0
    %3031 = vmatprep.subr.mxu0 0.0
    %3032 = vmatpush2.msra.mxu0 0.0
    %3033 = vmatprep.subr.mxu0 0.0
    %3034 = vmatpush2.msra.mxu0 0.0
    %3035 = vmatprep.subr.mxu0 0.0
    %3036 = vmatpush2.msra.mxu0 0.0
    %3037 = vmatprep.subr.mxu0 0.0
    %3038 = vmatpush2.msra.mxu0 0.0
    %3039 = vmatprep.subr.mxu0 0.0
    %3040 = vmatpush2.msra.mxu0 0.0
    %3041 = vmatprep.subr.mxu0 0.0
    %3042 = vmatpush2.msra.mxu0 0.0
    %3043 = vmatprep.subr.mxu0 0.0
    %3044 = vmatpush2.msra.mxu0 0.0
    %3045 = vmatprep.subr.mxu0 0.0
    %3046 = vmatpush2.msra.mxu0 0.0
    %3047 = vmatprep.subr.mxu0 0.0
    %3048 = vmatpush2.msra.mxu0 0.0
    %3049 = vmatprep.subr.mxu0 0.0
    %3050 = vmatpush2.msra.mxu0 0.0
    %3051 = vmatprep.subr.mxu0 0.0
    %3052 = vmatpush2.msra.mxu0 0.0
    %3053 = vmatprep.mubr.f32.mxu0 0.0
    %3054 = vmatmul.mubr.f32.gmra.mxu0 %v2987
    %v3055 = vpop.f32.mrf.mxu0
    %v3056 = vadd.f32 0.0, %v3055
    %v3057 = vpop.f32.mrf.mxu0
    %3058 = vdwg.mxu0
    %v3060 = vrot.slane %v3056, 2
    %v3062 = vadd.f32 %v2227, %v3060
    %v3063 = vxor.u32 %v3062, 2147483648
    %v3064 = vmul.f32 %v3063, 1.442695
    %v3065 = vpow.pop %v3064
    %v3066 = vadd.f32 %v3065, 1.0
    %v3067 = vrcp.pop %v3066
    %v3068 = vmul.f32 1.0, %v3067
    %v3069 = vmul.f32 %v3068, 2.0
    %v3070 = vsub.f32 %v3069, 1.0
    %v3072 = vrot.slane %v2976, 6
    %v3074 = vmul.f32 %v3068, %v3072
    %3076 = vrot.lane.b32.xlu0 %v3070, 96
    %v3077 = vpop.permute.xlu0 %3076
    %v3079 = vmul.f32 %v3068, %v3077
    %3081 = vrot.lane.b32.xlu0 %v3079, 16
    %v3082 = vpop.permute.xlu0 %3081
    %v3084 = vadd.f32 %v3074, %v3082
    %v3085 = vtanh.pop %v3084
    %3087 = vrot.lane.b32.xlu0 %v3085, 32
    %v3088 = vpop.permute.xlu0 %3087
    %v3090 = vmul.f32 %v3068, %v3088
    %v3091 = vld [vmem:[%s9] sm:$0x1]
    %v3092 = vld [vmem:[#allocation2] sm:$0x1]
    %v3094 = vlaneseq
    %v3095 = vshrl.u32 %v3094, 7
    %v3096 = vsub.s32 0, %v3095
    %v3097 = vrot.slane %v3091, %v3096
    %3098 = vrot.lane.b32.xlu0 %v3097, 48
    %v3099 = vpop.permute.xlu0 %3098
    %v3101 = vmul.f32 %v2339, %v3099
    %3103 = vrot.lane.b32.xlu0 %v3101, 80
    %v3104 = vpop.permute.xlu0 %3103
    %vm3106 = vcmask 123904
    %v3107 = vsel %vm3106, %v3104, 0.0
    %3108 = vadd.xlane.f32.xlu0 %v3107
    %v3109 = vpop.xlane.xlu0 %3108
    %v3111 = vlaneseq
    %v3112 = vshrl.u32 %v3111, 7
    %v3113 = vsub.s32 0, %v3112
    %v3114 = vrot.slane %v3092, %v3113
    %v3116 = vadd.f32 %v3109, %v3114
    %v3117 = vmul.f32 %v2446, %v3099
    %3119 = vrot.lane.b32.xlu0 %v3117, 80
    %v3120 = vpop.permute.xlu0 %3119
    %vm3122 = vcmask 125954
    %v3123 = vsel %vm3122, %v3120, 0.0
    %3124 = vadd.xlane.f32.xlu0 %v3123
    %v3125 = vpop.xlane.xlu0 %3124
    %v3126 = vadd.f32 %v3125, %v3114
    %v3127 = vmul.f32 %v2554, %v3099
    %3129 = vrot.lane.b32.xlu0 %v3127, 80
    %v3130 = vpop.permute.xlu0 %3129
    %vm3132 = vcmask 128004
    %v3133 = vsel %vm3132, %v3130, 0.0
    %3134 = vadd.xlane.f32.xlu0 %v3133
    %v3135 = vpop.xlane.xlu0 %3134
    %v3136 = vadd.f32 %v3135, %v3114
    %v3137 = vmul.f32 %v2662, %v3099
    %3139 = vrot.lane.b32.xlu0 %v3137, 80
    %v3140 = vpop.permute.xlu0 %3139
    %vm3142 = vcmask 130054
    %v3143 = vsel %vm3142, %v3140, 0.0
    %3144 = vadd.xlane.f32.xlu0 %v3143
    %v3145 = vpop.xlane.xlu0 %3144
    %v3146 = vadd.f32 %v3145, %v3114
    %v3147 = vmul.f32 %v2767, %v3099
    %3149 = vrot.lane.b32.xlu0 %v3147, 80
    %v3150 = vpop.permute.xlu0 %3149
    %v3152 = vsel %vm3106, %v3150, 0.0
    %3153 = vadd.xlane.f32.xlu0 %v3152
    %v3154 = vpop.xlane.xlu0 %3153
    %v3155 = vadd.f32 %v3154, %v3114
    %v3156 = vmul.f32 %v2874, %v3099
    %3158 = vrot.lane.b32.xlu0 %v3156, 80
    %v3159 = vpop.permute.xlu0 %3158
    %v3161 = vsel %vm3122, %v3159, 0.0
    %3162 = vadd.xlane.f32.xlu0 %v3161
    %v3163 = vpop.xlane.xlu0 %3162
    %v3164 = vadd.f32 %v3163, %v3114
    %v3165 = vmul.f32 %v2982, %v3099
    %3167 = vrot.lane.b32.xlu0 %v3165, 80
    %v3168 = vpop.permute.xlu0 %3167
    %v3170 = vsel %vm3132, %v3168, 0.0
    %3171 = vadd.xlane.f32.xlu0 %v3170
    %v3172 = vpop.xlane.xlu0 %3171
    %v3173 = vadd.f32 %v3172, %v3114
    %v3174 = vmul.f32 %v3090, %v3099
    %3176 = vrot.lane.b32.xlu0 %v3174, 80
    %v3177 = vpop.permute.xlu0 %3176
    %v3179 = vsel %vm3142, %v3177, 0.0
    %3180 = vadd.xlane.f32.xlu0 %v3179
    %v3181 = vpop.xlane.xlu0 %3180
    %v3182 = vadd.f32 %v3181, %v3114
    %v3184 = vrot.slane %v3126, 2
    %3185 = vrot.lane.b32.xlu0 %v3184, 1
    %v3186 = vpop.permute.xlu0 %3185
    %v3189 = vrot.slane %v3136, 4
    %3190 = vrot.lane.b32.xlu0 %v3189, 2
    %v3191 = vpop.permute.xlu0 %3190
    %v3194 = vrot.slane %v3146, 6
    %3195 = vrot.lane.b32.xlu0 %v3194, 3
    %v3196 = vpop.permute.xlu0 %3195
    %3199 = vrot.lane.b32.xlu0 %v3155, 4
    %v3200 = vpop.permute.xlu0 %3199
    %v3203 = vrot.slane %v3164, 2
    %3204 = vrot.lane.b32.xlu0 %v3203, 5
    %v3205 = vpop.permute.xlu0 %3204
    %v3208 = vrot.slane %v3173, 4
    %3209 = vrot.lane.b32.xlu0 %v3208, 6
    %v3210 = vpop.permute.xlu0 %3209
    %v3213 = vrot.slane %v3182, 6
    %3214 = vrot.lane.b32.xlu0 %v3213, 7
    %v3215 = vpop.permute.xlu0 %3214
    %vm3217 = vcmask 7168
    %v3218 = vsel %vm3217, %v3116, %v3186
    %vm3219 = vcmask 15360
    %v3220 = vsel %vm3219, %v3218, %v3191
    %vm3221 = vcmask 23552
    %v3222 = vsel %vm3221, %v3220, %v3196
    %vm3223 = vcmask 31744
    %v3224 = vsel %vm3223, %v3222, %v3200
    %vm3225 = vcmask 39936
    %v3226 = vsel %vm3225, %v3224, %v3205
    %vm3227 = vcmask 48128
    %v3228 = vsel %vm3227, %v3226, %v3210
    %vm3229 = vcmask 56320
    %v3230 = vsel %vm3229, %v3228, %v3215
    %v3231 = vxor.u32 %v3230, 2147483648
    %v3232 = vmul.f32 %v3231, 1.442695
    %v3233 = vpow.pop %v3232
    %v3234 = vadd.f32 %v3233, 1.0
    %v3235 = vrcp.pop %v3234
    %v3236 = vmul.f32 1.0, %v3235
    %vm3237 = vcmask 58368
    %3238 = vst.msk [vmem:[#allocation15] sm:$0x3] %vm3237, %v3236
    // Predicated region
    $region74: #{tpu_custom_call.1} parent=1 // pred_check
      _
    $region75: #{tpu_custom_call.1} parent=1 // pred_check_branch
      %3240 = sbr.rel (0) target = $region77
    $region76: #{tpu_custom_call.1} parent=1 // pred_region
      %s3242 = ssub.s32 32, 32
      %3243 = vsyncadd [#allocation5], %s3242
      %s3245 = sshll.u32 [#allocation15], 4
      %s3246 = int_to_ptr.vmem [resolvable:$true] %s3245
      %3248 = dma.vmem_to_hbm [thread:$0]  %s3246, 32, %s11, [#allocation5]
    $region77: #{tpu_custom_call.1} parent=1 // pred_fallthru
      _
    // Predicated region
    $region78: #{tpu_custom_call.1} parent=1 // pred_check
      _
    $region79: #{tpu_custom_call.1} parent=1 // pred_check_branch
      %3250 = sbr.rel (0) target = $region81
    $region80: #{tpu_custom_call.1} parent=1 // pred_region
      %3251 = dma.done [#allocation5], 32
    $region81: #{tpu_custom_call.1} parent=1 // pred_fallthru
      _
    %3252 = vsyncpa [#allocation4], 1
    %3253 = vsyncpa [#allocation7], 1
    %3254 = vsyncpa [#allocation10], 1
    %3255 = vsyncpa [#allocation13], 1
    %3256 = vsyncpa [#allocation5], 1

</llo_original>
